<compile_context>
chip_gen: v6e
topology: v6e:2x2x1
jax: 0.10.0
libtpu: 0.0.40
codegen_flags: <defaults>
</compile_context>

<pallas_src>
import functools

import jax
import jax.numpy as jnp
from jax import lax
from jax.experimental import pallas as pl
from jax.experimental.pallas import tpu as pltpu


# ------------------------------ Pallas kernel -------------------------------

def _fused_block_kernel(x_ref, w1_ref, b1_ref, w2_ref, b2_ref, w3_ref, b3_ref,
                        o_ref, h_scr, *, stride, ho, wo, planes, has_proj):
    """Whole LowrankBottleneck block for B_TILE images (one grid step).

    Refs (bf16 weights with BN folded in, f32 biases):
      x_ref : (B, G, R, cin)   G = stride*stride (space-to-depth), R = ho*wo
      w1    : (cin, P)          b1 : (1, P)
      w2    : (9*P, P)          b2 : (1, P)       # collapsed low-rank 3x3
      w3    : (P[+cin], 4*P)    b3 : (1, 4*P)     # conv3 (+ fused projection)
      o_ref : (B, R, 4*P) bf16  (lane-dense store)
      h_scr : (B, G, PROWS, P) bf16  flat, zero-halo'd conv1 output
    """
    B, G, R, cin = x_ref.shape
    P = planes
    E = o_ref.shape[-1]
    PROWS = h_scr.shape[2]
    base = wo + 1                          # conv1 rows live at [base, base + R)

    # ---- zero ONLY the halo rows of the scratch (interior is overwritten) ----
    zero_top = jnp.zeros((base, P), h_scr.dtype)
    if stride == 1:
        bot_start = (ho + 1) * wo + 1
        zero_bot = jnp.zeros((PROWS - bot_start, P), h_scr.dtype)
    for b in range(B):
        for g in range(G):
            h_scr[b, g, 0:base, :] = zero_top
            if stride == 1:
                h_scr[b, g, bot_start:PROWS, :] = zero_bot

    # ---- conv1 (1x1) + bn1 + relu : ONE matmul over all B*G*R rows -----------
    xv = x_ref[...]
    h_all = jnp.maximum(
        jnp.dot(xv.reshape(B * G * R, cin), w1_ref[...],
                preferred_element_type=jnp.float32) + b1_ref[...],
        0.0).astype(h_scr.dtype)
    for b in range(B):
        for g in range(G):
            s = (b * G + g) * R
            h_scr[b, g, base:base + R, :] = h_all[s:s + R]

    # ---- build the (B*R, 9*P) im2col slab from contiguous shifted row-slices -
    # Column-boundary wrap-around (left edge for dj==0, right edge for dj==2 at
    # stride 1) is fixed with a per-row select; row halos are real zeros in the
    # scratch.  Row space is the compact output index p = i*wo + j throughout.
    col = lax.broadcasted_iota(jnp.int32, (B * R, 1), 0) % wo
    left_edge = col == 0
    right_edge = col == (wo - 1)
    taps = []
    for di in range(3):
        for dj in range(3):
            if stride == 1:
                g_t = 0
                off = di * wo + dj
            else:  # stride == 2: pick the spatial-parity plane of the scratch
                g_t = 2 * (1 - (di % 2)) + (1 - (dj % 2))
                off = base - (wo if di == 0 else 0) - (1 if dj == 0 else 0)
            tap = jnp.concatenate(
                [h_scr[b, g_t, off:off + R, :] for b in range(B)], axis=0)
            if dj == 0:
                tap = jnp.where(left_edge, jnp.zeros_like(tap), tap)
            elif dj == 2 and stride == 1:
                tap = jnp.where(right_edge, jnp.zeros_like(tap), tap)
            taps.append(tap)
    slab = jnp.concatenate(taps, axis=-1)            # (B*R, 9*P) bf16

    # ---- collapsed low-rank 3x3 + bn2 + relu : single K = 9*P matmul ---------
    out2 = jnp.maximum(
        jnp.dot(slab, w2_ref[...], preferred_element_type=jnp.float32)
        + b2_ref[...], 0.0).astype(slab.dtype)

    # ---- conv3 (+ fused projection shortcut) + bn3 + residual + relu (f32) ---
    x0 = xv[:, 0].reshape(B * R, cin)                # == x[:, ::s, ::s, :] rows
    if has_proj:
        lhs = jnp.concatenate([out2, x0], axis=-1)   # (B*R, P + cin)
        acc3 = jnp.dot(lhs, w3_ref[...],
                       preferred_element_type=jnp.float32) + b3_ref[...]
    else:
        acc3 = (jnp.dot(out2, w3_ref[...],
                        preferred_element_type=jnp.float32)
                + b3_ref[...] + x0.astype(jnp.float32))
    o_ref[...] = jnp.maximum(acc3, 0.0).astype(o_ref.dtype).reshape(B, R, E)


# ------------------------------- JAX wrappers --------------------------------

def _round_up(x, m):
    return (x + m - 1) // m * m


def _pick_batch_tile(n, per_image_bytes, budget=16 * 1024 * 1024):
    """Largest batch tile that divides n, keeps >= 2 grid steps (v7x megacore)
    and stays well under every generation's VMEM (incl. v7x's 64 MiB)."""
    best = 1
    for b in range(1, n + 1):
        if n % b != 0:
            continue
        if n >= 2 and (n // b) < 2:
            continue
        if b * per_image_bytes > budget:
            continue
        best = b
    return best


def fold_params(params, eps=1e-5):
    """Fold eval-mode BN into the conv weights; collapse conv2_u/conv2_v into a
    single (9*P, P) weight; pre-concatenate conv3 with the projection shortcut."""

    def bn_fold(bnp):
        gamma, beta, mean, var = bnp
        s = gamma / jnp.sqrt(var + eps)
        return s, beta - mean * s

    s1, b1 = bn_fold(params["bn1"])
    s2u, b2u = bn_fold(params["bn2_u"])
    s2v, b2v = bn_fold(params["bn2_v"])
    s3, b3 = bn_fold(params["bn3"])

    f = {}
    f["w1"] = (params["w1"] * s1[None, :]).astype(jnp.bfloat16)
    f["b1"] = b1.reshape(1, -1).astype(jnp.float32)

    # No nonlinearity between conv2_u and conv2_v -> collapse algebraically.
    w2v_eff = (s2u[:, None] * params["w2v"]) * s2v[None, :]        # (rank, P)
    w2 = jnp.einsum("ijpr,rq->ijpq", params["w2u_hwio"], w2v_eff)  # (3,3,P,P)
    P = w2.shape[-1]
    f["w2"] = w2.reshape(9 * P, P).astype(jnp.bfloat16)            # tap-major K
    f["b2"] = ((b2u @ params["w2v"]) * s2v + b2v).reshape(1, -1).astype(jnp.float32)

    w3 = params["w3"] * s3[None, :]
    if "wsc" in params:
        ssc, bsc = bn_fold(params["bnsc"])
        wsc = params["wsc"] * ssc[None, :]
        f["w3"] = jnp.concatenate([w3, wsc], axis=0).astype(jnp.bfloat16)
        f["b3"] = (b3 + bsc).reshape(1, -1).astype(jnp.float32)
    else:
        f["w3"] = w3.astype(jnp.bfloat16)
        f["b3"] = b3.reshape(1, -1).astype(jnp.float32)
    return f


def lowrank_bottleneck_forward_nhwc(x, fparams, stride):
    """x: (N, H, W, Cin) -> (N, Ho, Wo, 4*planes); single fused pallas_call."""
    assert stride in (1, 2), "only stride 1 or 2 supported"
    n, h, w, cin = x.shape
    planes = fparams["w1"].shape[1]
    exp_planes = fparams["w3"].shape[1]
    has_proj = fparams["w3"].shape[0] != planes
    assert h % stride == 0 and w % stride == 0
    if not has_proj:
        assert cin == exp_planes, "identity shortcut needs cin == 4*planes"
    ho, wo = h // stride, w // stride
    rows = ho * wo
    groups = stride * stride

    xb = x.astype(jnp.bfloat16)
    if stride == 1:
        x_in = xb.reshape(n, 1, rows, cin)
    else:
        # TODO(synk): fuse this space-to-depth into the previous block's output
        # store in a full network (it is an extra HBM pass here).
        x_in = xb.reshape(n, ho, 2, wo, 2, cin)
        x_in = jnp.transpose(x_in, (0, 2, 4, 1, 3, 5)).reshape(n, groups, rows, cin)

    if stride == 1:
        prows = _round_up((ho + 2) * wo + 2, 16)
    else:
        prows = _round_up(wo + 1 + rows, 16)

    per_image_bytes = (2 * (groups * rows * cin + rows * exp_planes) * 2
                       + groups * prows * planes * 2)
    b_tile = _pick_batch_tile(n, per_image_bytes)
    grid_len = n // b_tile

    flops = 2 * n * rows * (groups * cin * planes
                            + 9 * planes * planes
                            + (planes + (cin if has_proj else 0)) * exp_planes)
    weight_bytes = sum(int(fparams[k].size) * fparams[k].dtype.itemsize
                       for k in ("w1", "b1", "w2", "b2", "w3", "b3"))
    bytes_accessed = (int(x_in.size) * 2 + n * rows * exp_planes * 2
                      + grid_len * weight_bytes)
    cost = pl.CostEstimate(flops=int(flops), transcendentals=0,
                           bytes_accessed=int(bytes_accessed))

    kernel = functools.partial(_fused_block_kernel, stride=stride, ho=ho, wo=wo,
                               planes=planes, has_proj=has_proj)

    out = pl.pallas_call(
        kernel,
        out_shape=jax.ShapeDtypeStruct((n, rows, exp_planes), jnp.bfloat16),
        grid_spec=pltpu.PrefetchScalarGridSpec(
            num_scalar_prefetch=0,
            grid=(grid_len,),
            in_specs=[
                pl.BlockSpec((b_tile, groups, rows, cin), lambda i: (i, 0, 0, 0)),
                pl.BlockSpec(fparams["w1"].shape, lambda i: (0, 0)),
                pl.BlockSpec(fparams["b1"].shape, lambda i: (0, 0)),
                pl.BlockSpec(fparams["w2"].shape, lambda i: (0, 0)),
                pl.BlockSpec(fparams["b2"].shape, lambda i: (0, 0)),
                pl.BlockSpec(fparams["w3"].shape, lambda i: (0, 0)),
                pl.BlockSpec(fparams["b3"].shape, lambda i: (0, 0)),
            ],
            out_specs=pl.BlockSpec((b_tile, rows, exp_planes),
                                   lambda i: (i, 0, 0)),
            scratch_shapes=[pltpu.VMEM((b_tile, groups, prows, planes),
                                       jnp.bfloat16)],
        ),
        compiler_params=pltpu.CompilerParams(
            dimension_semantics=("parallel",),
            vmem_limit_bytes=32 * 1024 * 1024,
        ),
        cost_estimate=cost,
    )(x_in, fparams["w1"], fparams["b1"], fparams["w2"], fparams["b2"],
      fparams["w3"], fparams["b3"])
    return out.reshape(n, ho, wo, exp_planes)


def lowrank_bottleneck_forward(x_nchw, fparams, stride):
    """NCHW boundary to match PyTorch.  In a full network keep activations NHWC
    and hoist these transposes out of the per-block code."""
    x = jnp.transpose(x_nchw, (0, 2, 3, 1))
    out = lowrank_bottleneck_forward_nhwc(x, fparams, stride)
    return jnp.transpose(out, (0, 3, 1, 2))


# ---------------------------- parameter creation -----------------------------

def init_params(key, in_planes, planes, stride, expansion=4):
    rank = planes // 8
    keys = iter(jax.random.split(key, 16))

    def w(shape):
        return 0.1 * jax.random.normal(next(keys), shape, jnp.float32)

    def bn(c):
        k = jax.random.split(next(keys), 4)
        gamma = 1.0 + 0.1 * jax.random.normal(k[0], (c,), jnp.float32)
        beta = 0.1 * jax.random.normal(k[1], (c,), jnp.float32)
        mean = 0.1 * jax.random.normal(k[2], (c,), jnp.float32)
        var = 1.0 + 0.1 * jnp.abs(jax.random.normal(k[3], (c,), jnp.float32))
        return (gamma, beta, mean, var)

    p = {
        "w1": w((in_planes, planes)), "bn1": bn(planes),
        "w2u_hwio": w((3, 3, planes, rank)), "bn2_u": bn(rank),
        "w2v": w((rank, planes)), "bn2_v": bn(planes),
        "w3": w((planes, expansion * planes)), "bn3": bn(expansion * planes),
    }
    if stride != 1 or in_planes != expansion * planes:
        p["wsc"] = w((in_planes, expansion * planes))
        p["bnsc"] = bn(expansion * planes)
    return p


# ------------------------- pure-JAX reference (f32) ---------------------------

def _conv2d(x, w_hwio, stride, padding):
    return lax.conv_general_dilated(
        x, w_hwio, window_strides=(stride, stride), padding=padding,
        dimension_numbers=("NHWC", "HWIO", "NHWC"))


def reference_forward(x_nchw, params, stride, eps=1e-5):
    x = jnp.transpose(x_nchw, (0, 2, 3, 1))

    def bn(y, bnp):
        gamma, beta, mean, var = bnp
        s = gamma / jnp.sqrt(var + eps)
        return y * s.reshape(1, 1, 1, -1) + (beta - mean * s).reshape(1, 1, 1, -1)

    in_planes, planes = params["w1"].shape
    rank = params["w2v"].shape[0]
    exp_planes = params["w3"].shape[1]

    out = jnp.maximum(bn(_conv2d(x, params["w1"].reshape(1, 1, in_planes, planes),
                                 1, [(0, 0), (0, 0)]), params["bn1"]), 0.0)
    out = bn(_conv2d(out, params["w2u_hwio"], stride, [(1, 1), (1, 1)]),
             params["bn2_u"])
    out = jnp.maximum(bn(_conv2d(out, params["w2v"].reshape(1, 1, rank, planes),
                                 1, [(0, 0), (0, 0)]), params["bn2_v"]), 0.0)
    out = bn(_conv2d(out, params["w3"].reshape(1, 1, planes, exp_planes),
                     1, [(0, 0), (0, 0)]), params["bn3"])
    if "wsc" in params:
        sc = bn(_conv2d(x, params["wsc"].reshape(1, 1, in_planes, exp_planes),
                        stride, [(0, 0), (0, 0)]), params["bnsc"])
    else:
        sc = x
    out = jnp.maximum(out + sc, 0.0)
    return jnp.transpose(out, (0, 3, 1, 2))


# ----------------------------------- main -------------------------------------

if __name__ == "__main__":
    configs = [
        # (in_planes, planes, stride, N, H, W)
        (16, 32, 2, 4, 16, 16),    # projection shortcut, stride 2
        (64, 32, 1, 4, 8, 8),      # projection shortcut, stride 1
        (128, 32, 1, 4, 8, 8),     # identity shortcut,   stride 1
    ]

    fwd = jax.jit(lowrank_bottleneck_forward, static_argnums=2)

    key = jax.random.PRNGKey(0)
    for (cin, planes, stride, n, h, w) in configs:
        key, kx, kp = jax.random.split(key, 3)
        x = jax.random.normal(kx, (n, cin, h, w), jnp.float32)  # NCHW
        params = init_params(kp, cin, planes, stride)
        fparams = fold_params(params)

        out = jax.block_until_ready(fwd(x, fparams, stride))
        ref = jax.block_until_ready(reference_forward(x, params, stride))

        assert out.shape == (n, 4 * planes, h // stride, w // stride), out.shape
        out_f32 = out.astype(jnp.float32)
        max_err = float(jnp.max(jnp.abs(out_f32 - ref)))
        # bf16 inputs/weights vs the f32 reference -> loose-but-meaningful check.
        assert jnp.allclose(out_f32, ref, atol=5e-2, rtol=5e-2), max_err

    print("KERNEL_OK")
</pallas_src>

<mosaic_0001>
module attributes {stable_mosaic.version = 11 : i64} {
  func.func @_fused_block_kernel(%arg0: i32, %arg1: memref<2x4x64x16xbf16, #tpu.memory_space<vmem>>, %arg2: memref<16x32xbf16, #tpu.memory_space<vmem>>, %arg3: memref<1x32xf32, #tpu.memory_space<vmem>>, %arg4: memref<288x32xbf16, #tpu.memory_space<vmem>>, %arg5: memref<1x32xf32, #tpu.memory_space<vmem>>, %arg6: memref<48x128xbf16, #tpu.memory_space<vmem>>, %arg7: memref<1x128xf32, #tpu.memory_space<vmem>>, %arg8: memref<2x64x128xbf16, #tpu.memory_space<vmem>>, %arg9: memref<2x4x80x32xbf16, #tpu.memory_space<vmem>>) attributes {dimension_semantics = [#tpu.dimension_semantics<parallel>], iteration_bounds = array<i64: 2>, scalar_prefetch = 0 : i64, scratch_operands = 1 : i64, tpu.core_type = #tpu.core_type<tc>, window_params = [{transform_indices = @transform_0, window_bounds = array<i64: 2, 4, 64, 16>}, {pipeline_mode = #tpu.pipeline_mode<synchronous>, transform_indices = @transform_1, window_bounds = array<i64: 16, 32>}, {pipeline_mode = #tpu.pipeline_mode<synchronous>, transform_indices = @transform_2, window_bounds = array<i64: 1, 32>}, {pipeline_mode = #tpu.pipeline_mode<synchronous>, transform_indices = @transform_3, window_bounds = array<i64: 288, 32>}, {pipeline_mode = #tpu.pipeline_mode<synchronous>, transform_indices = @transform_4, window_bounds = array<i64: 1, 32>}, {pipeline_mode = #tpu.pipeline_mode<synchronous>, transform_indices = @transform_5, window_bounds = array<i64: 48, 128>}, {pipeline_mode = #tpu.pipeline_mode<synchronous>, transform_indices = @transform_6, window_bounds = array<i64: 1, 128>}, {transform_indices = @transform_7, window_bounds = array<i64: 2, 64, 128>}]} {
    %cst = arith.constant 0.000000e+00 : bf16
    %0 = vector.broadcast %cst : bf16 to vector<9x32xbf16>
    %c0 = arith.constant 0 : index
    %c0_0 = arith.constant 0 : index
    %c0_1 = arith.constant 0 : index
    %c0_2 = arith.constant 0 : index
    %1 = vector.load %arg9[%c0, %c0_0, %c0_1, %c0_2] : memref<2x4x80x32xbf16, #tpu.memory_space<vmem>>, vector<1x1x9x32xbf16>
    %2 = vector.shape_cast %1 : vector<1x1x9x32xbf16> to vector<9x32xbf16>
    %3 = vector.shape_cast %0 : vector<9x32xbf16> to vector<1x1x9x32xbf16>
    tpu.vector_store %arg9[%c0, %c0_0, %c0_1, %c0_2], %3 {strides = array<i32>} : memref<2x4x80x32xbf16, #tpu.memory_space<vmem>>, vector<1x1x9x32xbf16>,
    %c0_3 = arith.constant 0 : index
    %c1 = arith.constant 1 : index
    %c0_4 = arith.constant 0 : index
    %c0_5 = arith.constant 0 : index
    %4 = vector.load %arg9[%c0_3, %c1, %c0_4, %c0_5] : memref<2x4x80x32xbf16, #tpu.memory_space<vmem>>, vector<1x1x9x32xbf16>
    %5 = vector.shape_cast %4 : vector<1x1x9x32xbf16> to vector<9x32xbf16>
    %6 = vector.shape_cast %0 : vector<9x32xbf16> to vector<1x1x9x32xbf16>
    tpu.vector_store %arg9[%c0_3, %c1, %c0_4, %c0_5], %6 {strides = array<i32>} : memref<2x4x80x32xbf16, #tpu.memory_space<vmem>>, vector<1x1x9x32xbf16>,
    %c0_6 = arith.constant 0 : index
    %c2 = arith.constant 2 : index
    %c0_7 = arith.constant 0 : index
    %c0_8 = arith.constant 0 : index
    %7 = vector.load %arg9[%c0_6, %c2, %c0_7, %c0_8] : memref<2x4x80x32xbf16, #tpu.memory_space<vmem>>, vector<1x1x9x32xbf16>
    %8 = vector.shape_cast %7 : vector<1x1x9x32xbf16> to vector<9x32xbf16>
    %9 = vector.shape_cast %0 : vector<9x32xbf16> to vector<1x1x9x32xbf16>
    tpu.vector_store %arg9[%c0_6, %c2, %c0_7, %c0_8], %9 {strides = array<i32>} : memref<2x4x80x32xbf16, #tpu.memory_space<vmem>>, vector<1x1x9x32xbf16>,
    %c0_9 = arith.constant 0 : index
    %c3 = arith.constant 3 : index
    %c0_10 = arith.constant 0 : index
    %c0_11 = arith.constant 0 : index
    %10 = vector.load %arg9[%c0_9, %c3, %c0_10, %c0_11] : memref<2x4x80x32xbf16, #tpu.memory_space<vmem>>, vector<1x1x9x32xbf16>
    %11 = vector.shape_cast %10 : vector<1x1x9x32xbf16> to vector<9x32xbf16>
    %12 = vector.shape_cast %0 : vector<9x32xbf16> to vector<1x1x9x32xbf16>
    tpu.vector_store %arg9[%c0_9, %c3, %c0_10, %c0_11], %12 {strides = array<i32>} : memref<2x4x80x32xbf16, #tpu.memory_space<vmem>>, vector<1x1x9x32xbf16>,
    %c1_12 = arith.constant 1 : index
    %c0_13 = arith.constant 0 : index
    %c0_14 = arith.constant 0 : index
    %c0_15 = arith.constant 0 : index
    %13 = vector.load %arg9[%c1_12, %c0_13, %c0_14, %c0_15] : memref<2x4x80x32xbf16, #tpu.memory_space<vmem>>, vector<1x1x9x32xbf16>
    %14 = vector.shape_cast %13 : vector<1x1x9x32xbf16> to vector<9x32xbf16>
    %15 = vector.shape_cast %0 : vector<9x32xbf16> to vector<1x1x9x32xbf16>
    tpu.vector_store %arg9[%c1_12, %c0_13, %c0_14, %c0_15], %15 {strides = array<i32>} : memref<2x4x80x32xbf16, #tpu.memory_space<vmem>>, vector<1x1x9x32xbf16>,
    %c1_16 = arith.constant 1 : index
    %c1_17 = arith.constant 1 : index
    %c0_18 = arith.constant 0 : index
    %c0_19 = arith.constant 0 : index
    %16 = vector.load %arg9[%c1_16, %c1_17, %c0_18, %c0_19] : memref<2x4x80x32xbf16, #tpu.memory_space<vmem>>, vector<1x1x9x32xbf16>
    %17 = vector.shape_cast %16 : vector<1x1x9x32xbf16> to vector<9x32xbf16>
    %18 = vector.shape_cast %0 : vector<9x32xbf16> to vector<1x1x9x32xbf16>
    tpu.vector_store %arg9[%c1_16, %c1_17, %c0_18, %c0_19], %18 {strides = array<i32>} : memref<2x4x80x32xbf16, #tpu.memory_space<vmem>>, vector<1x1x9x32xbf16>,
    %c1_20 = arith.constant 1 : index
    %c2_21 = arith.constant 2 : index
    %c0_22 = arith.constant 0 : index
    %c0_23 = arith.constant 0 : index
    %19 = vector.load %arg9[%c1_20, %c2_21, %c0_22, %c0_23] : memref<2x4x80x32xbf16, #tpu.memory_space<vmem>>, vector<1x1x9x32xbf16>
    %20 = vector.shape_cast %19 : vector<1x1x9x32xbf16> to vector<9x32xbf16>
    %21 = vector.shape_cast %0 : vector<9x32xbf16> to vector<1x1x9x32xbf16>
    tpu.vector_store %arg9[%c1_20, %c2_21, %c0_22, %c0_23], %21 {strides = array<i32>} : memref<2x4x80x32xbf16, #tpu.memory_space<vmem>>, vector<1x1x9x32xbf16>,
    %c1_24 = arith.constant 1 : index
    %c3_25 = arith.constant 3 : index
    %c0_26 = arith.constant 0 : index
    %c0_27 = arith.constant 0 : index
    %22 = vector.load %arg9[%c1_24, %c3_25, %c0_26, %c0_27] : memref<2x4x80x32xbf16, #tpu.memory_space<vmem>>, vector<1x1x9x32xbf16>
    %23 = vector.shape_cast %22 : vector<1x1x9x32xbf16> to vector<9x32xbf16>
    %24 = vector.shape_cast %0 : vector<9x32xbf16> to vector<1x1x9x32xbf16>
    tpu.vector_store %arg9[%c1_24, %c3_25, %c0_26, %c0_27], %24 {strides = array<i32>} : memref<2x4x80x32xbf16, #tpu.memory_space<vmem>>, vector<1x1x9x32xbf16>,
    %c0_28 = arith.constant 0 : index
    %c0_29 = arith.constant 0 : index
    %c0_30 = arith.constant 0 : index
    %c0_31 = arith.constant 0 : index
    %25 = vector.load %arg1[%c0_28, %c0_29, %c0_30, %c0_31] : memref<2x4x64x16xbf16, #tpu.memory_space<vmem>>, vector<2x4x64x16xbf16>
    %26 = vector.shape_cast %25 : vector<2x4x64x16xbf16> to vector<512x16xbf16>
    %c0_32 = arith.constant 0 : index
    %c0_33 = arith.constant 0 : index
    %27 = vector.load %arg2[%c0_32, %c0_33] : memref<16x32xbf16, #tpu.memory_space<vmem>>, vector<16x32xbf16>
    %cst_34 = arith.constant dense<0.000000e+00> : vector<512x32xf32>
    %28 = tpu.matmul %26, %27, %cst_34 {dimension_numbers = #tpu.dot_dimension_numbers<[1], [0], [0], [1], [0, 0, 1, 1], [], []>} : vector<512x16xbf16>, vector<16x32xbf16>, vector<512x32xf32> -> vector<512x32xf32>
    %c0_35 = arith.constant 0 : index
    %c0_36 = arith.constant 0 : index
    %29 = vector.load %arg3[%c0_35, %c0_36] : memref<1x32xf32, #tpu.memory_space<vmem>>, vector<1x32xf32>
    %30 = vector.broadcast %29 : vector<1x32xf32> to vector<512x32xf32>
    %31 = arith.addf %28, %30 : vector<512x32xf32>
    %cst_37 = arith.constant 0.000000e+00 : f32
    %32 = vector.broadcast %cst_37 : f32 to vector<512x32xf32>
    %33 = arith.maximumf %31, %32 : vector<512x32xf32>
    %34 = arith.truncf %33 : vector<512x32xf32> to vector<512x32xbf16>
    %35 = vector.extract_strided_slice %34 {offsets = [0, 0], sizes = [64, 32], strides = [1, 1]} : vector<512x32xbf16> to vector<64x32xbf16>
    %c0_38 = arith.constant 0 : index
    %c0_39 = arith.constant 0 : index
    %c9 = arith.constant 9 : index
    %c0_40 = arith.constant 0 : index
    %36 = vector.load %arg9[%c0_38, %c0_39, %c9, %c0_40] : memref<2x4x80x32xbf16, #tpu.memory_space<vmem>>, vector<1x1x64x32xbf16>
    %37 = vector.shape_cast %36 : vector<1x1x64x32xbf16> to vector<64x32xbf16>
    %38 = vector.shape_cast %35 : vector<64x32xbf16> to vector<1x1x64x32xbf16>
    tpu.vector_store %arg9[%c0_38, %c0_39, %c9, %c0_40], %38 {strides = array<i32>} : memref<2x4x80x32xbf16, #tpu.memory_space<vmem>>, vector<1x1x64x32xbf16>,
    %39 = vector.extract_strided_slice %34 {offsets = [64, 0], sizes = [64, 32], strides = [1, 1]} : vector<512x32xbf16> to vector<64x32xbf16>
    %c0_41 = arith.constant 0 : index
    %c1_42 = arith.constant 1 : index
    %c9_43 = arith.constant 9 : index
    %c0_44 = arith.constant 0 : index
    %40 = vector.load %arg9[%c0_41, %c1_42, %c9_43, %c0_44] : memref<2x4x80x32xbf16, #tpu.memory_space<vmem>>, vector<1x1x64x32xbf16>
    %41 = vector.shape_cast %40 : vector<1x1x64x32xbf16> to vector<64x32xbf16>
    %42 = vector.shape_cast %39 : vector<64x32xbf16> to vector<1x1x64x32xbf16>
    tpu.vector_store %arg9[%c0_41, %c1_42, %c9_43, %c0_44], %42 {strides = array<i32>} : memref<2x4x80x32xbf16, #tpu.memory_space<vmem>>, vector<1x1x64x32xbf16>,
    %43 = vector.extract_strided_slice %34 {offsets = [128, 0], sizes = [64, 32], strides = [1, 1]} : vector<512x32xbf16> to vector<64x32xbf16>
    %c0_45 = arith.constant 0 : index
    %c2_46 = arith.constant 2 : index
    %c9_47 = arith.constant 9 : index
    %c0_48 = arith.constant 0 : index
    %44 = vector.load %arg9[%c0_45, %c2_46, %c9_47, %c0_48] : memref<2x4x80x32xbf16, #tpu.memory_space<vmem>>, vector<1x1x64x32xbf16>
    %45 = vector.shape_cast %44 : vector<1x1x64x32xbf16> to vector<64x32xbf16>
    %46 = vector.shape_cast %43 : vector<64x32xbf16> to vector<1x1x64x32xbf16>
    tpu.vector_store %arg9[%c0_45, %c2_46, %c9_47, %c0_48], %46 {strides = array<i32>} : memref<2x4x80x32xbf16, #tpu.memory_space<vmem>>, vector<1x1x64x32xbf16>,
    %47 = vector.extract_strided_slice %34 {offsets = [192, 0], sizes = [64, 32], strides = [1, 1]} : vector<512x32xbf16> to vector<64x32xbf16>
    %c0_49 = arith.constant 0 : index
    %c3_50 = arith.constant 3 : index
    %c9_51 = arith.constant 9 : index
    %c0_52 = arith.constant 0 : index
    %48 = vector.load %arg9[%c0_49, %c3_50, %c9_51, %c0_52] : memref<2x4x80x32xbf16, #tpu.memory_space<vmem>>, vector<1x1x64x32xbf16>
    %49 = vector.shape_cast %48 : vector<1x1x64x32xbf16> to vector<64x32xbf16>
    %50 = vector.shape_cast %47 : vector<64x32xbf16> to vector<1x1x64x32xbf16>
    tpu.vector_store %arg9[%c0_49, %c3_50, %c9_51, %c0_52], %50 {strides = array<i32>} : memref<2x4x80x32xbf16, #tpu.memory_space<vmem>>, vector<1x1x64x32xbf16>,
    %51 = vector.extract_strided_slice %34 {offsets = [256, 0], sizes = [64, 32], strides = [1, 1]} : vector<512x32xbf16> to vector<64x32xbf16>
    %c1_53 = arith.constant 1 : index
    %c0_54 = arith.constant 0 : index
    %c9_55 = arith.constant 9 : index
    %c0_56 = arith.constant 0 : index
    %52 = vector.load %arg9[%c1_53, %c0_54, %c9_55, %c0_56] : memref<2x4x80x32xbf16, #tpu.memory_space<vmem>>, vector<1x1x64x32xbf16>
    %53 = vector.shape_cast %52 : vector<1x1x64x32xbf16> to vector<64x32xbf16>
    %54 = vector.shape_cast %51 : vector<64x32xbf16> to vector<1x1x64x32xbf16>
    tpu.vector_store %arg9[%c1_53, %c0_54, %c9_55, %c0_56], %54 {strides = array<i32>} : memref<2x4x80x32xbf16, #tpu.memory_space<vmem>>, vector<1x1x64x32xbf16>,
    %55 = vector.extract_strided_slice %34 {offsets = [320, 0], sizes = [64, 32], strides = [1, 1]} : vector<512x32xbf16> to vector<64x32xbf16>
    %c1_57 = arith.constant 1 : index
    %c1_58 = arith.constant 1 : index
    %c9_59 = arith.constant 9 : index
    %c0_60 = arith.constant 0 : index
    %56 = vector.load %arg9[%c1_57, %c1_58, %c9_59, %c0_60] : memref<2x4x80x32xbf16, #tpu.memory_space<vmem>>, vector<1x1x64x32xbf16>
    %57 = vector.shape_cast %56 : vector<1x1x64x32xbf16> to vector<64x32xbf16>
    %58 = vector.shape_cast %55 : vector<64x32xbf16> to vector<1x1x64x32xbf16>
    tpu.vector_store %arg9[%c1_57, %c1_58, %c9_59, %c0_60], %58 {strides = array<i32>} : memref<2x4x80x32xbf16, #tpu.memory_space<vmem>>, vector<1x1x64x32xbf16>,
    %59 = vector.extract_strided_slice %34 {offsets = [384, 0], sizes = [64, 32], strides = [1, 1]} : vector<512x32xbf16> to vector<64x32xbf16>
    %c1_61 = arith.constant 1 : index
    %c2_62 = arith.constant 2 : index
    %c9_63 = arith.constant 9 : index
    %c0_64 = arith.constant 0 : index
    %60 = vector.load %arg9[%c1_61, %c2_62, %c9_63, %c0_64] : memref<2x4x80x32xbf16, #tpu.memory_space<vmem>>, vector<1x1x64x32xbf16>
    %61 = vector.shape_cast %60 : vector<1x1x64x32xbf16> to vector<64x32xbf16>
    %62 = vector.shape_cast %59 : vector<64x32xbf16> to vector<1x1x64x32xbf16>
    tpu.vector_store %arg9[%c1_61, %c2_62, %c9_63, %c0_64], %62 {strides = array<i32>} : memref<2x4x80x32xbf16, #tpu.memory_space<vmem>>, vector<1x1x64x32xbf16>,
    %63 = vector.extract_strided_slice %34 {offsets = [448, 0], sizes = [64, 32], strides = [1, 1]} : vector<512x32xbf16> to vector<64x32xbf16>
    %c1_65 = arith.constant 1 : index
    %c3_66 = arith.constant 3 : index
    %c9_67 = arith.constant 9 : index
    %c0_68 = arith.constant 0 : index
    %64 = vector.load %arg9[%c1_65, %c3_66, %c9_67, %c0_68] : memref<2x4x80x32xbf16, #tpu.memory_space<vmem>>, vector<1x1x64x32xbf16>
    %65 = vector.shape_cast %64 : vector<1x1x64x32xbf16> to vector<64x32xbf16>
    %66 = vector.shape_cast %63 : vector<64x32xbf16> to vector<1x1x64x32xbf16>
    tpu.vector_store %arg9[%c1_65, %c3_66, %c9_67, %c0_68], %66 {strides = array<i32>} : memref<2x4x80x32xbf16, #tpu.memory_space<vmem>>, vector<1x1x64x32xbf16>,
    %67 = tpu.iota {dimensions = array<i32: 0>} : vector<128x1xi32>
    %c8_i32 = arith.constant 8 : i32
    %c0_i32 = arith.constant 0 : i32
    %68 = arith.cmpi eq, %c8_i32, %c0_i32 : i32
    %c1_i32 = arith.constant 1 : i32
    %69 = arith.select %68, %c1_i32, %c8_i32 : i32
    %70 = vector.broadcast %69 : i32 to vector<128x1xi32>
    %71 = arith.remsi %67, %70 : vector<128x1xi32>
    %c0_i32_69 = arith.constant 0 : i32
    %72 = vector.broadcast %c0_i32_69 : i32 to vector<128x1xi32>
    %73 = arith.cmpi ne, %71, %72 : vector<128x1xi32>
    %c0_i32_70 = arith.constant 0 : i32
    %74 = vector.broadcast %c0_i32_70 : i32 to vector<128x1xi32>
    %75 = arith.cmpi slt, %71, %74 : vector<128x1xi32>
    %c0_i32_71 = arith.constant 0 : i32
    %76 = arith.cmpi slt, %69, %c0_i32_71 : i32
    %77 = vector.broadcast %76 : i1 to vector<128x1xi1>
    %78 = vector.broadcast %77 : vector<128x1xi1> to vector<128x1xi1>
    %79 = arith.xori %75, %78 : vector<128x1xi1>
    %80 = arith.andi %79, %73 : vector<128x1xi1>
    %81 = vector.broadcast %69 : i32 to vector<128x1xi32>
    %82 = arith.addi %71, %81 : vector<128x1xi32>
    %83 = arith.select %80, %82, %71 : vector<128x1xi1>, vector<128x1xi32>
    %c0_i32_72 = arith.constant 0 : i32
    %84 = vector.broadcast %c0_i32_72 : i32 to vector<128x1xi32>
    %85 = arith.cmpi eq, %83, %84 : vector<128x1xi32>
    %c0_73 = arith.constant 0 : index
    %c3_74 = arith.constant 3 : index
    %c0_75 = arith.constant 0 : index
    %c0_76 = arith.constant 0 : index
    %86 = vector.load %arg9[%c0_73, %c3_74, %c0_75, %c0_76] : memref<2x4x80x32xbf16, #tpu.memory_space<vmem>>, vector<1x1x64x32xbf16>
    %87 = vector.shape_cast %86 : vector<1x1x64x32xbf16> to vector<64x32xbf16>
    %c1_77 = arith.constant 1 : index
    %c3_78 = arith.constant 3 : index
    %c0_79 = arith.constant 0 : index
    %c0_80 = arith.constant 0 : index
    %88 = vector.load %arg9[%c1_77, %c3_78, %c0_79, %c0_80] : memref<2x4x80x32xbf16, #tpu.memory_space<vmem>>, vector<1x1x64x32xbf16>
    %89 = vector.shape_cast %88 : vector<1x1x64x32xbf16> to vector<64x32xbf16>
    %90 = tpu.concatenate %87, %89 in 0 : vector<64x32xbf16>, vector<64x32xbf16> -> vector<128x32xbf16>
    %cst_81 = arith.constant 0.000000e+00 : bf16
    %91 = vector.broadcast %cst_81 : bf16 to vector<128x32xbf16>
    %92 = vector.shape_cast %85 : vector<128x1xi1> to vector<128x1xi1>
    %93 = vector.broadcast %92 : vector<128x1xi1> to vector<128x32xi1>
    %94 = arith.select %93, %91, %90 : vector<128x32xi1>, vector<128x32xbf16>
    %c0_82 = arith.constant 0 : index
    %c2_83 = arith.constant 2 : index
    %c1_84 = arith.constant 1 : index
    %c0_85 = arith.constant 0 : index
    %95 = vector.load %arg9[%c0_82, %c2_83, %c1_84, %c0_85] : memref<2x4x80x32xbf16, #tpu.memory_space<vmem>>, vector<1x1x64x32xbf16>
    %96 = vector.shape_cast %95 : vector<1x1x64x32xbf16> to vector<64x32xbf16>
    %c1_86 = arith.constant 1 : index
    %c2_87 = arith.constant 2 : index
    %c1_88 = arith.constant 1 : index
    %c0_89 = arith.constant 0 : index
    %97 = vector.load %arg9[%c1_86, %c2_87, %c1_88, %c0_89] : memref<2x4x80x32xbf16, #tpu.memory_space<vmem>>, vector<1x1x64x32xbf16>
    %98 = vector.shape_cast %97 : vector<1x1x64x32xbf16> to vector<64x32xbf16>
    %99 = tpu.concatenate %96, %98 in 0 : vector<64x32xbf16>, vector<64x32xbf16> -> vector<128x32xbf16>
    %c0_90 = arith.constant 0 : index
    %c3_91 = arith.constant 3 : index
    %c1_92 = arith.constant 1 : index
    %c0_93 = arith.constant 0 : index
    %100 = vector.load %arg9[%c0_90, %c3_91, %c1_92, %c0_93] : memref<2x4x80x32xbf16, #tpu.memory_space<vmem>>, vector<1x1x64x32xbf16>
    %101 = vector.shape_cast %100 : vector<1x1x64x32xbf16> to vector<64x32xbf16>
    %c1_94 = arith.constant 1 : index
    %c3_95 = arith.constant 3 : index
    %c1_96 = arith.constant 1 : index
    %c0_97 = arith.constant 0 : index
    %102 = vector.load %arg9[%c1_94, %c3_95, %c1_96, %c0_97] : memref<2x4x80x32xbf16, #tpu.memory_space<vmem>>, vector<1x1x64x32xbf16>
    %103 = vector.shape_cast %102 : vector<1x1x64x32xbf16> to vector<64x32xbf16>
    %104 = tpu.concatenate %101, %103 in 0 : vector<64x32xbf16>, vector<64x32xbf16> -> vector<128x32xbf16>
    %c0_98 = arith.constant 0 : index
    %c1_99 = arith.constant 1 : index
    %c8 = arith.constant 8 : index
    %c0_100 = arith.constant 0 : index
    %105 = vector.load %arg9[%c0_98, %c1_99, %c8, %c0_100] : memref<2x4x80x32xbf16, #tpu.memory_space<vmem>>, vector<1x1x64x32xbf16>
    %106 = vector.shape_cast %105 : vector<1x1x64x32xbf16> to vector<64x32xbf16>
    %c1_101 = arith.constant 1 : index
    %c1_102 = arith.constant 1 : index
    %c8_103 = arith.constant 8 : index
    %c0_104 = arith.constant 0 : index
    %107 = vector.load %arg9[%c1_101, %c1_102, %c8_103, %c0_104] : memref<2x4x80x32xbf16, #tpu.memory_space<vmem>>, vector<1x1x64x32xbf16>
    %108 = vector.shape_cast %107 : vector<1x1x64x32xbf16> to vector<64x32xbf16>
    %109 = tpu.concatenate %106, %108 in 0 : vector<64x32xbf16>, vector<64x32xbf16> -> vector<128x32xbf16>
    %cst_105 = arith.constant 0.000000e+00 : bf16
    %110 = vector.broadcast %cst_105 : bf16 to vector<128x32xbf16>
    %111 = vector.shape_cast %85 : vector<128x1xi1> to vector<128x1xi1>
    %112 = vector.broadcast %111 : vector<128x1xi1> to vector<128x32xi1>
    %113 = arith.select %112, %110, %109 : vector<128x32xi1>, vector<128x32xbf16>
    %c0_106 = arith.constant 0 : index
    %c0_107 = arith.constant 0 : index
    %c9_108 = arith.constant 9 : index
    %c0_109 = arith.constant 0 : index
    %114 = vector.load %arg9[%c0_106, %c0_107, %c9_108, %c0_109] : memref<2x4x80x32xbf16, #tpu.memory_space<vmem>>, vector<1x1x64x32xbf16>
    %115 = vector.shape_cast %114 : vector<1x1x64x32xbf16> to vector<64x32xbf16>
    %c1_110 = arith.constant 1 : index
    %c0_111 = arith.constant 0 : index
    %c9_112 = arith.constant 9 : index
    %c0_113 = arith.constant 0 : index
    %116 = vector.load %arg9[%c1_110, %c0_111, %c9_112, %c0_113] : memref<2x4x80x32xbf16, #tpu.memory_space<vmem>>, vector<1x1x64x32xbf16>
    %117 = vector.shape_cast %116 : vector<1x1x64x32xbf16> to vector<64x32xbf16>
    %118 = tpu.concatenate %115, %117 in 0 : vector<64x32xbf16>, vector<64x32xbf16> -> vector<128x32xbf16>
    %c0_114 = arith.constant 0 : index
    %c1_115 = arith.constant 1 : index
    %c9_116 = arith.constant 9 : index
    %c0_117 = arith.constant 0 : index
    %119 = vector.load %arg9[%c0_114, %c1_115, %c9_116, %c0_117] : memref<2x4x80x32xbf16, #tpu.memory_space<vmem>>, vector<1x1x64x32xbf16>
    %120 = vector.shape_cast %119 : vector<1x1x64x32xbf16> to vector<64x32xbf16>
    %c1_118 = arith.constant 1 : index
    %c1_119 = arith.constant 1 : index
    %c9_120 = arith.constant 9 : index
    %c0_121 = arith.constant 0 : index
    %121 = vector.load %arg9[%c1_118, %c1_119, %c9_120, %c0_121] : memref<2x4x80x32xbf16, #tpu.memory_space<vmem>>, vector<1x1x64x32xbf16>
    %122 = vector.shape_cast %121 : vector<1x1x64x32xbf16> to vector<64x32xbf16>
    %123 = tpu.concatenate %120, %122 in 0 : vector<64x32xbf16>, vector<64x32xbf16> -> vector<128x32xbf16>
    %c0_122 = arith.constant 0 : index
    %c3_123 = arith.constant 3 : index
    %c8_124 = arith.constant 8 : index
    %c0_125 = arith.constant 0 : index
    %124 = vector.load %arg9[%c0_122, %c3_123, %c8_124, %c0_125] : memref<2x4x80x32xbf16, #tpu.memory_space<vmem>>, vector<1x1x64x32xbf16>
    %125 = vector.shape_cast %124 : vector<1x1x64x32xbf16> to vector<64x32xbf16>
    %c1_126 = arith.constant 1 : index
    %c3_127 = arith.constant 3 : index
    %c8_128 = arith.constant 8 : index
    %c0_129 = arith.constant 0 : index
    %126 = vector.load %arg9[%c1_126, %c3_127, %c8_128, %c0_129] : memref<2x4x80x32xbf16, #tpu.memory_space<vmem>>, vector<1x1x64x32xbf16>
    %127 = vector.shape_cast %126 : vector<1x1x64x32xbf16> to vector<64x32xbf16>
    %128 = tpu.concatenate %125, %127 in 0 : vector<64x32xbf16>, vector<64x32xbf16> -> vector<128x32xbf16>
    %cst_130 = arith.constant 0.000000e+00 : bf16
    %129 = vector.broadcast %cst_130 : bf16 to vector<128x32xbf16>
    %130 = vector.shape_cast %85 : vector<128x1xi1> to vector<128x1xi1>
    %131 = vector.broadcast %130 : vector<128x1xi1> to vector<128x32xi1>
    %132 = arith.select %131, %129, %128 : vector<128x32xi1>, vector<128x32xbf16>
    %c0_131 = arith.constant 0 : index
    %c2_132 = arith.constant 2 : index
    %c9_133 = arith.constant 9 : index
    %c0_134 = arith.constant 0 : index
    %133 = vector.load %arg9[%c0_131, %c2_132, %c9_133, %c0_134] : memref<2x4x80x32xbf16, #tpu.memory_space<vmem>>, vector<1x1x64x32xbf16>
    %134 = vector.shape_cast %133 : vector<1x1x64x32xbf16> to vector<64x32xbf16>
    %c1_135 = arith.constant 1 : index
    %c2_136 = arith.constant 2 : index
    %c9_137 = arith.constant 9 : index
    %c0_138 = arith.constant 0 : index
    %135 = vector.load %arg9[%c1_135, %c2_136, %c9_137, %c0_138] : memref<2x4x80x32xbf16, #tpu.memory_space<vmem>>, vector<1x1x64x32xbf16>
    %136 = vector.shape_cast %135 : vector<1x1x64x32xbf16> to vector<64x32xbf16>
    %137 = tpu.concatenate %134, %136 in 0 : vector<64x32xbf16>, vector<64x32xbf16> -> vector<128x32xbf16>
    %c0_139 = arith.constant 0 : index
    %c3_140 = arith.constant 3 : index
    %c9_141 = arith.constant 9 : index
    %c0_142 = arith.constant 0 : index
    %138 = vector.load %arg9[%c0_139, %c3_140, %c9_141, %c0_142] : memref<2x4x80x32xbf16, #tpu.memory_space<vmem>>, vector<1x1x64x32xbf16>
    %139 = vector.shape_cast %138 : vector<1x1x64x32xbf16> to vector<64x32xbf16>
    %c1_143 = arith.constant 1 : index
    %c3_144 = arith.constant 3 : index
    %c9_145 = arith.constant 9 : index
    %c0_146 = arith.constant 0 : index
    %140 = vector.load %arg9[%c1_143, %c3_144, %c9_145, %c0_146] : memref<2x4x80x32xbf16, #tpu.memory_space<vmem>>, vector<1x1x64x32xbf16>
    %141 = vector.shape_cast %140 : vector<1x1x64x32xbf16> to vector<64x32xbf16>
    %142 = tpu.concatenate %139, %141 in 0 : vector<64x32xbf16>, vector<64x32xbf16> -> vector<128x32xbf16>
    %143 = tpu.concatenate %94, %99, %104, %113, %118, %123, %132, %137, %142 in 1 : vector<128x32xbf16>, vector<128x32xbf16>, vector<128x32xbf16>, vector<128x32xbf16>, vector<128x32xbf16>, vector<128x32xbf16>, vector<128x32xbf16>, vector<128x32xbf16>, vector<128x32xbf16> -> vector<128x288xbf16>
    %c0_147 = arith.constant 0 : index
    %c0_148 = arith.constant 0 : index
    %144 = vector.load %arg4[%c0_147, %c0_148] : memref<288x32xbf16, #tpu.memory_space<vmem>>, vector<288x32xbf16>
    %cst_149 = arith.constant dense<0.000000e+00> : vector<128x32xf32>
    %145 = tpu.matmul %143, %144, %cst_149 {dimension_numbers = #tpu.dot_dimension_numbers<[1], [0], [0], [1], [0, 0, 1, 1], [], []>} : vector<128x288xbf16>, vector<288x32xbf16>, vector<128x32xf32> -> vector<128x32xf32>
    %c0_150 = arith.constant 0 : index
    %c0_151 = arith.constant 0 : index
    %146 = vector.load %arg5[%c0_150, %c0_151] : memref<1x32xf32, #tpu.memory_space<vmem>>, vector<1x32xf32>
    %147 = vector.broadcast %146 : vector<1x32xf32> to vector<128x32xf32>
    %148 = arith.addf %145, %147 : vector<128x32xf32>
    %cst_152 = arith.constant 0.000000e+00 : f32
    %149 = vector.broadcast %cst_152 : f32 to vector<128x32xf32>
    %150 = arith.maximumf %148, %149 : vector<128x32xf32>
    %151 = arith.truncf %150 : vector<128x32xf32> to vector<128x32xbf16>
    %152 = vector.extract_strided_slice %25 {offsets = [0, 0, 0, 0], sizes = [2, 1, 64, 16], strides = [1, 1, 1, 1]} : vector<2x4x64x16xbf16> to vector<2x1x64x16xbf16>
    %153 = vector.shape_cast %152 : vector<2x1x64x16xbf16> to vector<2x64x16xbf16>
    %154 = vector.shape_cast %153 : vector<2x64x16xbf16> to vector<128x16xbf16>
    %155 = tpu.concatenate %151, %154 in 1 : vector<128x32xbf16>, vector<128x16xbf16> -> vector<128x48xbf16>
    %c0_153 = arith.constant 0 : index
    %c0_154 = arith.constant 0 : index
    %156 = vector.load %arg6[%c0_153, %c0_154] : memref<48x128xbf16, #tpu.memory_space<vmem>>, vector<48x128xbf16>
    %cst_155 = arith.constant dense<0.000000e+00> : vector<128x128xf32>
    %157 = tpu.matmul %155, %156, %cst_155 {dimension_numbers = #tpu.dot_dimension_numbers<[1], [0], [0], [1], [0, 0, 1, 1], [], []>} : vector<128x48xbf16>, vector<48x128xbf16>, vector<128x128xf32> -> vector<128x128xf32>
    %c0_156 = arith.constant 0 : index
    %c0_157 = arith.constant 0 : index
    %158 = vector.load %arg7[%c0_156, %c0_157] : memref<1x128xf32, #tpu.memory_space<vmem>>, vector<1x128xf32>
    %159 = vector.broadcast %158 : vector<1x128xf32> to vector<128x128xf32>
    %160 = arith.addf %157, %159 : vector<128x128xf32>
    %cst_158 = arith.constant 0.000000e+00 : f32
    %161 = vector.broadcast %cst_158 : f32 to vector<128x128xf32>
    %162 = arith.maximumf %160, %161 : vector<128x128xf32>
    %163 = arith.truncf %162 : vector<128x128xf32> to vector<128x128xbf16>
    %164 = vector.shape_cast %163 : vector<128x128xbf16> to vector<2x64x128xbf16>
    %c0_159 = arith.constant 0 : index
    %c0_160 = arith.constant 0 : index
    %c0_161 = arith.constant 0 : index
    %165 = vector.load %arg8[%c0_159, %c0_160, %c0_161] : memref<2x64x128xbf16, #tpu.memory_space<vmem>>, vector<2x64x128xbf16>
    tpu.vector_store %arg8[%c0_159, %c0_160, %c0_161], %164 {strides = array<i32>} : memref<2x64x128xbf16, #tpu.memory_space<vmem>>, vector<2x64x128xbf16>,
    return
  }
  func.func @transform_0(%arg0: i32) -> (i32, i32, i32, i32) {
    %c0_i32 = arith.constant 0 : i32
    %c0_i32_0 = arith.constant 0 : i32
    %c0_i32_1 = arith.constant 0 : i32
    %c0_i32_2 = arith.constant 0 : i32
    return %arg0, %c0_i32, %c0_i32_0, %c0_i32_1 : i32, i32, i32, i32
  }
  func.func @transform_1(%arg0: i32) -> (i32, i32) {
    %c0_i32 = arith.constant 0 : i32
    %c0_i32_0 = arith.constant 0 : i32
    %c0_i32_1 = arith.constant 0 : i32
    return %c0_i32, %c0_i32_0 : i32, i32
  }
  func.func @transform_2(%arg0: i32) -> (i32, i32) {
    %c0_i32 = arith.constant 0 : i32
    %c0_i32_0 = arith.constant 0 : i32
    %c0_i32_1 = arith.constant 0 : i32
    return %c0_i32, %c0_i32_0 : i32, i32
  }
  func.func @transform_3(%arg0: i32) -> (i32, i32) {
    %c0_i32 = arith.constant 0 : i32
    %c0_i32_0 = arith.constant 0 : i32
    %c0_i32_1 = arith.constant 0 : i32
    return %c0_i32, %c0_i32_0 : i32, i32
  }
  func.func @transform_4(%arg0: i32) -> (i32, i32) {
    %c0_i32 = arith.constant 0 : i32
    %c0_i32_0 = arith.constant 0 : i32
    %c0_i32_1 = arith.constant 0 : i32
    return %c0_i32, %c0_i32_0 : i32, i32
  }
  func.func @transform_5(%arg0: i32) -> (i32, i32) {
    %c0_i32 = arith.constant 0 : i32
    %c0_i32_0 = arith.constant 0 : i32
    %c0_i32_1 = arith.constant 0 : i32
    return %c0_i32, %c0_i32_0 : i32, i32
  }
  func.func @transform_6(%arg0: i32) -> (i32, i32) {
    %c0_i32 = arith.constant 0 : i32
    %c0_i32_0 = arith.constant 0 : i32
    %c0_i32_1 = arith.constant 0 : i32
    return %c0_i32, %c0_i32_0 : i32, i32
  }
  func.func @transform_7(%arg0: i32) -> (i32, i32, i32) {
    %c0_i32 = arith.constant 0 : i32
    %c0_i32_0 = arith.constant 0 : i32
    %c0_i32_1 = arith.constant 0 : i32
    return %arg0, %c0_i32, %c0_i32_0 : i32, i32, i32
  }
}

</mosaic_0001>

<llo_original>
// kernel: lowrank_bottleneck_forward.1
$region0: #{lowrank_bottleneck_forward.1}
  #allocation0 [shape = 'u32[]', space=smem, size = 0x4, offset = 0x4, fixed_abs, tag = 'smem constant byte address 0x4 - core index']
  #allocation1 [shape = 'u32[144,128]{1,0:T(1,128)}', space=vmem, size = 0x12000, scoped, tag = 'internal scratch']
  #allocation2 [shape = 'bf16[2,4,80,32]{3,2,1,0:T(8,128)(2,1)}', space=vmem, size = 0x28000, scoped, tag = 'scratch operand']
  %s0 = inlined_call_operand.vmem [shape: bf16[4,4,64,16], index: 0, kind: input, shape index: {}]
  %s1 = inlined_call_operand.vmem [shape: bf16[16,32], index: 1, kind: input, shape index: {}]
  %s2 = inlined_call_operand.vmem [shape: f32[1,32], index: 2, kind: input, shape index: {}]
  %s3 = inlined_call_operand.vmem [shape: bf16[288,32], index: 3, kind: input, shape index: {}]
  %s4 = inlined_call_operand.vmem [shape: f32[1,32], index: 4, kind: input, shape index: {}]
  %s5 = inlined_call_operand.vmem [shape: bf16[48,128], index: 5, kind: input, shape index: {}]
  %s6 = inlined_call_operand.vmem [shape: f32[1,128], index: 6, kind: input, shape index: {}]
  %s7 = inlined_call_operand.hbm [shape: bf16[4,64,128], index: 7, kind: output, shape index: {}]
  %s8 = sld [smem:[#allocation0]]
  $region61: #{lowrank_bottleneck_forward.1} parent=0
    _
  %s10 = ssub.s32 1, %s8
  %s11 = scalar_select 0, %s10, %s8
  $region1: #{lowrank_bottleneck_forward.1} parent=0
    #allocation3 [shape = 'u8[65536]{0}', space=vmem, size = 0x10000, scoped, tag = 'output window, operand 0']
    #allocation4 [shape = 's32[2]{0}', space=sflag, size = 0x8, scoped, tag = 'scoped memory for lowrank_bottleneck_forward.1']
    %12 = vsyncpa [#allocation4], 0
    %s13 = scalar_lea.sflag [#allocation4], 1
    %14 = vsyncpa %s13, 0
    loop: start=0, step=1, limit=4
    $region2: #{lowrank_bottleneck_forward.1} parent=1 // loop_pre_header
      _
    $region3: #{lowrank_bottleneck_forward.1} parent=1 // loop_header
      %s16 = sphi 0, %s20
      %p17 = scmp.ge.s32.totalorder %s16, 4
      %s26 = sphi 0, %s28
      %s29 = sphi 0, %s26
      %s30 = sphi 0, %s29
      %s46 = sphi 0, %s30
      %s50 = sphi 0, %s50
      %s52 = sphi 0, %s50
      %s53 = sphi 0, %s52
      %s67 = sphi 0, %s53
      %s71 = sphi 0, %s71
      %s73 = sphi 0, %s71
      %s74 = sphi 0, %s73
      %s88 = sphi 0, %s74
      %s92 = sphi 0, %s92
      %s94 = sphi 0, %s92
      %s95 = sphi 0, %s94
      %s109 = sphi 0, %s95
      %s113 = sphi 0, %s113
      %s115 = sphi 0, %s113
      %s116 = sphi 0, %s115
      %s130 = sphi 0, %s116
      %s134 = sphi 0, %s134
      %s136 = sphi 0, %s134
      %s137 = sphi 0, %s136
      %s151 = sphi 0, %s137
      %s155 = sphi 0, %s155
      %s157 = sphi 0, %s155
      %s158 = sphi 0, %s157
      %s172 = sphi 0, %s158
      %s178 = sphi 0, %s180
      %s181 = sphi 0, %s178
      %s182 = sphi 0, %s181
      %s198 = sphi 0, %s182
    $region4: #{lowrank_bottleneck_forward.1} parent=1 // loop_header_branch
      %19 = sbr.rel (%p17) target = $region8
    $region5: #{lowrank_bottleneck_forward.1} parent=1 // loop_body
      %s21 = ssub.s32 %s16, 1
      %s22 = ssub.s32 %s16, 2
      %s23 = sadd.s32 %s16, 1
      %s24 = ssub.s32 %s16, %s23
      %p25 = scmp.eq.s32.totalorder %s24, 0
      %s27 = sadd.s32 %s26, 1
      %s28 = scalar_select %p25, %s26, %s27
      %p31 = pneg %p25
      %p32 = scmp.eq.s32.totalorder %s16, 1
      %p33 = por %p31, %p32
      %p34 = scmp.ne.s32.totalorder %s26, %s29
      %p35 = scmp.eq.s32.totalorder %s16, 0
      %p36 = por %p34, %p35
      %p37 = scmp.ne.s32.totalorder %s26, %s29
      %p38 = scmp.eq.s32.totalorder %s21, 1
      %p39 = por %p37, %p38
      %p40 = scmp.ne.s32.totalorder %s29, %s30
      %p41 = scmp.eq.s32.totalorder %s21, 0
      %p42 = por %p40, %p41
      %p43 = scmp.ne.s32.totalorder %s29, %s30
      %p44 = scmp.eq.s32.totalorder %s22, 1
      %p45 = por %p43, %p44
      %p47 = scmp.ne.s32.totalorder %s30, %s46
      %p48 = scmp.eq.s32.totalorder %s22, 0
      %p49 = por %p47, %p48
      %s51 = sadd.s32 %s50, 1
      %p54 = scmp.eq.s32.totalorder %s16, 1
      %p55 = scmp.ne.s32.totalorder %s50, %s52
      %p56 = scmp.eq.s32.totalorder %s16, 0
      %p57 = por %p55, %p56
      %p58 = scmp.ne.s32.totalorder %s50, %s52
      %p59 = scmp.eq.s32.totalorder %s21, 1
      %p60 = por %p58, %p59
      %p61 = scmp.ne.s32.totalorder %s52, %s53
      %p62 = scmp.eq.s32.totalorder %s21, 0
      %p63 = por %p61, %p62
      %p64 = scmp.ne.s32.totalorder %s52, %s53
      %p65 = scmp.eq.s32.totalorder %s22, 1
      %p66 = por %p64, %p65
      %p68 = scmp.ne.s32.totalorder %s53, %s67
      %p69 = scmp.eq.s32.totalorder %s22, 0
      %p70 = por %p68, %p69
      %s72 = sadd.s32 %s71, 1
      %p75 = scmp.eq.s32.totalorder %s16, 1
      %p76 = scmp.ne.s32.totalorder %s71, %s73
      %p77 = scmp.eq.s32.totalorder %s16, 0
      %p78 = por %p76, %p77
      %p79 = scmp.ne.s32.totalorder %s71, %s73
      %p80 = scmp.eq.s32.totalorder %s21, 1
      %p81 = por %p79, %p80
      %p82 = scmp.ne.s32.totalorder %s73, %s74
      %p83 = scmp.eq.s32.totalorder %s21, 0
      %p84 = por %p82, %p83
      %p85 = scmp.ne.s32.totalorder %s73, %s74
      %p86 = scmp.eq.s32.totalorder %s22, 1
      %p87 = por %p85, %p86
      %p89 = scmp.ne.s32.totalorder %s74, %s88
      %p90 = scmp.eq.s32.totalorder %s22, 0
      %p91 = por %p89, %p90
      %s93 = sadd.s32 %s92, 1
      %p96 = scmp.eq.s32.totalorder %s16, 1
      %p97 = scmp.ne.s32.totalorder %s92, %s94
      %p98 = scmp.eq.s32.totalorder %s16, 0
      %p99 = por %p97, %p98
      %p100 = scmp.ne.s32.totalorder %s92, %s94
      %p101 = scmp.eq.s32.totalorder %s21, 1
      %p102 = por %p100, %p101
      %p103 = scmp.ne.s32.totalorder %s94, %s95
      %p104 = scmp.eq.s32.totalorder %s21, 0
      %p105 = por %p103, %p104
      %p106 = scmp.ne.s32.totalorder %s94, %s95
      %p107 = scmp.eq.s32.totalorder %s22, 1
      %p108 = por %p106, %p107
      %p110 = scmp.ne.s32.totalorder %s95, %s109
      %p111 = scmp.eq.s32.totalorder %s22, 0
      %p112 = por %p110, %p111
      %s114 = sadd.s32 %s113, 1
      %p117 = scmp.eq.s32.totalorder %s16, 1
      %p118 = scmp.ne.s32.totalorder %s113, %s115
      %p119 = scmp.eq.s32.totalorder %s16, 0
      %p120 = por %p118, %p119
      %p121 = scmp.ne.s32.totalorder %s113, %s115
      %p122 = scmp.eq.s32.totalorder %s21, 1
      %p123 = por %p121, %p122
      %p124 = scmp.ne.s32.totalorder %s115, %s116
      %p125 = scmp.eq.s32.totalorder %s21, 0
      %p126 = por %p124, %p125
      %p127 = scmp.ne.s32.totalorder %s115, %s116
      %p128 = scmp.eq.s32.totalorder %s22, 1
      %p129 = por %p127, %p128
      %p131 = scmp.ne.s32.totalorder %s116, %s130
      %p132 = scmp.eq.s32.totalorder %s22, 0
      %p133 = por %p131, %p132
      %s135 = sadd.s32 %s134, 1
      %p138 = scmp.eq.s32.totalorder %s16, 1
      %p139 = scmp.ne.s32.totalorder %s134, %s136
      %p140 = scmp.eq.s32.totalorder %s16, 0
      %p141 = por %p139, %p140
      %p142 = scmp.ne.s32.totalorder %s134, %s136
      %p143 = scmp.eq.s32.totalorder %s21, 1
      %p144 = por %p142, %p143
      %p145 = scmp.ne.s32.totalorder %s136, %s137
      %p146 = scmp.eq.s32.totalorder %s21, 0
      %p147 = por %p145, %p146
      %p148 = scmp.ne.s32.totalorder %s136, %s137
      %p149 = scmp.eq.s32.totalorder %s22, 1
      %p150 = por %p148, %p149
      %p152 = scmp.ne.s32.totalorder %s137, %s151
      %p153 = scmp.eq.s32.totalorder %s22, 0
      %p154 = por %p152, %p153
      %s156 = sadd.s32 %s155, 1
      %p159 = scmp.eq.s32.totalorder %s16, 1
      %p160 = scmp.ne.s32.totalorder %s155, %s157
      %p161 = scmp.eq.s32.totalorder %s16, 0
      %p162 = por %p160, %p161
      %p163 = scmp.ne.s32.totalorder %s155, %s157
      %p164 = scmp.eq.s32.totalorder %s21, 1
      %p165 = por %p163, %p164
      %p166 = scmp.ne.s32.totalorder %s157, %s158
      %p167 = scmp.eq.s32.totalorder %s21, 0
      %p168 = por %p166, %p167
      %p169 = scmp.ne.s32.totalorder %s157, %s158
      %p170 = scmp.eq.s32.totalorder %s22, 1
      %p171 = por %p169, %p170
      %p173 = scmp.ne.s32.totalorder %s158, %s172
      %p174 = scmp.eq.s32.totalorder %s22, 0
      %p175 = por %p173, %p174
      %s176 = ssub.s32 %s16, %s23
      %p177 = scmp.eq.s32.totalorder %s176, 0
      %s179 = sadd.s32 %s178, 1
      %s180 = scalar_select %p177, %s178, %s179
      %p183 = pneg %p177
      %p184 = scmp.eq.s32.totalorder %s16, 1
      %p185 = por %p183, %p184
      %p186 = scmp.ne.s32.totalorder %s178, %s181
      %p187 = scmp.eq.s32.totalorder %s16, 0
      %p188 = por %p186, %p187
      %p189 = scmp.ne.s32.totalorder %s178, %s181
      %p190 = scmp.eq.s32.totalorder %s21, 1
      %p191 = por %p189, %p190
      %p192 = scmp.ne.s32.totalorder %s181, %s182
      %p193 = scmp.eq.s32.totalorder %s21, 0
      %p194 = por %p192, %p193
      %p195 = scmp.ne.s32.totalorder %s181, %s182
      %p196 = scmp.eq.s32.totalorder %s22, 1
      %p197 = por %p195, %p196
      %p199 = scmp.ne.s32.totalorder %s182, %s198
      %p200 = scmp.eq.s32.totalorder %s22, 0
      %p201 = por %p199, %p200
      %p202 = scmp.le.s32.totalorder 1, %s16
      %p203 = scmp.lt.s32.totalorder %s16, 3
      %p204 = pnand %p202, %p203
      %p205 = pneg %p204
      // Predicated region
      $region9: #{lowrank_bottleneck_forward.1} parent=5 // pred_check
        _
      $region10: #{lowrank_bottleneck_forward.1} parent=5 // pred_check_branch
        %207 = sbr.rel (%p204) target = $region12
      $region11: #{lowrank_bottleneck_forward.1} parent=5 // pred_region
        %s208 = ssub.s32 %s16, 1
        // Predicated region
        $region13: #{lowrank_bottleneck_forward.1} parent=11 // pred_check
          %p209 = pneg %p63
        $region14: #{lowrank_bottleneck_forward.1} parent=11 // pred_check_branch
          %211 = sbr.rel (%p209) target = $region16
        $region15: #{lowrank_bottleneck_forward.1} parent=11 // pred_region
          _
        $region16: #{lowrank_bottleneck_forward.1} parent=11 // pred_fallthru
          _
        // Predicated region
        $region17: #{lowrank_bottleneck_forward.1} parent=11 // pred_check
          %p212 = pneg %p84
        $region18: #{lowrank_bottleneck_forward.1} parent=11 // pred_check_branch
          %214 = sbr.rel (%p212) target = $region20
        $region19: #{lowrank_bottleneck_forward.1} parent=11 // pred_region
          _
        $region20: #{lowrank_bottleneck_forward.1} parent=11 // pred_fallthru
          _
        // Predicated region
        $region21: #{lowrank_bottleneck_forward.1} parent=11 // pred_check
          %p215 = pneg %p105
        $region22: #{lowrank_bottleneck_forward.1} parent=11 // pred_check_branch
          %217 = sbr.rel (%p215) target = $region24
        $region23: #{lowrank_bottleneck_forward.1} parent=11 // pred_region
          _
        $region24: #{lowrank_bottleneck_forward.1} parent=11 // pred_fallthru
          _
        // Predicated region
        $region25: #{lowrank_bottleneck_forward.1} parent=11 // pred_check
          %p218 = pneg %p126
        $region26: #{lowrank_bottleneck_forward.1} parent=11 // pred_check_branch
          %220 = sbr.rel (%p218) target = $region28
        $region27: #{lowrank_bottleneck_forward.1} parent=11 // pred_region
          _
        $region28: #{lowrank_bottleneck_forward.1} parent=11 // pred_fallthru
          _
        // Predicated region
        $region29: #{lowrank_bottleneck_forward.1} parent=11 // pred_check
          %p221 = pneg %p147
        $region30: #{lowrank_bottleneck_forward.1} parent=11 // pred_check_branch
          %223 = sbr.rel (%p221) target = $region32
        $region31: #{lowrank_bottleneck_forward.1} parent=11 // pred_region
          _
        $region32: #{lowrank_bottleneck_forward.1} parent=11 // pred_fallthru
          _
        // Predicated region
        $region33: #{lowrank_bottleneck_forward.1} parent=11 // pred_check
          %p224 = pneg %p168
        $region34: #{lowrank_bottleneck_forward.1} parent=11 // pred_check_branch
          %226 = sbr.rel (%p224) target = $region36
        $region35: #{lowrank_bottleneck_forward.1} parent=11 // pred_region
          _
        $region36: #{lowrank_bottleneck_forward.1} parent=11 // pred_fallthru
          _
      $region12: #{lowrank_bottleneck_forward.1} parent=5 // pred_fallthru
        _
      %p227 = scmp.lt.s32.totalorder %s16, 2
      // Predicated region
      $region37: #{lowrank_bottleneck_forward.1} parent=5 // pred_check
        %p228 = pneg %p227
      $region38: #{lowrank_bottleneck_forward.1} parent=5 // pred_check_branch
        %230 = sbr.rel (%p228) target = $region40
      $region39: #{lowrank_bottleneck_forward.1} parent=5 // pred_region
        // Predicated region
        $region41: #{lowrank_bottleneck_forward.1} parent=39 // pred_check
          %p231 = pneg %p36
        $region42: #{lowrank_bottleneck_forward.1} parent=39 // pred_check_branch
          %233 = sbr.rel (%p231) target = $region44
        $region43: #{lowrank_bottleneck_forward.1} parent=39 // pred_region
          %s234 = smul.u32 2, %s16
          %p235 = scmp.lt.s32.totalorder %s234, 3
          %s236 = scalar_select %p235, %s234, 3
          %s237 = smul.addr %s236, 32
          %s238 = smul.addr %s237, 4
          %s239 = scalar_lea.vmem %s0, %s238
          %s240 = smul.u32 2, %s16
        $region44: #{lowrank_bottleneck_forward.1} parent=39 // pred_fallthru
          _
      $region40: #{lowrank_bottleneck_forward.1} parent=5 // pred_fallthru
        _
      %p241 = scmp.le.s32.totalorder 1, %s16
      %p242 = scmp.lt.s32.totalorder %s16, 3
      %p243 = pnand %p241, %p242
      %p244 = pneg %p243
      // Predicated region
      $region45: #{lowrank_bottleneck_forward.1} parent=5 // pred_check
        _
      $region46: #{lowrank_bottleneck_forward.1} parent=5 // pred_check_branch
        %246 = sbr.rel (%p243) target = $region48
      $region47: #{lowrank_bottleneck_forward.1} parent=5 // pred_region
        %s247 = ssub.s32 %s16, 1
        %s248 = smul.u32 2, %s21
        %p249 = scmp.lt.s32.totalorder %s248, 3
        %s250 = scalar_select %p249, %s248, 3
        %s251 = smul.addr %s250, 32
        %s252 = smul.addr %s251, 4
        %s253 = scalar_lea.vmem %s0, %s252
        %p254 = pneg %p42
        %p255 = pneg %p39
        %p256 = pneg %p63
        %p257 = pneg %p60
        %p258 = pneg %p84
        %p259 = pneg %p81
        %p260 = pneg %p105
        %p261 = pneg %p102
        %p262 = pneg %p126
        %p263 = pneg %p123
        %p264 = pneg %p147
        %p265 = pneg %p144
        %p266 = pneg %p168
        %p267 = pneg %p165
        %p268 = pneg %p194
        %p269 = pneg %p191
        %s270 = sand.u32 %s181, 1
        %s271 = scalar_lea.sflag [#allocation4], %s270
        %s272 = sand.u32 %s181, 1
        %s273 = smul.addr %s272, 64
        %s274 = scalar_lea.vmem [#allocation3], %s273
        %s275 = smul.u32 2, %s21
        %p276 = scmp.lt.s32.totalorder %s275, 3
        %s277 = scalar_select %p276, %s275, 3
        %s278 = smul.addr %s277, 32
        %s279 = smul.addr %s278, 4
        %s280 = scalar_lea.vmem %s0, %s279
        %s281 = smul.u32 2, %s21
        %s282 = smul.u32 2, %s21
        %vm286 = vcmask 257024
        %287 = vst.msk [vmem:[#allocation2] sm:$0xf] %vm286, 0
        %vm288 = vcmask 253952
        %vm289 = vsmask.f32 256
        %vm290 = vmand %vm288, %vm289
        %v291 = vld [vmem:[#allocation2 + $0x4] sm:$0x1]
        %v292 = vsel %vm290, 0, %v291
        %293 = vst [vmem:[#allocation2 + $0x4] sm:$0x1] %v292
        %s294 = scalar_lea.vmem [#allocation2], 40
        %295 = vst.msk [vmem:[%s294] sm:$0xf] %vm286, 0
        %v296 = vld [vmem:[%s294 + $0x4] sm:$0x1]
        %v297 = vsel %vm290, 0, %v296
        %298 = vst [vmem:[%s294 + $0x4] sm:$0x1] %v297
        %s299 = scalar_lea.vmem [#allocation2], 80
        %300 = vst.msk [vmem:[%s299] sm:$0xf] %vm286, 0
        %v301 = vld [vmem:[%s299 + $0x4] sm:$0x1]
        %v302 = vsel %vm290, 0, %v301
        %303 = vst [vmem:[%s299 + $0x4] sm:$0x1] %v302
        %s304 = scalar_lea.vmem [#allocation2], 120
        %305 = vst.msk [vmem:[%s304] sm:$0xf] %vm286, 0
        %v306 = vld [vmem:[%s304 + $0x4] sm:$0x1]
        %v307 = vsel %vm290, 0, %v306
        %308 = vst [vmem:[%s304 + $0x4] sm:$0x1] %v307
        %s309 = scalar_lea.vmem [#allocation2], 160
        %310 = vst.msk [vmem:[%s309] sm:$0xf] %vm286, 0
        %v311 = vld [vmem:[%s309 + $0x4] sm:$0x1]
        %v312 = vsel %vm290, 0, %v311
        %313 = vst [vmem:[%s309 + $0x4] sm:$0x1] %v312
        %s314 = scalar_lea.vmem [#allocation2], 200
        %315 = vst.msk [vmem:[%s314] sm:$0xf] %vm286, 0
        %v316 = vld [vmem:[%s314 + $0x4] sm:$0x1]
        %v317 = vsel %vm290, 0, %v316
        %318 = vst [vmem:[%s314 + $0x4] sm:$0x1] %v317
        %s319 = scalar_lea.vmem [#allocation2], 240
        %320 = vst.msk [vmem:[%s319] sm:$0xf] %vm286, 0
        %v321 = vld [vmem:[%s319 + $0x4] sm:$0x1]
        %v322 = vsel %vm290, 0, %v321
        %323 = vst [vmem:[%s319 + $0x4] sm:$0x1] %v322
        %s324 = scalar_lea.vmem [#allocation2], 280
        %325 = vst.msk [vmem:[%s324] sm:$0xf] %vm286, 0
        %v326 = vld [vmem:[%s324 + $0x4] sm:$0x1]
        %v327 = vsel %vm290, 0, %v326
        %328 = vst [vmem:[%s324 + $0x4] sm:$0x1] %v327
        %v329 = vld [vmem:[%s280] sm:$0xf]
        %v330 = vld [vmem:[%s280 + $0x4] sm:$0xf]
        %v331 = vld [vmem:[%s280 + $0x8] sm:$0xf]
        %v332 = vld [vmem:[%s280 + $0xc] sm:$0xf]
        %v333 = vld [vmem:[%s280 + $0x10] sm:$0xf]
        %v334 = vld [vmem:[%s280 + $0x14] sm:$0xf]
        %v335 = vld [vmem:[%s280 + $0x18] sm:$0xf]
        %v336 = vld [vmem:[%s280 + $0x1c] sm:$0xf]
        %v337 = vld [vmem:[%s280 + $0x20] sm:$0xf]
        %v338 = vld [vmem:[%s280 + $0x24] sm:$0xf]
        %v339 = vld [vmem:[%s280 + $0x28] sm:$0xf]
        %v340 = vld [vmem:[%s280 + $0x2c] sm:$0xf]
        %v341 = vld [vmem:[%s280 + $0x30] sm:$0xf]
        %v342 = vld [vmem:[%s280 + $0x34] sm:$0xf]
        %v343 = vld [vmem:[%s280 + $0x38] sm:$0xf]
        %v344 = vld [vmem:[%s280 + $0x3c] sm:$0xf]
        %v345 = vld [vmem:[%s280 + $0x40] sm:$0xf]
        %v346 = vld [vmem:[%s280 + $0x44] sm:$0xf]
        %v347 = vld [vmem:[%s280 + $0x48] sm:$0xf]
        %v348 = vld [vmem:[%s280 + $0x4c] sm:$0xf]
        %v349 = vld [vmem:[%s280 + $0x50] sm:$0xf]
        %v350 = vld [vmem:[%s280 + $0x54] sm:$0xf]
        %v351 = vld [vmem:[%s280 + $0x58] sm:$0xf]
        %v352 = vld [vmem:[%s280 + $0x5c] sm:$0xf]
        %v353 = vld [vmem:[%s280 + $0x60] sm:$0xf]
        %v354 = vld [vmem:[%s280 + $0x64] sm:$0xf]
        %v355 = vld [vmem:[%s280 + $0x68] sm:$0xf]
        %v356 = vld [vmem:[%s280 + $0x6c] sm:$0xf]
        %v357 = vld [vmem:[%s280 + $0x70] sm:$0xf]
        %v358 = vld [vmem:[%s280 + $0x74] sm:$0xf]
        %v359 = vld [vmem:[%s280 + $0x78] sm:$0xf]
        %v360 = vld [vmem:[%s280 + $0x7c] sm:$0xf]
        %v361 = vld [vmem:[%s280 + $0x80] sm:$0xf]
        %v362 = vld [vmem:[%s280 + $0x84] sm:$0xf]
        %v363 = vld [vmem:[%s280 + $0x88] sm:$0xf]
        %v364 = vld [vmem:[%s280 + $0x8c] sm:$0xf]
        %v365 = vld [vmem:[%s280 + $0x90] sm:$0xf]
        %v366 = vld [vmem:[%s280 + $0x94] sm:$0xf]
        %v367 = vld [vmem:[%s280 + $0x98] sm:$0xf]
        %v368 = vld [vmem:[%s280 + $0x9c] sm:$0xf]
        %v369 = vld [vmem:[%s280 + $0xa0] sm:$0xf]
        %v370 = vld [vmem:[%s280 + $0xa4] sm:$0xf]
        %v371 = vld [vmem:[%s280 + $0xa8] sm:$0xf]
        %v372 = vld [vmem:[%s280 + $0xac] sm:$0xf]
        %v373 = vld [vmem:[%s280 + $0xb0] sm:$0xf]
        %v374 = vld [vmem:[%s280 + $0xb4] sm:$0xf]
        %v375 = vld [vmem:[%s280 + $0xb8] sm:$0xf]
        %v376 = vld [vmem:[%s280 + $0xbc] sm:$0xf]
        %v377 = vld [vmem:[%s280 + $0xc0] sm:$0xf]
        %v378 = vld [vmem:[%s280 + $0xc4] sm:$0xf]
        %v379 = vld [vmem:[%s280 + $0xc8] sm:$0xf]
        %v380 = vld [vmem:[%s280 + $0xcc] sm:$0xf]
        %v381 = vld [vmem:[%s280 + $0xd0] sm:$0xf]
        %v382 = vld [vmem:[%s280 + $0xd4] sm:$0xf]
        %v383 = vld [vmem:[%s280 + $0xd8] sm:$0xf]
        %v384 = vld [vmem:[%s280 + $0xdc] sm:$0xf]
        %v385 = vld [vmem:[%s280 + $0xe0] sm:$0xf]
        %v386 = vld [vmem:[%s280 + $0xe4] sm:$0xf]
        %v387 = vld [vmem:[%s280 + $0xe8] sm:$0xf]
        %v388 = vld [vmem:[%s280 + $0xec] sm:$0xf]
        %v389 = vld [vmem:[%s280 + $0xf0] sm:$0xf]
        %v390 = vld [vmem:[%s280 + $0xf4] sm:$0xf]
        %v391 = vld [vmem:[%s280 + $0xf8] sm:$0xf]
        %v392 = vld [vmem:[%s280 + $0xfc] sm:$0xf]
        %v393 = vld [vmem:[%s1] sm:$0xf]
        %v394 = vld [vmem:[%s1 + $0x4] sm:$0xf]
        %v395 = vld [vmem:[%s2] sm:$0x1]
        %v397 = vlaneseq
        %v398 = vshrl.u32 %v397, 7
        %v399 = vsub.s32 0, %v398
        %v400 = vrot.slane %v395, %v399
        %v466 = vunpack.c.l.b16 %v329
        %v467 = vunpack.c.l.b16 %v330
        %v468 = vunpack.c.l.b16 %v331
        %v469 = vunpack.c.l.b16 %v332
        %v470 = vunpack.c.l.b16 %v333
        %v471 = vunpack.c.l.b16 %v334
        %v472 = vunpack.c.l.b16 %v335
        %v473 = vunpack.c.l.b16 %v336
        %v474 = vunpack.c.l.b16 %v337
        %v475 = vunpack.c.l.b16 %v338
        %v476 = vunpack.c.l.b16 %v339
        %v477 = vunpack.c.l.b16 %v340
        %v478 = vunpack.c.l.b16 %v341
        %v479 = vunpack.c.l.b16 %v342
        %v480 = vunpack.c.l.b16 %v343
        %v481 = vunpack.c.l.b16 %v344
        %v482 = vunpack.c.l.b16 %v345
        %v483 = vunpack.c.l.b16 %v346
        %v484 = vunpack.c.l.b16 %v347
        %v485 = vunpack.c.l.b16 %v348
        %v486 = vunpack.c.l.b16 %v349
        %v487 = vunpack.c.l.b16 %v350
        %v488 = vunpack.c.l.b16 %v351
        %v489 = vunpack.c.l.b16 %v352
        %v490 = vunpack.c.l.b16 %v353
        %v491 = vunpack.c.l.b16 %v354
        %v492 = vunpack.c.l.b16 %v355
        %v493 = vunpack.c.l.b16 %v356
        %v494 = vunpack.c.l.b16 %v357
        %v495 = vunpack.c.l.b16 %v358
        %v496 = vunpack.c.l.b16 %v359
        %v497 = vunpack.c.l.b16 %v360
        %v498 = vunpack.c.l.b16 %v361
        %v499 = vunpack.c.l.b16 %v362
        %v500 = vunpack.c.l.b16 %v363
        %v501 = vunpack.c.l.b16 %v364
        %v502 = vunpack.c.l.b16 %v365
        %v503 = vunpack.c.l.b16 %v366
        %v504 = vunpack.c.l.b16 %v367
        %v505 = vunpack.c.l.b16 %v368
        %v506 = vunpack.c.l.b16 %v369
        %v507 = vunpack.c.l.b16 %v370
        %v508 = vunpack.c.l.b16 %v371
        %v509 = vunpack.c.l.b16 %v372
        %v510 = vunpack.c.l.b16 %v373
        %v511 = vunpack.c.l.b16 %v374
        %v512 = vunpack.c.l.b16 %v375
        %v513 = vunpack.c.l.b16 %v376
        %v514 = vunpack.c.l.b16 %v377
        %v515 = vunpack.c.l.b16 %v378
        %v516 = vunpack.c.l.b16 %v379
        %v517 = vunpack.c.l.b16 %v380
        %v518 = vunpack.c.l.b16 %v381
        %v519 = vunpack.c.l.b16 %v382
        %v520 = vunpack.c.l.b16 %v383
        %v521 = vunpack.c.l.b16 %v384
        %v522 = vunpack.c.l.b16 %v385
        %v523 = vunpack.c.l.b16 %v386
        %v524 = vunpack.c.l.b16 %v387
        %v525 = vunpack.c.l.b16 %v388
        %v526 = vunpack.c.l.b16 %v389
        %v527 = vunpack.c.l.b16 %v390
        %v528 = vunpack.c.l.b16 %v391
        %v529 = vunpack.c.l.b16 %v392
        %v530 = vpack.c.b16 %v467, %v466
        %v531 = vpack.c.b16 %v469, %v468
        %v532 = vpack.c.b16 %v471, %v470
        %v533 = vpack.c.b16 %v473, %v472
        %v534 = vpack.c.b16 %v475, %v474
        %v535 = vpack.c.b16 %v477, %v476
        %v536 = vpack.c.b16 %v479, %v478
        %v537 = vpack.c.b16 %v481, %v480
        %v538 = vpack.c.b16 %v483, %v482
        %v539 = vpack.c.b16 %v485, %v484
        %v540 = vpack.c.b16 %v487, %v486
        %v541 = vpack.c.b16 %v489, %v488
        %v542 = vpack.c.b16 %v491, %v490
        %v543 = vpack.c.b16 %v493, %v492
        %v544 = vpack.c.b16 %v495, %v494
        %v545 = vpack.c.b16 %v497, %v496
        %v546 = vpack.c.b16 %v499, %v498
        %v547 = vpack.c.b16 %v501, %v500
        %v548 = vpack.c.b16 %v503, %v502
        %v549 = vpack.c.b16 %v505, %v504
        %v550 = vpack.c.b16 %v507, %v506
        %v551 = vpack.c.b16 %v509, %v508
        %v552 = vpack.c.b16 %v511, %v510
        %v553 = vpack.c.b16 %v513, %v512
        %v554 = vpack.c.b16 %v515, %v514
        %v555 = vpack.c.b16 %v517, %v516
        %v556 = vpack.c.b16 %v519, %v518
        %v557 = vpack.c.b16 %v521, %v520
        %v558 = vpack.c.b16 %v523, %v522
        %v559 = vpack.c.b16 %v525, %v524
        %v560 = vpack.c.b16 %v527, %v526
        %v561 = vpack.c.b16 %v529, %v528
        %v564 = vunpack.c.l.b16 %v393
        %v565 = vunpack.c.l.b16 %v394
        %v566 = vpack.c.b16 %v565, %v564
        %vm568 = vcmask 130048
        %v570 = vsel %vm568, %v530, 0
        %v573 = vsel %vm568, %v531, 0
        %v576 = vsel %vm568, %v532, 0
        %v579 = vsel %vm568, %v533, 0
        %v582 = vsel %vm568, %v534, 0
        %v585 = vsel %vm568, %v535, 0
        %v588 = vsel %vm568, %v536, 0
        %v591 = vsel %vm568, %v537, 0
        %v594 = vsel %vm568, %v538, 0
        %v597 = vsel %vm568, %v539, 0
        %v600 = vsel %vm568, %v540, 0
        %v603 = vsel %vm568, %v541, 0
        %v606 = vsel %vm568, %v542, 0
        %v609 = vsel %vm568, %v543, 0
        %v612 = vsel %vm568, %v544, 0
        %v615 = vsel %vm568, %v545, 0
        %v618 = vsel %vm568, %v546, 0
        %v621 = vsel %vm568, %v547, 0
        %v624 = vsel %vm568, %v548, 0
        %v627 = vsel %vm568, %v549, 0
        %v630 = vsel %vm568, %v550, 0
        %v633 = vsel %vm568, %v551, 0
        %v636 = vsel %vm568, %v552, 0
        %v639 = vsel %vm568, %v553, 0
        %v642 = vsel %vm568, %v554, 0
        %v645 = vsel %vm568, %v555, 0
        %v648 = vsel %vm568, %v556, 0
        %v651 = vsel %vm568, %v557, 0
        %v654 = vsel %vm568, %v558, 0
        %v657 = vsel %vm568, %v559, 0
        %v660 = vsel %vm568, %v560, 0
        %v663 = vsel %vm568, %v561, 0
        %665 = vmatprep.subr.bf16.mxu0 0
        %666 = vmatpush1.bf16.msra.mxu0 0
        %667 = vmatprep.subr.bf16.mxu0 0
        %668 = vmatpush1.bf16.msra.mxu0 0
        %669 = vmatprep.subr.bf16.mxu0 0
        %670 = vmatpush1.bf16.msra.mxu0 0
        %671 = vmatprep.subr.bf16.mxu0 0
        %672 = vmatpush1.bf16.msra.mxu0 0
        %673 = vmatprep.subr.bf16.mxu0 0
        %674 = vmatpush1.bf16.msra.mxu0 0
        %675 = vmatprep.subr.bf16.mxu0 0
        %676 = vmatpush1.bf16.msra.mxu0 0
        %677 = vmatprep.subr.bf16.mxu0 0
        %678 = vmatpush1.bf16.msra.mxu0 0
        %679 = vmatprep.subr.bf16.mxu0 0
        %680 = vmatpush1.bf16.msra.mxu0 %v566
        %681 = vmatprep.subr.bf16.mxu0 0
        %682 = vmatpush2.bf16.msra.mxu0 0
        %683 = vmatprep.subr.bf16.mxu0 0
        %684 = vmatpush2.bf16.msra.mxu0 0
        %685 = vmatprep.subr.bf16.mxu0 0
        %686 = vmatpush2.bf16.msra.mxu0 0
        %687 = vmatprep.subr.bf16.mxu0 0
        %688 = vmatpush2.bf16.msra.mxu0 0
        %689 = vmatprep.subr.bf16.mxu0 0
        %690 = vmatpush2.bf16.msra.mxu0 0
        %691 = vmatprep.subr.bf16.mxu0 0
        %692 = vmatpush2.bf16.msra.mxu0 0
        %693 = vmatprep.subr.bf16.mxu0 0
        %694 = vmatpush2.bf16.msra.mxu0 0
        %695 = vmatprep.subr.bf16.mxu0 0
        %696 = vmatpush2.bf16.msra.mxu0 0
        %697 = vmatprep.mubr.bf16.mxu0 0
        %698 = vmatmul.mubr.bf16.gmra.mxu0 %v570
        %v699 = vpop.f32.mrf.mxu0
        %v700 = vadd.f32 %v400, %v699
        %v701 = vpop.f32.mrf.mxu0
        %v702 = vpop.f32.mrf.mxu0
        %v703 = vadd.f32 %v400, %v702
        %v704 = vpop.f32.mrf.mxu0
        %705 = vmatprep.mubr.bf16.mxu0 0
        %706 = vmatmul.mubr.bf16.gmra.mxu0 %v573
        %v707 = vpop.f32.mrf.mxu0
        %v708 = vadd.f32 %v400, %v707
        %v709 = vpop.f32.mrf.mxu0
        %v710 = vpop.f32.mrf.mxu0
        %v711 = vadd.f32 %v400, %v710
        %v712 = vpop.f32.mrf.mxu0
        %713 = vmatprep.mubr.bf16.mxu0 0
        %714 = vmatmul.mubr.bf16.gmra.mxu0 %v576
        %v715 = vpop.f32.mrf.mxu0
        %v716 = vadd.f32 %v400, %v715
        %v717 = vpop.f32.mrf.mxu0
        %v718 = vpop.f32.mrf.mxu0
        %v719 = vadd.f32 %v400, %v718
        %v720 = vpop.f32.mrf.mxu0
        %721 = vmatprep.mubr.bf16.mxu0 0
        %722 = vmatmul.mubr.bf16.gmra.mxu0 %v579
        %v723 = vpop.f32.mrf.mxu0
        %v724 = vadd.f32 %v400, %v723
        %v725 = vpop.f32.mrf.mxu0
        %v726 = vpop.f32.mrf.mxu0
        %v727 = vadd.f32 %v400, %v726
        %v728 = vpop.f32.mrf.mxu0
        %729 = vmatprep.mubr.bf16.mxu0 0
        %730 = vmatmul.mubr.bf16.gmra.mxu0 %v582
        %v731 = vpop.f32.mrf.mxu0
        %v732 = vadd.f32 %v400, %v731
        %v733 = vpop.f32.mrf.mxu0
        %v734 = vpop.f32.mrf.mxu0
        %v735 = vadd.f32 %v400, %v734
        %v736 = vpop.f32.mrf.mxu0
        %737 = vmatprep.mubr.bf16.mxu0 0
        %738 = vmatmul.mubr.bf16.gmra.mxu0 %v585
        %v739 = vpop.f32.mrf.mxu0
        %v740 = vadd.f32 %v400, %v739
        %v741 = vpop.f32.mrf.mxu0
        %v742 = vpop.f32.mrf.mxu0
        %v743 = vadd.f32 %v400, %v742
        %v744 = vpop.f32.mrf.mxu0
        %745 = vmatprep.mubr.bf16.mxu0 0
        %746 = vmatmul.mubr.bf16.gmra.mxu0 %v588
        %v747 = vpop.f32.mrf.mxu0
        %v748 = vadd.f32 %v400, %v747
        %v749 = vpop.f32.mrf.mxu0
        %v750 = vpop.f32.mrf.mxu0
        %v751 = vadd.f32 %v400, %v750
        %v752 = vpop.f32.mrf.mxu0
        %753 = vmatprep.mubr.bf16.mxu0 0
        %754 = vmatmul.mubr.bf16.gmra.mxu0 %v591
        %v755 = vpop.f32.mrf.mxu0
        %v756 = vadd.f32 %v400, %v755
        %v757 = vpop.f32.mrf.mxu0
        %v758 = vpop.f32.mrf.mxu0
        %v759 = vadd.f32 %v400, %v758
        %v760 = vpop.f32.mrf.mxu0
        %761 = vmatprep.mubr.bf16.mxu0 0
        %762 = vmatmul.mubr.bf16.gmra.mxu0 %v594
        %v763 = vpop.f32.mrf.mxu0
        %v764 = vadd.f32 %v400, %v763
        %v765 = vpop.f32.mrf.mxu0
        %v766 = vpop.f32.mrf.mxu0
        %v767 = vadd.f32 %v400, %v766
        %v768 = vpop.f32.mrf.mxu0
        %769 = vmatprep.mubr.bf16.mxu0 0
        %770 = vmatmul.mubr.bf16.gmra.mxu0 %v597
        %v771 = vpop.f32.mrf.mxu0
        %v772 = vadd.f32 %v400, %v771
        %v773 = vpop.f32.mrf.mxu0
        %v774 = vpop.f32.mrf.mxu0
        %v775 = vadd.f32 %v400, %v774
        %v776 = vpop.f32.mrf.mxu0
        %777 = vmatprep.mubr.bf16.mxu0 0
        %778 = vmatmul.mubr.bf16.gmra.mxu0 %v600
        %v779 = vpop.f32.mrf.mxu0
        %v780 = vadd.f32 %v400, %v779
        %v781 = vpop.f32.mrf.mxu0
        %v782 = vpop.f32.mrf.mxu0
        %v783 = vadd.f32 %v400, %v782
        %v784 = vpop.f32.mrf.mxu0
        %785 = vmatprep.mubr.bf16.mxu0 0
        %786 = vmatmul.mubr.bf16.gmra.mxu0 %v603
        %v787 = vpop.f32.mrf.mxu0
        %v788 = vadd.f32 %v400, %v787
        %v789 = vpop.f32.mrf.mxu0
        %v790 = vpop.f32.mrf.mxu0
        %v791 = vadd.f32 %v400, %v790
        %v792 = vpop.f32.mrf.mxu0
        %793 = vmatprep.mubr.bf16.mxu0 0
        %794 = vmatmul.mubr.bf16.gmra.mxu0 %v606
        %v795 = vpop.f32.mrf.mxu0
        %v796 = vadd.f32 %v400, %v795
        %v797 = vpop.f32.mrf.mxu0
        %v798 = vpop.f32.mrf.mxu0
        %v799 = vadd.f32 %v400, %v798
        %v800 = vpop.f32.mrf.mxu0
        %801 = vmatprep.mubr.bf16.mxu0 0
        %802 = vmatmul.mubr.bf16.gmra.mxu0 %v609
        %v803 = vpop.f32.mrf.mxu0
        %v804 = vadd.f32 %v400, %v803
        %v805 = vpop.f32.mrf.mxu0
        %v806 = vpop.f32.mrf.mxu0
        %v807 = vadd.f32 %v400, %v806
        %v808 = vpop.f32.mrf.mxu0
        %809 = vmatprep.mubr.bf16.mxu0 0
        %810 = vmatmul.mubr.bf16.gmra.mxu0 %v612
        %v811 = vpop.f32.mrf.mxu0
        %v812 = vadd.f32 %v400, %v811
        %v813 = vpop.f32.mrf.mxu0
        %v814 = vpop.f32.mrf.mxu0
        %v815 = vadd.f32 %v400, %v814
        %v816 = vpop.f32.mrf.mxu0
        %817 = vmatprep.mubr.bf16.mxu0 0
        %818 = vmatmul.mubr.bf16.gmra.mxu0 %v615
        %v819 = vpop.f32.mrf.mxu0
        %v820 = vadd.f32 %v400, %v819
        %v821 = vpop.f32.mrf.mxu0
        %v822 = vpop.f32.mrf.mxu0
        %v823 = vadd.f32 %v400, %v822
        %v824 = vpop.f32.mrf.mxu0
        %825 = vmatprep.mubr.bf16.mxu0 0
        %826 = vmatmul.mubr.bf16.gmra.mxu0 %v618
        %v827 = vpop.f32.mrf.mxu0
        %v828 = vadd.f32 %v400, %v827
        %v829 = vpop.f32.mrf.mxu0
        %v830 = vpop.f32.mrf.mxu0
        %v831 = vadd.f32 %v400, %v830
        %v832 = vpop.f32.mrf.mxu0
        %833 = vmatprep.mubr.bf16.mxu0 0
        %834 = vmatmul.mubr.bf16.gmra.mxu0 %v621
        %v835 = vpop.f32.mrf.mxu0
        %v836 = vadd.f32 %v400, %v835
        %v837 = vpop.f32.mrf.mxu0
        %v838 = vpop.f32.mrf.mxu0
        %v839 = vadd.f32 %v400, %v838
        %v840 = vpop.f32.mrf.mxu0
        %841 = vmatprep.mubr.bf16.mxu0 0
        %842 = vmatmul.mubr.bf16.gmra.mxu0 %v624
        %v843 = vpop.f32.mrf.mxu0
        %v844 = vadd.f32 %v400, %v843
        %v845 = vpop.f32.mrf.mxu0
        %v846 = vpop.f32.mrf.mxu0
        %v847 = vadd.f32 %v400, %v846
        %v848 = vpop.f32.mrf.mxu0
        %849 = vmatprep.mubr.bf16.mxu0 0
        %850 = vmatmul.mubr.bf16.gmra.mxu0 %v627
        %v851 = vpop.f32.mrf.mxu0
        %v852 = vadd.f32 %v400, %v851
        %v853 = vpop.f32.mrf.mxu0
        %v854 = vpop.f32.mrf.mxu0
        %v855 = vadd.f32 %v400, %v854
        %v856 = vpop.f32.mrf.mxu0
        %857 = vmatprep.mubr.bf16.mxu0 0
        %858 = vmatmul.mubr.bf16.gmra.mxu0 %v630
        %v859 = vpop.f32.mrf.mxu0
        %v860 = vadd.f32 %v400, %v859
        %v861 = vpop.f32.mrf.mxu0
        %v862 = vpop.f32.mrf.mxu0
        %v863 = vadd.f32 %v400, %v862
        %v864 = vpop.f32.mrf.mxu0
        %865 = vmatprep.mubr.bf16.mxu0 0
        %866 = vmatmul.mubr.bf16.gmra.mxu0 %v633
        %v867 = vpop.f32.mrf.mxu0
        %v868 = vadd.f32 %v400, %v867
        %v869 = vpop.f32.mrf.mxu0
        %v870 = vpop.f32.mrf.mxu0
        %v871 = vadd.f32 %v400, %v870
        %v872 = vpop.f32.mrf.mxu0
        %873 = vmatprep.mubr.bf16.mxu0 0
        %874 = vmatmul.mubr.bf16.gmra.mxu0 %v636
        %v875 = vpop.f32.mrf.mxu0
        %v876 = vadd.f32 %v400, %v875
        %v877 = vpop.f32.mrf.mxu0
        %v878 = vpop.f32.mrf.mxu0
        %v879 = vadd.f32 %v400, %v878
        %v880 = vpop.f32.mrf.mxu0
        %881 = vmatprep.mubr.bf16.mxu0 0
        %882 = vmatmul.mubr.bf16.gmra.mxu0 %v639
        %v883 = vpop.f32.mrf.mxu0
        %v884 = vadd.f32 %v400, %v883
        %v885 = vpop.f32.mrf.mxu0
        %v886 = vpop.f32.mrf.mxu0
        %v887 = vadd.f32 %v400, %v886
        %v888 = vpop.f32.mrf.mxu0
        %889 = vmatprep.mubr.bf16.mxu0 0
        %890 = vmatmul.mubr.bf16.gmra.mxu0 %v642
        %v891 = vpop.f32.mrf.mxu0
        %v892 = vadd.f32 %v400, %v891
        %v893 = vpop.f32.mrf.mxu0
        %v894 = vpop.f32.mrf.mxu0
        %v895 = vadd.f32 %v400, %v894
        %v896 = vpop.f32.mrf.mxu0
        %897 = vmatprep.mubr.bf16.mxu0 0
        %898 = vmatmul.mubr.bf16.gmra.mxu0 %v645
        %v899 = vpop.f32.mrf.mxu0
        %v900 = vadd.f32 %v400, %v899
        %v901 = vpop.f32.mrf.mxu0
        %v902 = vpop.f32.mrf.mxu0
        %v903 = vadd.f32 %v400, %v902
        %v904 = vpop.f32.mrf.mxu0
        %905 = vmatprep.mubr.bf16.mxu0 0
        %906 = vmatmul.mubr.bf16.gmra.mxu0 %v648
        %v907 = vpop.f32.mrf.mxu0
        %v908 = vadd.f32 %v400, %v907
        %v909 = vpop.f32.mrf.mxu0
        %v910 = vpop.f32.mrf.mxu0
        %v911 = vadd.f32 %v400, %v910
        %v912 = vpop.f32.mrf.mxu0
        %913 = vmatprep.mubr.bf16.mxu0 0
        %914 = vmatmul.mubr.bf16.gmra.mxu0 %v651
        %v915 = vpop.f32.mrf.mxu0
        %v916 = vadd.f32 %v400, %v915
        %v917 = vpop.f32.mrf.mxu0
        %v918 = vpop.f32.mrf.mxu0
        %v919 = vadd.f32 %v400, %v918
        %v920 = vpop.f32.mrf.mxu0
        %921 = vmatprep.mubr.bf16.mxu0 0
        %922 = vmatmul.mubr.bf16.gmra.mxu0 %v654
        %v923 = vpop.f32.mrf.mxu0
        %v924 = vadd.f32 %v400, %v923
        %v925 = vpop.f32.mrf.mxu0
        %v926 = vpop.f32.mrf.mxu0
        %v927 = vadd.f32 %v400, %v926
        %v928 = vpop.f32.mrf.mxu0
        %929 = vmatprep.mubr.bf16.mxu0 0
        %930 = vmatmul.mubr.bf16.gmra.mxu0 %v657
        %v931 = vpop.f32.mrf.mxu0
        %v932 = vadd.f32 %v400, %v931
        %v933 = vpop.f32.mrf.mxu0
        %v934 = vpop.f32.mrf.mxu0
        %v935 = vadd.f32 %v400, %v934
        %v936 = vpop.f32.mrf.mxu0
        %937 = vmatprep.mubr.bf16.mxu0 0
        %938 = vmatmul.mubr.bf16.gmra.mxu0 %v660
        %v939 = vpop.f32.mrf.mxu0
        %v940 = vadd.f32 %v400, %v939
        %v941 = vpop.f32.mrf.mxu0
        %v942 = vpop.f32.mrf.mxu0
        %v943 = vadd.f32 %v400, %v942
        %v944 = vpop.f32.mrf.mxu0
        %945 = vmatprep.mubr.bf16.mxu0 0
        %946 = vmatmul.mubr.bf16.gmra.mxu0 %v663
        %v947 = vpop.f32.mrf.mxu0
        %v948 = vadd.f32 %v400, %v947
        %v949 = vpop.f32.mrf.mxu0
        %v950 = vpop.f32.mrf.mxu0
        %v951 = vadd.f32 %v400, %v950
        %v952 = vpop.f32.mrf.mxu0
        %953 = vdwg.mxu0
        %v954 = vmax.f32 %v700, 0.0
        %v955 = vmax.f32 %v703, 0.0
        %v956 = vmax.f32 %v708, 0.0
        %v957 = vmax.f32 %v711, 0.0
        %v958 = vmax.f32 %v716, 0.0
        %v959 = vmax.f32 %v719, 0.0
        %v960 = vmax.f32 %v724, 0.0
        %v961 = vmax.f32 %v727, 0.0
        %v962 = vmax.f32 %v732, 0.0
        %v963 = vmax.f32 %v735, 0.0
        %v964 = vmax.f32 %v740, 0.0
        %v965 = vmax.f32 %v743, 0.0
        %v966 = vmax.f32 %v748, 0.0
        %v967 = vmax.f32 %v751, 0.0
        %v968 = vmax.f32 %v756, 0.0
        %v969 = vmax.f32 %v759, 0.0
        %v970 = vmax.f32 %v764, 0.0
        %v971 = vmax.f32 %v767, 0.0
        %v972 = vmax.f32 %v772, 0.0
        %v973 = vmax.f32 %v775, 0.0
        %v974 = vmax.f32 %v780, 0.0
        %v975 = vmax.f32 %v783, 0.0
        %v976 = vmax.f32 %v788, 0.0
        %v977 = vmax.f32 %v791, 0.0
        %v978 = vmax.f32 %v796, 0.0
        %v979 = vmax.f32 %v799, 0.0
        %v980 = vmax.f32 %v804, 0.0
        %v981 = vmax.f32 %v807, 0.0
        %v982 = vmax.f32 %v812, 0.0
        %v983 = vmax.f32 %v815, 0.0
        %v984 = vmax.f32 %v820, 0.0
        %v985 = vmax.f32 %v823, 0.0
        %v986 = vmax.f32 %v828, 0.0
        %v987 = vmax.f32 %v831, 0.0
        %v988 = vmax.f32 %v836, 0.0
        %v989 = vmax.f32 %v839, 0.0
        %v990 = vmax.f32 %v844, 0.0
        %v991 = vmax.f32 %v847, 0.0
        %v992 = vmax.f32 %v852, 0.0
        %v993 = vmax.f32 %v855, 0.0
        %v994 = vmax.f32 %v860, 0.0
        %v995 = vmax.f32 %v863, 0.0
        %v996 = vmax.f32 %v868, 0.0
        %v997 = vmax.f32 %v871, 0.0
        %v998 = vmax.f32 %v876, 0.0
        %v999 = vmax.f32 %v879, 0.0
        %v1000 = vmax.f32 %v884, 0.0
        %v1001 = vmax.f32 %v887, 0.0
        %v1002 = vmax.f32 %v892, 0.0
        %v1003 = vmax.f32 %v895, 0.0
        %v1004 = vmax.f32 %v900, 0.0
        %v1005 = vmax.f32 %v903, 0.0
        %v1006 = vmax.f32 %v908, 0.0
        %v1007 = vmax.f32 %v911, 0.0
        %v1008 = vmax.f32 %v916, 0.0
        %v1009 = vmax.f32 %v919, 0.0
        %v1010 = vmax.f32 %v924, 0.0
        %v1011 = vmax.f32 %v927, 0.0
        %v1012 = vmax.f32 %v932, 0.0
        %v1013 = vmax.f32 %v935, 0.0
        %v1014 = vmax.f32 %v940, 0.0
        %v1015 = vmax.f32 %v943, 0.0
        %v1016 = vmax.f32 %v948, 0.0
        %v1017 = vmax.f32 %v951, 0.0
        %v1018 = vpack.c.bf16 %v955, %v954
        %v1019 = vpack.c.bf16 %v957, %v956
        %v1020 = vpack.c.bf16 %v959, %v958
        %v1021 = vpack.c.bf16 %v961, %v960
        %v1022 = vpack.c.bf16 %v963, %v962
        %v1023 = vpack.c.bf16 %v965, %v964
        %v1024 = vpack.c.bf16 %v967, %v966
        %v1025 = vpack.c.bf16 %v969, %v968
        %v1026 = vpack.c.bf16 %v971, %v970
        %v1027 = vpack.c.bf16 %v973, %v972
        %v1028 = vpack.c.bf16 %v975, %v974
        %v1029 = vpack.c.bf16 %v977, %v976
        %v1030 = vpack.c.bf16 %v979, %v978
        %v1031 = vpack.c.bf16 %v981, %v980
        %v1032 = vpack.c.bf16 %v983, %v982
        %v1033 = vpack.c.bf16 %v985, %v984
        %v1034 = vpack.c.bf16 %v987, %v986
        %v1035 = vpack.c.bf16 %v989, %v988
        %v1036 = vpack.c.bf16 %v991, %v990
        %v1037 = vpack.c.bf16 %v993, %v992
        %v1038 = vpack.c.bf16 %v995, %v994
        %v1039 = vpack.c.bf16 %v997, %v996
        %v1040 = vpack.c.bf16 %v999, %v998
        %v1041 = vpack.c.bf16 %v1001, %v1000
        %v1042 = vpack.c.bf16 %v1003, %v1002
        %v1043 = vpack.c.bf16 %v1005, %v1004
        %v1044 = vpack.c.bf16 %v1007, %v1006
        %v1045 = vpack.c.bf16 %v1009, %v1008
        %v1046 = vpack.c.bf16 %v1011, %v1010
        %v1047 = vpack.c.bf16 %v1013, %v1012
        %v1048 = vpack.c.bf16 %v1015, %v1014
        %v1049 = vpack.c.bf16 %v1017, %v1016
        %v1054 = vunpack.c.l.b16 %v1018
        %v1055 = vunpack.c.h.b16 %v1018
        %v1056 = vunpack.c.l.b16 %v1019
        %v1057 = vunpack.c.h.b16 %v1019
        %v1058 = vunpack.c.l.b16 %v1020
        %v1059 = vunpack.c.h.b16 %v1020
        %v1060 = vunpack.c.l.b16 %v1021
        %v1061 = vunpack.c.h.b16 %v1021
        %v1062 = vpack.c.b16 %v1054, %v1054
        %v1063 = vpack.c.b16 %v1055, %v1055
        %v1064 = vpack.c.b16 %v1056, %v1056
        %v1065 = vpack.c.b16 %v1057, %v1057
        %v1066 = vpack.c.b16 %v1058, %v1058
        %v1067 = vpack.c.b16 %v1059, %v1059
        %v1068 = vpack.c.b16 %v1060, %v1060
        %v1069 = vpack.c.b16 %v1061, %v1061
        %vm1070 = vsmask.f32 4368
        %vm1071 = vmor %vm289, %vm1070
        %v1073 = vshrl.u32 %v1062, 16
        %v1075 = vrot.slane %v1073, 7
        %v1076 = vshll.u32 %v1062, 16
        %v1078 = vor.u32 %v1075, %v1076
        %v1079 = vrot.slane %v1075, 4
        %v1081 = vshrl.u32 %v1063, 16
        %v1083 = vrot.slane %v1081, 7
        %v1084 = vshll.u32 %v1063, 16
        %v1086 = vor.u32 %v1083, %v1084
        %v1087 = vsel %vm1071, %v1079, %v1086
        %v1088 = vrot.slane %v1083, 4
        %v1090 = vshrl.u32 %v1064, 16
        %v1092 = vrot.slane %v1090, 7
        %v1093 = vshll.u32 %v1064, 16
        %v1095 = vor.u32 %v1092, %v1093
        %v1096 = vsel %vm1071, %v1088, %v1095
        %v1097 = vrot.slane %v1092, 4
        %v1099 = vshrl.u32 %v1065, 16
        %v1101 = vrot.slane %v1099, 7
        %v1102 = vshll.u32 %v1065, 16
        %v1104 = vor.u32 %v1101, %v1102
        %v1105 = vsel %vm1071, %v1097, %v1104
        %v1106 = vrot.slane %v1101, 4
        %v1108 = vshrl.u32 %v1066, 16
        %v1110 = vrot.slane %v1108, 7
        %v1111 = vshll.u32 %v1066, 16
        %v1113 = vor.u32 %v1110, %v1111
        %v1114 = vsel %vm1071, %v1106, %v1113
        %v1115 = vrot.slane %v1110, 4
        %v1117 = vshrl.u32 %v1067, 16
        %v1119 = vrot.slane %v1117, 7
        %v1120 = vshll.u32 %v1067, 16
        %v1122 = vor.u32 %v1119, %v1120
        %v1123 = vsel %vm1071, %v1115, %v1122
        %v1124 = vrot.slane %v1119, 4
        %v1126 = vshrl.u32 %v1068, 16
        %v1128 = vrot.slane %v1126, 7
        %v1129 = vshll.u32 %v1068, 16
        %v1131 = vor.u32 %v1128, %v1129
        %v1132 = vsel %vm1071, %v1124, %v1131
        %v1133 = vrot.slane %v1128, 4
        %v1135 = vshrl.u32 %v1069, 16
        %v1137 = vrot.slane %v1135, 7
        %v1138 = vshll.u32 %v1069, 16
        %v1140 = vor.u32 %v1137, %v1138
        %v1141 = vsel %vm1071, %v1133, %v1140
        %v1142 = vrot.slane %v1137, 4
        %vm1152 = vcmask 257024
        %vm1153 = vsmask.f32 7938
        %vm1154 = vmand %vm1152, %vm1153
        %v1155 = vld [vmem:[#allocation2 + $0x4] sm:$0xf]
        %v1156 = vsel %vm1154, %v1078, %v1155
        %1157 = vst [vmem:[#allocation2 + $0x4] sm:$0xf] %v1156
        %1158 = vst.msk [vmem:[#allocation2 + $0x8] sm:$0xf] %vm286, %v1087
        %1159 = vst.msk [vmem:[#allocation2 + $0xc] sm:$0xf] %vm286, %v1096
        %1160 = vst.msk [vmem:[#allocation2 + $0x10] sm:$0xf] %vm286, %v1105
        %1161 = vst.msk [vmem:[#allocation2 + $0x14] sm:$0xf] %vm286, %v1114
        %1162 = vst.msk [vmem:[#allocation2 + $0x18] sm:$0xf] %vm286, %v1123
        %1163 = vst.msk [vmem:[#allocation2 + $0x1c] sm:$0xf] %vm286, %v1132
        %1164 = vst.msk [vmem:[#allocation2 + $0x20] sm:$0xf] %vm286, %v1141
        %v1165 = vld [vmem:[#allocation2 + $0x24] sm:$0x1]
        %v1166 = vsel %vm290, %v1142, %v1165
        %1167 = vst [vmem:[#allocation2 + $0x24] sm:$0x1] %v1166
        %v1172 = vunpack.c.l.b16 %v1022
        %v1173 = vunpack.c.h.b16 %v1022
        %v1174 = vunpack.c.l.b16 %v1023
        %v1175 = vunpack.c.h.b16 %v1023
        %v1176 = vunpack.c.l.b16 %v1024
        %v1177 = vunpack.c.h.b16 %v1024
        %v1178 = vunpack.c.l.b16 %v1025
        %v1179 = vunpack.c.h.b16 %v1025
        %v1180 = vpack.c.b16 %v1172, %v1172
        %v1181 = vpack.c.b16 %v1173, %v1173
        %v1182 = vpack.c.b16 %v1174, %v1174
        %v1183 = vpack.c.b16 %v1175, %v1175
        %v1184 = vpack.c.b16 %v1176, %v1176
        %v1185 = vpack.c.b16 %v1177, %v1177
        %v1186 = vpack.c.b16 %v1178, %v1178
        %v1187 = vpack.c.b16 %v1179, %v1179
        %v1189 = vshrl.u32 %v1180, 16
        %v1191 = vrot.slane %v1189, 7
        %v1192 = vshll.u32 %v1180, 16
        %v1194 = vor.u32 %v1191, %v1192
        %v1195 = vrot.slane %v1191, 4
        %v1197 = vshrl.u32 %v1181, 16
        %v1199 = vrot.slane %v1197, 7
        %v1200 = vshll.u32 %v1181, 16
        %v1202 = vor.u32 %v1199, %v1200
        %v1203 = vsel %vm1071, %v1195, %v1202
        %v1204 = vrot.slane %v1199, 4
        %v1206 = vshrl.u32 %v1182, 16
        %v1208 = vrot.slane %v1206, 7
        %v1209 = vshll.u32 %v1182, 16
        %v1211 = vor.u32 %v1208, %v1209
        %v1212 = vsel %vm1071, %v1204, %v1211
        %v1213 = vrot.slane %v1208, 4
        %v1215 = vshrl.u32 %v1183, 16
        %v1217 = vrot.slane %v1215, 7
        %v1218 = vshll.u32 %v1183, 16
        %v1220 = vor.u32 %v1217, %v1218
        %v1221 = vsel %vm1071, %v1213, %v1220
        %v1222 = vrot.slane %v1217, 4
        %v1224 = vshrl.u32 %v1184, 16
        %v1226 = vrot.slane %v1224, 7
        %v1227 = vshll.u32 %v1184, 16
        %v1229 = vor.u32 %v1226, %v1227
        %v1230 = vsel %vm1071, %v1222, %v1229
        %v1231 = vrot.slane %v1226, 4
        %v1233 = vshrl.u32 %v1185, 16
        %v1235 = vrot.slane %v1233, 7
        %v1236 = vshll.u32 %v1185, 16
        %v1238 = vor.u32 %v1235, %v1236
        %v1239 = vsel %vm1071, %v1231, %v1238
        %v1240 = vrot.slane %v1235, 4
        %v1242 = vshrl.u32 %v1186, 16
        %v1244 = vrot.slane %v1242, 7
        %v1245 = vshll.u32 %v1186, 16
        %v1247 = vor.u32 %v1244, %v1245
        %v1248 = vsel %vm1071, %v1240, %v1247
        %v1249 = vrot.slane %v1244, 4
        %v1251 = vshrl.u32 %v1187, 16
        %v1253 = vrot.slane %v1251, 7
        %v1254 = vshll.u32 %v1187, 16
        %v1256 = vor.u32 %v1253, %v1254
        %v1257 = vsel %vm1071, %v1249, %v1256
        %v1258 = vrot.slane %v1253, 4
        %v1268 = vld [vmem:[%s294 + $0x4] sm:$0xf]
        %v1269 = vsel %vm1154, %v1194, %v1268
        %1270 = vst [vmem:[%s294 + $0x4] sm:$0xf] %v1269
        %1271 = vst.msk [vmem:[%s294 + $0x8] sm:$0xf] %vm286, %v1203
        %1272 = vst.msk [vmem:[%s294 + $0xc] sm:$0xf] %vm286, %v1212
        %1273 = vst.msk [vmem:[%s294 + $0x10] sm:$0xf] %vm286, %v1221
        %1274 = vst.msk [vmem:[%s294 + $0x14] sm:$0xf] %vm286, %v1230
        %1275 = vst.msk [vmem:[%s294 + $0x18] sm:$0xf] %vm286, %v1239
        %1276 = vst.msk [vmem:[%s294 + $0x1c] sm:$0xf] %vm286, %v1248
        %1277 = vst.msk [vmem:[%s294 + $0x20] sm:$0xf] %vm286, %v1257
        %v1278 = vld [vmem:[%s294 + $0x24] sm:$0x1]
        %v1279 = vsel %vm290, %v1258, %v1278
        %1280 = vst [vmem:[%s294 + $0x24] sm:$0x1] %v1279
        %v1285 = vunpack.c.l.b16 %v1026
        %v1286 = vunpack.c.h.b16 %v1026
        %v1287 = vunpack.c.l.b16 %v1027
        %v1288 = vunpack.c.h.b16 %v1027
        %v1289 = vunpack.c.l.b16 %v1028
        %v1290 = vunpack.c.h.b16 %v1028
        %v1291 = vunpack.c.l.b16 %v1029
        %v1292 = vunpack.c.h.b16 %v1029
        %v1293 = vpack.c.b16 %v1285, %v1285
        %v1294 = vpack.c.b16 %v1286, %v1286
        %v1295 = vpack.c.b16 %v1287, %v1287
        %v1296 = vpack.c.b16 %v1288, %v1288
        %v1297 = vpack.c.b16 %v1289, %v1289
        %v1298 = vpack.c.b16 %v1290, %v1290
        %v1299 = vpack.c.b16 %v1291, %v1291
        %v1300 = vpack.c.b16 %v1292, %v1292
        %v1302 = vshrl.u32 %v1293, 16
        %v1304 = vrot.slane %v1302, 7
        %v1305 = vshll.u32 %v1293, 16
        %v1307 = vor.u32 %v1304, %v1305
        %v1308 = vrot.slane %v1304, 4
        %v1310 = vshrl.u32 %v1294, 16
        %v1312 = vrot.slane %v1310, 7
        %v1313 = vshll.u32 %v1294, 16
        %v1315 = vor.u32 %v1312, %v1313
        %v1316 = vsel %vm1071, %v1308, %v1315
        %v1317 = vrot.slane %v1312, 4
        %v1319 = vshrl.u32 %v1295, 16
        %v1321 = vrot.slane %v1319, 7
        %v1322 = vshll.u32 %v1295, 16
        %v1324 = vor.u32 %v1321, %v1322
        %v1325 = vsel %vm1071, %v1317, %v1324
        %v1326 = vrot.slane %v1321, 4
        %v1328 = vshrl.u32 %v1296, 16
        %v1330 = vrot.slane %v1328, 7
        %v1331 = vshll.u32 %v1296, 16
        %v1333 = vor.u32 %v1330, %v1331
        %v1334 = vsel %vm1071, %v1326, %v1333
        %v1335 = vrot.slane %v1330, 4
        %v1337 = vshrl.u32 %v1297, 16
        %v1339 = vrot.slane %v1337, 7
        %v1340 = vshll.u32 %v1297, 16
        %v1342 = vor.u32 %v1339, %v1340
        %v1343 = vsel %vm1071, %v1335, %v1342
        %v1344 = vrot.slane %v1339, 4
        %v1346 = vshrl.u32 %v1298, 16
        %v1348 = vrot.slane %v1346, 7
        %v1349 = vshll.u32 %v1298, 16
        %v1351 = vor.u32 %v1348, %v1349
        %v1352 = vsel %vm1071, %v1344, %v1351
        %v1353 = vrot.slane %v1348, 4
        %v1355 = vshrl.u32 %v1299, 16
        %v1357 = vrot.slane %v1355, 7
        %v1358 = vshll.u32 %v1299, 16
        %v1360 = vor.u32 %v1357, %v1358
        %v1361 = vsel %vm1071, %v1353, %v1360
        %v1362 = vrot.slane %v1357, 4
        %v1364 = vshrl.u32 %v1300, 16
        %v1366 = vrot.slane %v1364, 7
        %v1367 = vshll.u32 %v1300, 16
        %v1369 = vor.u32 %v1366, %v1367
        %v1370 = vsel %vm1071, %v1362, %v1369
        %v1371 = vrot.slane %v1366, 4
        %v1381 = vld [vmem:[%s299 + $0x4] sm:$0xf]
        %v1382 = vsel %vm1154, %v1307, %v1381
        %1383 = vst [vmem:[%s299 + $0x4] sm:$0xf] %v1382
        %1384 = vst.msk [vmem:[%s299 + $0x8] sm:$0xf] %vm286, %v1316
        %1385 = vst.msk [vmem:[%s299 + $0xc] sm:$0xf] %vm286, %v1325
        %1386 = vst.msk [vmem:[%s299 + $0x10] sm:$0xf] %vm286, %v1334
        %1387 = vst.msk [vmem:[%s299 + $0x14] sm:$0xf] %vm286, %v1343
        %1388 = vst.msk [vmem:[%s299 + $0x18] sm:$0xf] %vm286, %v1352
        %1389 = vst.msk [vmem:[%s299 + $0x1c] sm:$0xf] %vm286, %v1361
        %1390 = vst.msk [vmem:[%s299 + $0x20] sm:$0xf] %vm286, %v1370
        %v1391 = vld [vmem:[%s299 + $0x24] sm:$0x1]
        %v1392 = vsel %vm290, %v1371, %v1391
        %1393 = vst [vmem:[%s299 + $0x24] sm:$0x1] %v1392
        %v1398 = vunpack.c.l.b16 %v1030
        %v1399 = vunpack.c.h.b16 %v1030
        %v1400 = vunpack.c.l.b16 %v1031
        %v1401 = vunpack.c.h.b16 %v1031
        %v1402 = vunpack.c.l.b16 %v1032
        %v1403 = vunpack.c.h.b16 %v1032
        %v1404 = vunpack.c.l.b16 %v1033
        %v1405 = vunpack.c.h.b16 %v1033
        %v1406 = vpack.c.b16 %v1398, %v1398
        %v1407 = vpack.c.b16 %v1399, %v1399
        %v1408 = vpack.c.b16 %v1400, %v1400
        %v1409 = vpack.c.b16 %v1401, %v1401
        %v1410 = vpack.c.b16 %v1402, %v1402
        %v1411 = vpack.c.b16 %v1403, %v1403
        %v1412 = vpack.c.b16 %v1404, %v1404
        %v1413 = vpack.c.b16 %v1405, %v1405
        %v1415 = vshrl.u32 %v1406, 16
        %v1417 = vrot.slane %v1415, 7
        %v1418 = vshll.u32 %v1406, 16
        %v1420 = vor.u32 %v1417, %v1418
        %v1421 = vrot.slane %v1417, 4
        %v1423 = vshrl.u32 %v1407, 16
        %v1425 = vrot.slane %v1423, 7
        %v1426 = vshll.u32 %v1407, 16
        %v1428 = vor.u32 %v1425, %v1426
        %v1429 = vsel %vm1071, %v1421, %v1428
        %v1430 = vrot.slane %v1425, 4
        %v1432 = vshrl.u32 %v1408, 16
        %v1434 = vrot.slane %v1432, 7
        %v1435 = vshll.u32 %v1408, 16
        %v1437 = vor.u32 %v1434, %v1435
        %v1438 = vsel %vm1071, %v1430, %v1437
        %v1439 = vrot.slane %v1434, 4
        %v1441 = vshrl.u32 %v1409, 16
        %v1443 = vrot.slane %v1441, 7
        %v1444 = vshll.u32 %v1409, 16
        %v1446 = vor.u32 %v1443, %v1444
        %v1447 = vsel %vm1071, %v1439, %v1446
        %v1448 = vrot.slane %v1443, 4
        %v1450 = vshrl.u32 %v1410, 16
        %v1452 = vrot.slane %v1450, 7
        %v1453 = vshll.u32 %v1410, 16
        %v1455 = vor.u32 %v1452, %v1453
        %v1456 = vsel %vm1071, %v1448, %v1455
        %v1457 = vrot.slane %v1452, 4
        %v1459 = vshrl.u32 %v1411, 16
        %v1461 = vrot.slane %v1459, 7
        %v1462 = vshll.u32 %v1411, 16
        %v1464 = vor.u32 %v1461, %v1462
        %v1465 = vsel %vm1071, %v1457, %v1464
        %v1466 = vrot.slane %v1461, 4
        %v1468 = vshrl.u32 %v1412, 16
        %v1470 = vrot.slane %v1468, 7
        %v1471 = vshll.u32 %v1412, 16
        %v1473 = vor.u32 %v1470, %v1471
        %v1474 = vsel %vm1071, %v1466, %v1473
        %v1475 = vrot.slane %v1470, 4
        %v1477 = vshrl.u32 %v1413, 16
        %v1479 = vrot.slane %v1477, 7
        %v1480 = vshll.u32 %v1413, 16
        %v1482 = vor.u32 %v1479, %v1480
        %v1483 = vsel %vm1071, %v1475, %v1482
        %v1484 = vrot.slane %v1479, 4
        %v1494 = vld [vmem:[%s304 + $0x4] sm:$0xf]
        %v1495 = vsel %vm1154, %v1420, %v1494
        %1496 = vst [vmem:[%s304 + $0x4] sm:$0xf] %v1495
        %1497 = vst.msk [vmem:[%s304 + $0x8] sm:$0xf] %vm286, %v1429
        %1498 = vst.msk [vmem:[%s304 + $0xc] sm:$0xf] %vm286, %v1438
        %1499 = vst.msk [vmem:[%s304 + $0x10] sm:$0xf] %vm286, %v1447
        %1500 = vst.msk [vmem:[%s304 + $0x14] sm:$0xf] %vm286, %v1456
        %1501 = vst.msk [vmem:[%s304 + $0x18] sm:$0xf] %vm286, %v1465
        %1502 = vst.msk [vmem:[%s304 + $0x1c] sm:$0xf] %vm286, %v1474
        %1503 = vst.msk [vmem:[%s304 + $0x20] sm:$0xf] %vm286, %v1483
        %v1504 = vld [vmem:[%s304 + $0x24] sm:$0x1]
        %v1505 = vsel %vm290, %v1484, %v1504
        %1506 = vst [vmem:[%s304 + $0x24] sm:$0x1] %v1505
        %v1511 = vunpack.c.l.b16 %v1034
        %v1512 = vunpack.c.h.b16 %v1034
        %v1513 = vunpack.c.l.b16 %v1035
        %v1514 = vunpack.c.h.b16 %v1035
        %v1515 = vunpack.c.l.b16 %v1036
        %v1516 = vunpack.c.h.b16 %v1036
        %v1517 = vunpack.c.l.b16 %v1037
        %v1518 = vunpack.c.h.b16 %v1037
        %v1519 = vpack.c.b16 %v1511, %v1511
        %v1520 = vpack.c.b16 %v1512, %v1512
        %v1521 = vpack.c.b16 %v1513, %v1513
        %v1522 = vpack.c.b16 %v1514, %v1514
        %v1523 = vpack.c.b16 %v1515, %v1515
        %v1524 = vpack.c.b16 %v1516, %v1516
        %v1525 = vpack.c.b16 %v1517, %v1517
        %v1526 = vpack.c.b16 %v1518, %v1518
        %v1528 = vshrl.u32 %v1519, 16
        %v1530 = vrot.slane %v1528, 7
        %v1531 = vshll.u32 %v1519, 16
        %v1533 = vor.u32 %v1530, %v1531
        %v1534 = vrot.slane %v1530, 4
        %v1536 = vshrl.u32 %v1520, 16
        %v1538 = vrot.slane %v1536, 7
        %v1539 = vshll.u32 %v1520, 16
        %v1541 = vor.u32 %v1538, %v1539
        %v1542 = vsel %vm1071, %v1534, %v1541
        %v1543 = vrot.slane %v1538, 4
        %v1545 = vshrl.u32 %v1521, 16
        %v1547 = vrot.slane %v1545, 7
        %v1548 = vshll.u32 %v1521, 16
        %v1550 = vor.u32 %v1547, %v1548
        %v1551 = vsel %vm1071, %v1543, %v1550
        %v1552 = vrot.slane %v1547, 4
        %v1554 = vshrl.u32 %v1522, 16
        %v1556 = vrot.slane %v1554, 7
        %v1557 = vshll.u32 %v1522, 16
        %v1559 = vor.u32 %v1556, %v1557
        %v1560 = vsel %vm1071, %v1552, %v1559
        %v1561 = vrot.slane %v1556, 4
        %v1563 = vshrl.u32 %v1523, 16
        %v1565 = vrot.slane %v1563, 7
        %v1566 = vshll.u32 %v1523, 16
        %v1568 = vor.u32 %v1565, %v1566
        %v1569 = vsel %vm1071, %v1561, %v1568
        %v1570 = vrot.slane %v1565, 4
        %v1572 = vshrl.u32 %v1524, 16
        %v1574 = vrot.slane %v1572, 7
        %v1575 = vshll.u32 %v1524, 16
        %v1577 = vor.u32 %v1574, %v1575
        %v1578 = vsel %vm1071, %v1570, %v1577
        %v1579 = vrot.slane %v1574, 4
        %v1581 = vshrl.u32 %v1525, 16
        %v1583 = vrot.slane %v1581, 7
        %v1584 = vshll.u32 %v1525, 16
        %v1586 = vor.u32 %v1583, %v1584
        %v1587 = vsel %vm1071, %v1579, %v1586
        %v1588 = vrot.slane %v1583, 4
        %v1590 = vshrl.u32 %v1526, 16
        %v1592 = vrot.slane %v1590, 7
        %v1593 = vshll.u32 %v1526, 16
        %v1595 = vor.u32 %v1592, %v1593
        %v1596 = vsel %vm1071, %v1588, %v1595
        %v1597 = vrot.slane %v1592, 4
        %v1607 = vld [vmem:[%s309 + $0x4] sm:$0xf]
        %v1608 = vsel %vm1154, %v1533, %v1607
        %1609 = vst [vmem:[%s309 + $0x4] sm:$0xf] %v1608
        %1610 = vst.msk [vmem:[%s309 + $0x8] sm:$0xf] %vm286, %v1542
        %1611 = vst.msk [vmem:[%s309 + $0xc] sm:$0xf] %vm286, %v1551
        %1612 = vst.msk [vmem:[%s309 + $0x10] sm:$0xf] %vm286, %v1560
        %1613 = vst.msk [vmem:[%s309 + $0x14] sm:$0xf] %vm286, %v1569
        %1614 = vst.msk [vmem:[%s309 + $0x18] sm:$0xf] %vm286, %v1578
        %1615 = vst.msk [vmem:[%s309 + $0x1c] sm:$0xf] %vm286, %v1587
        %1616 = vst.msk [vmem:[%s309 + $0x20] sm:$0xf] %vm286, %v1596
        %v1617 = vld [vmem:[%s309 + $0x24] sm:$0x1]
        %v1618 = vsel %vm290, %v1597, %v1617
        %1619 = vst [vmem:[%s309 + $0x24] sm:$0x1] %v1618
        %v1624 = vunpack.c.l.b16 %v1038
        %v1625 = vunpack.c.h.b16 %v1038
        %v1626 = vunpack.c.l.b16 %v1039
        %v1627 = vunpack.c.h.b16 %v1039
        %v1628 = vunpack.c.l.b16 %v1040
        %v1629 = vunpack.c.h.b16 %v1040
        %v1630 = vunpack.c.l.b16 %v1041
        %v1631 = vunpack.c.h.b16 %v1041
        %v1632 = vpack.c.b16 %v1624, %v1624
        %v1633 = vpack.c.b16 %v1625, %v1625
        %v1634 = vpack.c.b16 %v1626, %v1626
        %v1635 = vpack.c.b16 %v1627, %v1627
        %v1636 = vpack.c.b16 %v1628, %v1628
        %v1637 = vpack.c.b16 %v1629, %v1629
        %v1638 = vpack.c.b16 %v1630, %v1630
        %v1639 = vpack.c.b16 %v1631, %v1631
        %v1641 = vshrl.u32 %v1632, 16
        %v1643 = vrot.slane %v1641, 7
        %v1644 = vshll.u32 %v1632, 16
        %v1646 = vor.u32 %v1643, %v1644
        %v1647 = vrot.slane %v1643, 4
        %v1649 = vshrl.u32 %v1633, 16
        %v1651 = vrot.slane %v1649, 7
        %v1652 = vshll.u32 %v1633, 16
        %v1654 = vor.u32 %v1651, %v1652
        %v1655 = vsel %vm1071, %v1647, %v1654
        %v1656 = vrot.slane %v1651, 4
        %v1658 = vshrl.u32 %v1634, 16
        %v1660 = vrot.slane %v1658, 7
        %v1661 = vshll.u32 %v1634, 16
        %v1663 = vor.u32 %v1660, %v1661
        %v1664 = vsel %vm1071, %v1656, %v1663
        %v1665 = vrot.slane %v1660, 4
        %v1667 = vshrl.u32 %v1635, 16
        %v1669 = vrot.slane %v1667, 7
        %v1670 = vshll.u32 %v1635, 16
        %v1672 = vor.u32 %v1669, %v1670
        %v1673 = vsel %vm1071, %v1665, %v1672
        %v1674 = vrot.slane %v1669, 4
        %v1676 = vshrl.u32 %v1636, 16
        %v1678 = vrot.slane %v1676, 7
        %v1679 = vshll.u32 %v1636, 16
        %v1681 = vor.u32 %v1678, %v1679
        %v1682 = vsel %vm1071, %v1674, %v1681
        %v1683 = vrot.slane %v1678, 4
        %v1685 = vshrl.u32 %v1637, 16
        %v1687 = vrot.slane %v1685, 7
        %v1688 = vshll.u32 %v1637, 16
        %v1690 = vor.u32 %v1687, %v1688
        %v1691 = vsel %vm1071, %v1683, %v1690
        %v1692 = vrot.slane %v1687, 4
        %v1694 = vshrl.u32 %v1638, 16
        %v1696 = vrot.slane %v1694, 7
        %v1697 = vshll.u32 %v1638, 16
        %v1699 = vor.u32 %v1696, %v1697
        %v1700 = vsel %vm1071, %v1692, %v1699
        %v1701 = vrot.slane %v1696, 4
        %v1703 = vshrl.u32 %v1639, 16
        %v1705 = vrot.slane %v1703, 7
        %v1706 = vshll.u32 %v1639, 16
        %v1708 = vor.u32 %v1705, %v1706
        %v1709 = vsel %vm1071, %v1701, %v1708
        %v1710 = vrot.slane %v1705, 4
        %v1720 = vld [vmem:[%s314 + $0x4] sm:$0xf]
        %v1721 = vsel %vm1154, %v1646, %v1720
        %1722 = vst [vmem:[%s314 + $0x4] sm:$0xf] %v1721
        %1723 = vst.msk [vmem:[%s314 + $0x8] sm:$0xf] %vm286, %v1655
        %1724 = vst.msk [vmem:[%s314 + $0xc] sm:$0xf] %vm286, %v1664
        %1725 = vst.msk [vmem:[%s314 + $0x10] sm:$0xf] %vm286, %v1673
        %1726 = vst.msk [vmem:[%s314 + $0x14] sm:$0xf] %vm286, %v1682
        %1727 = vst.msk [vmem:[%s314 + $0x18] sm:$0xf] %vm286, %v1691
        %1728 = vst.msk [vmem:[%s314 + $0x1c] sm:$0xf] %vm286, %v1700
        %1729 = vst.msk [vmem:[%s314 + $0x20] sm:$0xf] %vm286, %v1709
        %v1730 = vld [vmem:[%s314 + $0x24] sm:$0x1]
        %v1731 = vsel %vm290, %v1710, %v1730
        %1732 = vst [vmem:[%s314 + $0x24] sm:$0x1] %v1731
        %v1737 = vunpack.c.l.b16 %v1042
        %v1738 = vunpack.c.h.b16 %v1042
        %v1739 = vunpack.c.l.b16 %v1043
        %v1740 = vunpack.c.h.b16 %v1043
        %v1741 = vunpack.c.l.b16 %v1044
        %v1742 = vunpack.c.h.b16 %v1044
        %v1743 = vunpack.c.l.b16 %v1045
        %v1744 = vunpack.c.h.b16 %v1045
        %v1745 = vpack.c.b16 %v1737, %v1737
        %v1746 = vpack.c.b16 %v1738, %v1738
        %v1747 = vpack.c.b16 %v1739, %v1739
        %v1748 = vpack.c.b16 %v1740, %v1740
        %v1749 = vpack.c.b16 %v1741, %v1741
        %v1750 = vpack.c.b16 %v1742, %v1742
        %v1751 = vpack.c.b16 %v1743, %v1743
        %v1752 = vpack.c.b16 %v1744, %v1744
        %v1754 = vshrl.u32 %v1745, 16
        %v1756 = vrot.slane %v1754, 7
        %v1757 = vshll.u32 %v1745, 16
        %v1759 = vor.u32 %v1756, %v1757
        %v1760 = vrot.slane %v1756, 4
        %v1762 = vshrl.u32 %v1746, 16
        %v1764 = vrot.slane %v1762, 7
        %v1765 = vshll.u32 %v1746, 16
        %v1767 = vor.u32 %v1764, %v1765
        %v1768 = vsel %vm1071, %v1760, %v1767
        %v1769 = vrot.slane %v1764, 4
        %v1771 = vshrl.u32 %v1747, 16
        %v1773 = vrot.slane %v1771, 7
        %v1774 = vshll.u32 %v1747, 16
        %v1776 = vor.u32 %v1773, %v1774
        %v1777 = vsel %vm1071, %v1769, %v1776
        %v1778 = vrot.slane %v1773, 4
        %v1780 = vshrl.u32 %v1748, 16
        %v1782 = vrot.slane %v1780, 7
        %v1783 = vshll.u32 %v1748, 16
        %v1785 = vor.u32 %v1782, %v1783
        %v1786 = vsel %vm1071, %v1778, %v1785
        %v1787 = vrot.slane %v1782, 4
        %v1789 = vshrl.u32 %v1749, 16
        %v1791 = vrot.slane %v1789, 7
        %v1792 = vshll.u32 %v1749, 16
        %v1794 = vor.u32 %v1791, %v1792
        %v1795 = vsel %vm1071, %v1787, %v1794
        %v1796 = vrot.slane %v1791, 4
        %v1798 = vshrl.u32 %v1750, 16
        %v1800 = vrot.slane %v1798, 7
        %v1801 = vshll.u32 %v1750, 16
        %v1803 = vor.u32 %v1800, %v1801
        %v1804 = vsel %vm1071, %v1796, %v1803
        %v1805 = vrot.slane %v1800, 4
        %v1807 = vshrl.u32 %v1751, 16
        %v1809 = vrot.slane %v1807, 7
        %v1810 = vshll.u32 %v1751, 16
        %v1812 = vor.u32 %v1809, %v1810
        %v1813 = vsel %vm1071, %v1805, %v1812
        %v1814 = vrot.slane %v1809, 4
        %v1816 = vshrl.u32 %v1752, 16
        %v1818 = vrot.slane %v1816, 7
        %v1819 = vshll.u32 %v1752, 16
        %v1821 = vor.u32 %v1818, %v1819
        %v1822 = vsel %vm1071, %v1814, %v1821
        %v1823 = vrot.slane %v1818, 4
        %v1833 = vld [vmem:[%s319 + $0x4] sm:$0xf]
        %v1834 = vsel %vm1154, %v1759, %v1833
        %1835 = vst [vmem:[%s319 + $0x4] sm:$0xf] %v1834
        %1836 = vst.msk [vmem:[%s319 + $0x8] sm:$0xf] %vm286, %v1768
        %1837 = vst.msk [vmem:[%s319 + $0xc] sm:$0xf] %vm286, %v1777
        %1838 = vst.msk [vmem:[%s319 + $0x10] sm:$0xf] %vm286, %v1786
        %1839 = vst.msk [vmem:[%s319 + $0x14] sm:$0xf] %vm286, %v1795
        %1840 = vst.msk [vmem:[%s319 + $0x18] sm:$0xf] %vm286, %v1804
        %1841 = vst.msk [vmem:[%s319 + $0x1c] sm:$0xf] %vm286, %v1813
        %1842 = vst.msk [vmem:[%s319 + $0x20] sm:$0xf] %vm286, %v1822
        %v1843 = vld [vmem:[%s319 + $0x24] sm:$0x1]
        %v1844 = vsel %vm290, %v1823, %v1843
        %1845 = vst [vmem:[%s319 + $0x24] sm:$0x1] %v1844
        %v1850 = vunpack.c.l.b16 %v1046
        %v1851 = vunpack.c.h.b16 %v1046
        %v1852 = vunpack.c.l.b16 %v1047
        %v1853 = vunpack.c.h.b16 %v1047
        %v1854 = vunpack.c.l.b16 %v1048
        %v1855 = vunpack.c.h.b16 %v1048
        %v1856 = vunpack.c.l.b16 %v1049
        %v1857 = vunpack.c.h.b16 %v1049
        %v1858 = vpack.c.b16 %v1850, %v1850
        %v1859 = vpack.c.b16 %v1851, %v1851
        %v1860 = vpack.c.b16 %v1852, %v1852
        %v1861 = vpack.c.b16 %v1853, %v1853
        %v1862 = vpack.c.b16 %v1854, %v1854
        %v1863 = vpack.c.b16 %v1855, %v1855
        %v1864 = vpack.c.b16 %v1856, %v1856
        %v1865 = vpack.c.b16 %v1857, %v1857
        %v1867 = vshrl.u32 %v1858, 16
        %v1869 = vrot.slane %v1867, 7
        %v1870 = vshll.u32 %v1858, 16
        %v1872 = vor.u32 %v1869, %v1870
        %v1873 = vrot.slane %v1869, 4
        %v1875 = vshrl.u32 %v1859, 16
        %v1877 = vrot.slane %v1875, 7
        %v1878 = vshll.u32 %v1859, 16
        %v1880 = vor.u32 %v1877, %v1878
        %v1881 = vsel %vm1071, %v1873, %v1880
        %v1882 = vrot.slane %v1877, 4
        %v1884 = vshrl.u32 %v1860, 16
        %v1886 = vrot.slane %v1884, 7
        %v1887 = vshll.u32 %v1860, 16
        %v1889 = vor.u32 %v1886, %v1887
        %v1890 = vsel %vm1071, %v1882, %v1889
        %v1891 = vrot.slane %v1886, 4
        %v1893 = vshrl.u32 %v1861, 16
        %v1895 = vrot.slane %v1893, 7
        %v1896 = vshll.u32 %v1861, 16
        %v1898 = vor.u32 %v1895, %v1896
        %v1899 = vsel %vm1071, %v1891, %v1898
        %v1900 = vrot.slane %v1895, 4
        %v1902 = vshrl.u32 %v1862, 16
        %v1904 = vrot.slane %v1902, 7
        %v1905 = vshll.u32 %v1862, 16
        %v1907 = vor.u32 %v1904, %v1905
        %v1908 = vsel %vm1071, %v1900, %v1907
        %v1909 = vrot.slane %v1904, 4
        %v1911 = vshrl.u32 %v1863, 16
        %v1913 = vrot.slane %v1911, 7
        %v1914 = vshll.u32 %v1863, 16
        %v1916 = vor.u32 %v1913, %v1914
        %v1917 = vsel %vm1071, %v1909, %v1916
        %v1918 = vrot.slane %v1913, 4
        %v1920 = vshrl.u32 %v1864, 16
        %v1922 = vrot.slane %v1920, 7
        %v1923 = vshll.u32 %v1864, 16
        %v1925 = vor.u32 %v1922, %v1923
        %v1926 = vsel %vm1071, %v1918, %v1925
        %v1927 = vrot.slane %v1922, 4
        %v1929 = vshrl.u32 %v1865, 16
        %v1931 = vrot.slane %v1929, 7
        %v1932 = vshll.u32 %v1865, 16
        %v1934 = vor.u32 %v1931, %v1932
        %v1935 = vsel %vm1071, %v1927, %v1934
        %v1936 = vrot.slane %v1931, 4
        %v1946 = vld [vmem:[%s324 + $0x4] sm:$0xf]
        %v1947 = vsel %vm1154, %v1872, %v1946
        %1948 = vst [vmem:[%s324 + $0x4] sm:$0xf] %v1947
        %1949 = vst.msk [vmem:[%s324 + $0x8] sm:$0xf] %vm286, %v1881
        %1950 = vst.msk [vmem:[%s324 + $0xc] sm:$0xf] %vm286, %v1890
        %1951 = vst.msk [vmem:[%s324 + $0x10] sm:$0xf] %vm286, %v1899
        %1952 = vst.msk [vmem:[%s324 + $0x14] sm:$0xf] %vm286, %v1908
        %1953 = vst.msk [vmem:[%s324 + $0x18] sm:$0xf] %vm286, %v1917
        %1954 = vst.msk [vmem:[%s324 + $0x1c] sm:$0xf] %vm286, %v1926
        %1955 = vst.msk [vmem:[%s324 + $0x20] sm:$0xf] %vm286, %v1935
        %v1956 = vld [vmem:[%s324 + $0x24] sm:$0x1]
        %v1957 = vsel %vm290, %v1936, %v1956
        %1958 = vst [vmem:[%s324 + $0x24] sm:$0x1] %v1957
        %v1959 = vlaneseq
        %v1960 = vshrl.u32 %v1959, 7
        %v1961 = vadd.s32 %v1960, 8
        %v1962 = vadd.s32 %v1960, 16
        %v1963 = vadd.s32 %v1960, 24
        %v1964 = vadd.s32 %v1960, 32
        %v1965 = vadd.s32 %v1960, 40
        %v1966 = vadd.s32 %v1960, 48
        %v1967 = vadd.s32 %v1960, 56
        %v1968 = vadd.s32 %v1960, 64
        %v1969 = vadd.s32 %v1960, 72
        %v1970 = vadd.s32 %v1960, 80
        %v1971 = vadd.s32 %v1960, 88
        %v1972 = vadd.s32 %v1960, 96
        %v1973 = vadd.s32 %v1960, 104
        %v1974 = vadd.s32 %v1960, 112
        %v1975 = vadd.s32 %v1960, 120
        %vm1976 = vcmp.lt.s32.totalorder %v1960, 0
        %v1977 = vsub.s32 0, %v1960
        %v1978 = vsel %vm1976, %v1977, %v1960
        %v1979 = vshrl.u32 %v1978, 3
        %v1980 = vand.u32 %v1978, 7
        %v1981 = vsub.s32 0, %v1980
        %v1982 = vsel %vm1976, %v1981, %v1980
        %vm1983 = vcmp.lt.s32.totalorder %v1961, 0
        %v1984 = vsub.s32 0, %v1961
        %v1985 = vsel %vm1983, %v1984, %v1961
        %v1986 = vshrl.u32 %v1985, 3
        %v1987 = vand.u32 %v1985, 7
        %v1988 = vsub.s32 0, %v1987
        %v1989 = vsel %vm1983, %v1988, %v1987
        %vm1990 = vcmp.lt.s32.totalorder %v1962, 0
        %v1991 = vsub.s32 0, %v1962
        %v1992 = vsel %vm1990, %v1991, %v1962
        %v1993 = vshrl.u32 %v1992, 3
        %v1994 = vand.u32 %v1992, 7
        %v1995 = vsub.s32 0, %v1994
        %v1996 = vsel %vm1990, %v1995, %v1994
        %vm1997 = vcmp.lt.s32.totalorder %v1963, 0
        %v1998 = vsub.s32 0, %v1963
        %v1999 = vsel %vm1997, %v1998, %v1963
        %v2000 = vshrl.u32 %v1999, 3
        %v2001 = vand.u32 %v1999, 7
        %v2002 = vsub.s32 0, %v2001
        %v2003 = vsel %vm1997, %v2002, %v2001
        %vm2004 = vcmp.lt.s32.totalorder %v1964, 0
        %v2005 = vsub.s32 0, %v1964
        %v2006 = vsel %vm2004, %v2005, %v1964
        %v2007 = vshrl.u32 %v2006, 3
        %v2008 = vand.u32 %v2006, 7
        %v2009 = vsub.s32 0, %v2008
        %v2010 = vsel %vm2004, %v2009, %v2008
        %vm2011 = vcmp.lt.s32.totalorder %v1965, 0
        %v2012 = vsub.s32 0, %v1965
        %v2013 = vsel %vm2011, %v2012, %v1965
        %v2014 = vshrl.u32 %v2013, 3
        %v2015 = vand.u32 %v2013, 7
        %v2016 = vsub.s32 0, %v2015
        %v2017 = vsel %vm2011, %v2016, %v2015
        %vm2018 = vcmp.lt.s32.totalorder %v1966, 0
        %v2019 = vsub.s32 0, %v1966
        %v2020 = vsel %vm2018, %v2019, %v1966
        %v2021 = vshrl.u32 %v2020, 3
        %v2022 = vand.u32 %v2020, 7
        %v2023 = vsub.s32 0, %v2022
        %v2024 = vsel %vm2018, %v2023, %v2022
        %vm2025 = vcmp.lt.s32.totalorder %v1967, 0
        %v2026 = vsub.s32 0, %v1967
        %v2027 = vsel %vm2025, %v2026, %v1967
        %v2028 = vshrl.u32 %v2027, 3
        %v2029 = vand.u32 %v2027, 7
        %v2030 = vsub.s32 0, %v2029
        %v2031 = vsel %vm2025, %v2030, %v2029
        %vm2032 = vcmp.lt.s32.totalorder %v1968, 0
        %v2033 = vsub.s32 0, %v1968
        %v2034 = vsel %vm2032, %v2033, %v1968
        %v2035 = vshrl.u32 %v2034, 3
        %v2036 = vand.u32 %v2034, 7
        %v2037 = vsub.s32 0, %v2036
        %v2038 = vsel %vm2032, %v2037, %v2036
        %vm2039 = vcmp.lt.s32.totalorder %v1969, 0
        %v2040 = vsub.s32 0, %v1969
        %v2041 = vsel %vm2039, %v2040, %v1969
        %v2042 = vshrl.u32 %v2041, 3
        %v2043 = vand.u32 %v2041, 7
        %v2044 = vsub.s32 0, %v2043
        %v2045 = vsel %vm2039, %v2044, %v2043
        %vm2046 = vcmp.lt.s32.totalorder %v1970, 0
        %v2047 = vsub.s32 0, %v1970
        %v2048 = vsel %vm2046, %v2047, %v1970
        %v2049 = vshrl.u32 %v2048, 3
        %v2050 = vand.u32 %v2048, 7
        %v2051 = vsub.s32 0, %v2050
        %v2052 = vsel %vm2046, %v2051, %v2050
        %vm2053 = vcmp.lt.s32.totalorder %v1971, 0
        %v2054 = vsub.s32 0, %v1971
        %v2055 = vsel %vm2053, %v2054, %v1971
        %v2056 = vshrl.u32 %v2055, 3
        %v2057 = vand.u32 %v2055, 7
        %v2058 = vsub.s32 0, %v2057
        %v2059 = vsel %vm2053, %v2058, %v2057
        %vm2060 = vcmp.lt.s32.totalorder %v1972, 0
        %v2061 = vsub.s32 0, %v1972
        %v2062 = vsel %vm2060, %v2061, %v1972
        %v2063 = vshrl.u32 %v2062, 3
        %v2064 = vand.u32 %v2062, 7
        %v2065 = vsub.s32 0, %v2064
        %v2066 = vsel %vm2060, %v2065, %v2064
        %vm2067 = vcmp.lt.s32.totalorder %v1973, 0
        %v2068 = vsub.s32 0, %v1973
        %v2069 = vsel %vm2067, %v2068, %v1973
        %v2070 = vshrl.u32 %v2069, 3
        %v2071 = vand.u32 %v2069, 7
        %v2072 = vsub.s32 0, %v2071
        %v2073 = vsel %vm2067, %v2072, %v2071
        %vm2074 = vcmp.lt.s32.totalorder %v1974, 0
        %v2075 = vsub.s32 0, %v1974
        %v2076 = vsel %vm2074, %v2075, %v1974
        %v2077 = vshrl.u32 %v2076, 3
        %v2078 = vand.u32 %v2076, 7
        %v2079 = vsub.s32 0, %v2078
        %v2080 = vsel %vm2074, %v2079, %v2078
        %vm2081 = vcmp.lt.s32.totalorder %v1975, 0
        %v2082 = vsub.s32 0, %v1975
        %v2083 = vsel %vm2081, %v2082, %v1975
        %v2084 = vshrl.u32 %v2083, 3
        %v2085 = vand.u32 %v2083, 7
        %v2086 = vsub.s32 0, %v2085
        %v2087 = vsel %vm2081, %v2086, %v2085
        %vm2088 = vcmp.ne.s32.totalorder %v1982, 0
        %vm2089 = vcmp.ne.s32.totalorder %v1989, 0
        %vm2090 = vcmp.ne.s32.totalorder %v1996, 0
        %vm2091 = vcmp.ne.s32.totalorder %v2003, 0
        %vm2092 = vcmp.ne.s32.totalorder %v2010, 0
        %vm2093 = vcmp.ne.s32.totalorder %v2017, 0
        %vm2094 = vcmp.ne.s32.totalorder %v2024, 0
        %vm2095 = vcmp.ne.s32.totalorder %v2031, 0
        %vm2096 = vcmp.ne.s32.totalorder %v2038, 0
        %vm2097 = vcmp.ne.s32.totalorder %v2045, 0
        %vm2098 = vcmp.ne.s32.totalorder %v2052, 0
        %vm2099 = vcmp.ne.s32.totalorder %v2059, 0
        %vm2100 = vcmp.ne.s32.totalorder %v2066, 0
        %vm2101 = vcmp.ne.s32.totalorder %v2073, 0
        %vm2102 = vcmp.ne.s32.totalorder %v2080, 0
        %vm2103 = vcmp.ne.s32.totalorder %v2087, 0
        %vm2104 = vcmp.lt.s32.totalorder %v1982, 0
        %vm2105 = vcmp.lt.s32.totalorder %v1989, 0
        %vm2106 = vcmp.lt.s32.totalorder %v1996, 0
        %vm2107 = vcmp.lt.s32.totalorder %v2003, 0
        %vm2108 = vcmp.lt.s32.totalorder %v2010, 0
        %vm2109 = vcmp.lt.s32.totalorder %v2017, 0
        %vm2110 = vcmp.lt.s32.totalorder %v2024, 0
        %vm2111 = vcmp.lt.s32.totalorder %v2031, 0
        %vm2112 = vcmp.lt.s32.totalorder %v2038, 0
        %vm2113 = vcmp.lt.s32.totalorder %v2045, 0
        %vm2114 = vcmp.lt.s32.totalorder %v2052, 0
        %vm2115 = vcmp.lt.s32.totalorder %v2059, 0
        %vm2116 = vcmp.lt.s32.totalorder %v2066, 0
        %vm2117 = vcmp.lt.s32.totalorder %v2073, 0
        %vm2118 = vcmp.lt.s32.totalorder %v2080, 0
        %vm2119 = vcmp.lt.s32.totalorder %v2087, 0
        %vm2120 = vmand %vm2104, %vm2088
        %vm2121 = vmand %vm2105, %vm2089
        %vm2122 = vmand %vm2106, %vm2090
        %vm2123 = vmand %vm2107, %vm2091
        %vm2124 = vmand %vm2108, %vm2092
        %vm2125 = vmand %vm2109, %vm2093
        %vm2126 = vmand %vm2110, %vm2094
        %vm2127 = vmand %vm2111, %vm2095
        %vm2128 = vmand %vm2112, %vm2096
        %vm2129 = vmand %vm2113, %vm2097
        %vm2130 = vmand %vm2114, %vm2098
        %vm2131 = vmand %vm2115, %vm2099
        %vm2132 = vmand %vm2116, %vm2100
        %vm2133 = vmand %vm2117, %vm2101
        %vm2134 = vmand %vm2118, %vm2102
        %vm2135 = vmand %vm2119, %vm2103
        %v2136 = vadd.s32 %v1982, 8
        %v2137 = vadd.s32 %v1989, 8
        %v2138 = vadd.s32 %v1996, 8
        %v2139 = vadd.s32 %v2003, 8
        %v2140 = vadd.s32 %v2010, 8
        %v2141 = vadd.s32 %v2017, 8
        %v2142 = vadd.s32 %v2024, 8
        %v2143 = vadd.s32 %v2031, 8
        %v2144 = vadd.s32 %v2038, 8
        %v2145 = vadd.s32 %v2045, 8
        %v2146 = vadd.s32 %v2052, 8
        %v2147 = vadd.s32 %v2059, 8
        %v2148 = vadd.s32 %v2066, 8
        %v2149 = vadd.s32 %v2073, 8
        %v2150 = vadd.s32 %v2080, 8
        %v2151 = vadd.s32 %v2087, 8
        %v2152 = vsel %vm2120, %v2136, %v1982
        %v2153 = vsel %vm2121, %v2137, %v1989
        %v2154 = vsel %vm2122, %v2138, %v1996
        %v2155 = vsel %vm2123, %v2139, %v2003
        %v2156 = vsel %vm2124, %v2140, %v2010
        %v2157 = vsel %vm2125, %v2141, %v2017
        %v2158 = vsel %vm2126, %v2142, %v2024
        %v2159 = vsel %vm2127, %v2143, %v2031
        %v2160 = vsel %vm2128, %v2144, %v2038
        %v2161 = vsel %vm2129, %v2145, %v2045
        %v2162 = vsel %vm2130, %v2146, %v2052
        %v2163 = vsel %vm2131, %v2147, %v2059
        %v2164 = vsel %vm2132, %v2148, %v2066
        %v2165 = vsel %vm2133, %v2149, %v2073
        %v2166 = vsel %vm2134, %v2150, %v2080
        %v2167 = vsel %vm2135, %v2151, %v2087
        %vm2168 = vcmp.eq.s32.totalorder %v2152, 0
        %vm2169 = vcmp.eq.s32.totalorder %v2153, 0
        %vm2170 = vcmp.eq.s32.totalorder %v2154, 0
        %vm2171 = vcmp.eq.s32.totalorder %v2155, 0
        %vm2172 = vcmp.eq.s32.totalorder %v2156, 0
        %vm2173 = vcmp.eq.s32.totalorder %v2157, 0
        %vm2174 = vcmp.eq.s32.totalorder %v2158, 0
        %vm2175 = vcmp.eq.s32.totalorder %v2159, 0
        %vm2176 = vcmp.eq.s32.totalorder %v2160, 0
        %vm2177 = vcmp.eq.s32.totalorder %v2161, 0
        %vm2178 = vcmp.eq.s32.totalorder %v2162, 0
        %vm2179 = vcmp.eq.s32.totalorder %v2163, 0
        %vm2180 = vcmp.eq.s32.totalorder %v2164, 0
        %vm2181 = vcmp.eq.s32.totalorder %v2165, 0
        %vm2182 = vcmp.eq.s32.totalorder %v2166, 0
        %vm2183 = vcmp.eq.s32.totalorder %v2167, 0
        %v2184 = vld [vmem:[%s304] sm:$0xf]
        %v2185 = vld [vmem:[%s304 + $0x4] sm:$0xf]
        %v2186 = vld [vmem:[%s304 + $0x8] sm:$0xf]
        %v2187 = vld [vmem:[%s304 + $0xc] sm:$0xf]
        %v2188 = vld [vmem:[%s304 + $0x10] sm:$0xf]
        %v2189 = vld [vmem:[%s304 + $0x14] sm:$0xf]
        %v2190 = vld [vmem:[%s304 + $0x18] sm:$0xf]
        %v2191 = vld [vmem:[%s304 + $0x1c] sm:$0xf]
        %v2192 = vld [vmem:[%s324] sm:$0xf]
        %v2193 = vld [vmem:[%s324 + $0x4] sm:$0xf]
        %v2194 = vld [vmem:[%s324 + $0x8] sm:$0xf]
        %v2195 = vld [vmem:[%s324 + $0xc] sm:$0xf]
        %v2196 = vld [vmem:[%s324 + $0x10] sm:$0xf]
        %v2197 = vld [vmem:[%s324 + $0x14] sm:$0xf]
        %v2198 = vld [vmem:[%s324 + $0x18] sm:$0xf]
        %v2199 = vld [vmem:[%s324 + $0x1c] sm:$0xf]
        %v2208 = vunpack.c.l.b16 %v2184
        %v2209 = vunpack.c.l.b16 %v2185
        %v2210 = vunpack.c.l.b16 %v2186
        %v2211 = vunpack.c.l.b16 %v2187
        %v2212 = vunpack.c.l.b16 %v2188
        %v2213 = vunpack.c.l.b16 %v2189
        %v2214 = vunpack.c.l.b16 %v2190
        %v2215 = vunpack.c.l.b16 %v2191
        %v2216 = vpack.c.b16 %v2209, %v2208
        %v2217 = vpack.c.b16 %v2211, %v2210
        %v2218 = vpack.c.b16 %v2213, %v2212
        %v2219 = vpack.c.b16 %v2215, %v2214
        %v2232 = vunpack.c.l.b16 %v2192
        %v2233 = vunpack.c.l.b16 %v2193
        %v2234 = vunpack.c.l.b16 %v2194
        %v2235 = vunpack.c.l.b16 %v2195
        %v2236 = vunpack.c.l.b16 %v2196
        %v2237 = vunpack.c.l.b16 %v2197
        %v2238 = vunpack.c.l.b16 %v2198
        %v2239 = vunpack.c.l.b16 %v2199
        %v2240 = vpack.c.b16 %v2233, %v2232
        %v2241 = vpack.c.b16 %v2235, %v2234
        %v2242 = vpack.c.b16 %v2237, %v2236
        %v2243 = vpack.c.b16 %v2239, %v2238
        %v2248 = vsel %vm2168, 1, 0
        %v2249 = vsel %vm2169, 1, 0
        %v2250 = vsel %vm2170, 1, 0
        %v2251 = vsel %vm2171, 1, 0
        %v2252 = vsel %vm2172, 1, 0
        %v2253 = vsel %vm2173, 1, 0
        %v2254 = vsel %vm2174, 1, 0
        %v2255 = vsel %vm2175, 1, 0
        %v2256 = vsel %vm2176, 1, 0
        %v2257 = vsel %vm2177, 1, 0
        %v2258 = vsel %vm2178, 1, 0
        %v2259 = vsel %vm2179, 1, 0
        %v2260 = vsel %vm2180, 1, 0
        %v2261 = vsel %vm2181, 1, 0
        %v2262 = vsel %vm2182, 1, 0
        %v2263 = vsel %vm2183, 1, 0
        %vm2264 = vcmp.eq.s32.totalorder %v2248, 1
        %vm2265 = vcmp.eq.s32.totalorder %v2249, 1
        %vm2266 = vcmp.eq.s32.totalorder %v2250, 1
        %vm2267 = vcmp.eq.s32.totalorder %v2251, 1
        %vm2268 = vcmp.eq.s32.totalorder %v2252, 1
        %vm2269 = vcmp.eq.s32.totalorder %v2253, 1
        %vm2270 = vcmp.eq.s32.totalorder %v2254, 1
        %vm2271 = vcmp.eq.s32.totalorder %v2255, 1
        %vm2272 = vcmp.eq.s32.totalorder %v2256, 1
        %vm2273 = vcmp.eq.s32.totalorder %v2257, 1
        %vm2274 = vcmp.eq.s32.totalorder %v2258, 1
        %vm2275 = vcmp.eq.s32.totalorder %v2259, 1
        %vm2276 = vcmp.eq.s32.totalorder %v2260, 1
        %vm2277 = vcmp.eq.s32.totalorder %v2261, 1
        %vm2278 = vcmp.eq.s32.totalorder %v2262, 1
        %vm2279 = vcmp.eq.s32.totalorder %v2263, 1
        %vm2280 = vmpackc.low %vm2264, %vm2264
        %vm2281 = vmpackc.low %vm2265, %vm2265
        %vm2282 = vmpackc.low %vm2266, %vm2266
        %vm2283 = vmpackc.low %vm2267, %vm2267
        %vm2284 = vmpackc.low %vm2268, %vm2268
        %vm2285 = vmpackc.low %vm2269, %vm2269
        %vm2286 = vmpackc.low %vm2270, %vm2270
        %vm2287 = vmpackc.low %vm2271, %vm2271
        %vm2288 = vmpackc.low %vm2272, %vm2272
        %vm2289 = vmpackc.low %vm2273, %vm2273
        %vm2290 = vmpackc.low %vm2274, %vm2274
        %vm2291 = vmpackc.low %vm2275, %vm2275
        %vm2292 = vmpackc.low %vm2276, %vm2276
        %vm2293 = vmpackc.low %vm2277, %vm2277
        %vm2294 = vmpackc.low %vm2278, %vm2278
        %vm2295 = vmpackc.low %vm2279, %vm2279
        %v2296 = vsel %vm2280, 65537, 0
        %v2297 = vsel %vm2281, 65537, 0
        %v2298 = vsel %vm2282, 65537, 0
        %v2299 = vsel %vm2283, 65537, 0
        %v2300 = vsel %vm2284, 65537, 0
        %v2301 = vsel %vm2285, 65537, 0
        %v2302 = vsel %vm2286, 65537, 0
        %v2303 = vsel %vm2287, 65537, 0
        %v2304 = vsel %vm2288, 65537, 0
        %v2305 = vsel %vm2289, 65537, 0
        %v2306 = vsel %vm2290, 65537, 0
        %v2307 = vsel %vm2291, 65537, 0
        %v2308 = vsel %vm2292, 65537, 0
        %v2309 = vsel %vm2293, 65537, 0
        %v2310 = vsel %vm2294, 65537, 0
        %v2311 = vsel %vm2295, 65537, 0
        %v2312 = vunpack.c.l.b16 %v2296
        %v2313 = vunpack.c.l.b16 %v2297
        %v2314 = vunpack.c.l.b16 %v2298
        %v2315 = vunpack.c.l.b16 %v2299
        %v2316 = vunpack.c.l.b16 %v2300
        %v2317 = vunpack.c.l.b16 %v2301
        %v2318 = vunpack.c.l.b16 %v2302
        %v2319 = vunpack.c.l.b16 %v2303
        %v2320 = vunpack.c.l.b16 %v2304
        %v2321 = vunpack.c.l.b16 %v2305
        %v2322 = vunpack.c.l.b16 %v2306
        %v2323 = vunpack.c.l.b16 %v2307
        %v2324 = vunpack.c.l.b16 %v2308
        %v2325 = vunpack.c.l.b16 %v2309
        %v2326 = vunpack.c.l.b16 %v2310
        %v2327 = vunpack.c.l.b16 %v2311
        %v2328 = vpack.c.b16 %v2313, %v2312
        %v2329 = vpack.c.b16 %v2315, %v2314
        %v2330 = vpack.c.b16 %v2317, %v2316
        %v2331 = vpack.c.b16 %v2319, %v2318
        %v2332 = vpack.c.b16 %v2321, %v2320
        %v2333 = vpack.c.b16 %v2323, %v2322
        %v2334 = vpack.c.b16 %v2325, %v2324
        %v2335 = vpack.c.b16 %v2327, %v2326
        %vm2336 = vcmp.ne.s16.totalorder %v2328, 0
        %vm2337 = vcmp.ne.s16.totalorder %v2329, 0
        %vm2338 = vcmp.ne.s16.totalorder %v2330, 0
        %vm2339 = vcmp.ne.s16.totalorder %v2331, 0
        %vm2340 = vcmp.ne.s16.totalorder %v2332, 0
        %vm2341 = vcmp.ne.s16.totalorder %v2333, 0
        %vm2342 = vcmp.ne.s16.totalorder %v2334, 0
        %vm2343 = vcmp.ne.s16.totalorder %v2335, 0
        %v2344 = vsel %vm2336, 0, %v2216
        %v2345 = vsel %vm2337, 0, %v2217
        %v2346 = vsel %vm2338, 0, %v2218
        %v2347 = vsel %vm2339, 0, %v2219
        %v2348 = vsel %vm2340, 0, %v2240
        %v2349 = vsel %vm2341, 0, %v2241
        %v2350 = vsel %vm2342, 0, %v2242
        %v2351 = vsel %vm2343, 0, %v2243
        %v2352 = vld [vmem:[%s299] sm:$0xf]
        %v2353 = vld [vmem:[%s299 + $0x4] sm:$0xf]
        %v2354 = vld [vmem:[%s299 + $0x8] sm:$0xf]
        %v2355 = vld [vmem:[%s299 + $0xc] sm:$0xf]
        %v2356 = vld [vmem:[%s299 + $0x10] sm:$0xf]
        %v2357 = vld [vmem:[%s299 + $0x14] sm:$0xf]
        %v2358 = vld [vmem:[%s299 + $0x18] sm:$0xf]
        %v2359 = vld [vmem:[%s299 + $0x1c] sm:$0xf]
        %v2360 = vld [vmem:[%s299 + $0x20] sm:$0x1]
        %v2361 = vld [vmem:[%s319] sm:$0xf]
        %v2362 = vld [vmem:[%s319 + $0x4] sm:$0xf]
        %v2363 = vld [vmem:[%s319 + $0x8] sm:$0xf]
        %v2364 = vld [vmem:[%s319 + $0xc] sm:$0xf]
        %v2365 = vld [vmem:[%s319 + $0x10] sm:$0xf]
        %v2366 = vld [vmem:[%s319 + $0x14] sm:$0xf]
        %v2367 = vld [vmem:[%s319 + $0x18] sm:$0xf]
        %v2368 = vld [vmem:[%s319 + $0x1c] sm:$0xf]
        %v2369 = vld [vmem:[%s319 + $0x20] sm:$0x1]
        %v2379 = vunpack.c.l.b16 %v2352
        %v2380 = vunpack.c.l.b16 %v2353
        %v2381 = vunpack.c.l.b16 %v2354
        %v2382 = vunpack.c.l.b16 %v2355
        %v2383 = vunpack.c.l.b16 %v2356
        %v2384 = vunpack.c.l.b16 %v2357
        %v2385 = vunpack.c.l.b16 %v2358
        %v2386 = vunpack.c.l.b16 %v2359
        %v2387 = vunpack.c.l.b16 %v2360
        %v2388 = vpack.c.b16 %v2380, %v2379
        %v2389 = vpack.c.b16 %v2382, %v2381
        %v2390 = vpack.c.b16 %v2384, %v2383
        %v2391 = vpack.c.b16 %v2386, %v2385
        %v2392 = vpack.c.b16 %v2387, %v2387
        %vm2393 = vsmask.f32 7424
        %v2395 = vshrl.u32 %v2388, 16
        %v2397 = vshll.u32 %v2388, 16
        %v2399 = vrot.slane %v2397, 1
        %v2400 = vor.u32 %v2395, %v2399
        %v2402 = vshll.u32 %v2389, 16
        %v2404 = vrot.slane %v2402, 1
        %v2405 = vsel %vm2393, %v2400, %v2404
        %v2406 = vshrl.u32 %v2389, 16
        %v2408 = vor.u32 %v2406, %v2404
        %v2410 = vshll.u32 %v2390, 16
        %v2412 = vrot.slane %v2410, 1
        %v2413 = vsel %vm2393, %v2408, %v2412
        %v2414 = vshrl.u32 %v2390, 16
        %v2416 = vor.u32 %v2414, %v2412
        %v2418 = vshll.u32 %v2391, 16
        %v2420 = vrot.slane %v2418, 1
        %v2421 = vsel %vm2393, %v2416, %v2420
        %v2422 = vshrl.u32 %v2391, 16
        %v2424 = vor.u32 %v2422, %v2420
        %v2426 = vshll.u32 %v2392, 16
        %v2428 = vrot.slane %v2426, 1
        %v2429 = vsel %vm2393, %v2424, %v2428
        %v2439 = vunpack.c.l.b16 %v2361
        %v2440 = vunpack.c.l.b16 %v2362
        %v2441 = vunpack.c.l.b16 %v2363
        %v2442 = vunpack.c.l.b16 %v2364
        %v2443 = vunpack.c.l.b16 %v2365
        %v2444 = vunpack.c.l.b16 %v2366
        %v2445 = vunpack.c.l.b16 %v2367
        %v2446 = vunpack.c.l.b16 %v2368
        %v2447 = vunpack.c.l.b16 %v2369
        %v2448 = vpack.c.b16 %v2440, %v2439
        %v2449 = vpack.c.b16 %v2442, %v2441
        %v2450 = vpack.c.b16 %v2444, %v2443
        %v2451 = vpack.c.b16 %v2446, %v2445
        %v2452 = vpack.c.b16 %v2447, %v2447
        %v2454 = vshrl.u32 %v2448, 16
        %v2456 = vshll.u32 %v2448, 16
        %v2458 = vrot.slane %v2456, 1
        %v2459 = vor.u32 %v2454, %v2458
        %v2461 = vshll.u32 %v2449, 16
        %v2463 = vrot.slane %v2461, 1
        %v2464 = vsel %vm2393, %v2459, %v2463
        %v2465 = vshrl.u32 %v2449, 16
        %v2467 = vor.u32 %v2465, %v2463
        %v2469 = vshll.u32 %v2450, 16
        %v2471 = vrot.slane %v2469, 1
        %v2472 = vsel %vm2393, %v2467, %v2471
        %v2473 = vshrl.u32 %v2450, 16
        %v2475 = vor.u32 %v2473, %v2471
        %v2477 = vshll.u32 %v2451, 16
        %v2479 = vrot.slane %v2477, 1
        %v2480 = vsel %vm2393, %v2475, %v2479
        %v2481 = vshrl.u32 %v2451, 16
        %v2483 = vor.u32 %v2481, %v2479
        %v2485 = vshll.u32 %v2452, 16
        %v2487 = vrot.slane %v2485, 1
        %v2488 = vsel %vm2393, %v2483, %v2487
        %v2489 = vld [vmem:[%s304 + $0x20] sm:$0x1]
        %v2490 = vld [vmem:[%s324 + $0x20] sm:$0x1]
        %v2492 = vunpack.c.l.b16 %v2489
        %v2493 = vpack.c.b16 %v2492, %v2492
        %v2495 = vshrl.u32 %v2216, 16
        %v2497 = vshll.u32 %v2216, 16
        %v2499 = vrot.slane %v2497, 1
        %v2500 = vor.u32 %v2495, %v2499
        %v2502 = vshll.u32 %v2217, 16
        %v2504 = vrot.slane %v2502, 1
        %v2505 = vsel %vm2393, %v2500, %v2504
        %v2506 = vshrl.u32 %v2217, 16
        %v2508 = vor.u32 %v2506, %v2504
        %v2510 = vshll.u32 %v2218, 16
        %v2512 = vrot.slane %v2510, 1
        %v2513 = vsel %vm2393, %v2508, %v2512
        %v2514 = vshrl.u32 %v2218, 16
        %v2516 = vor.u32 %v2514, %v2512
        %v2518 = vshll.u32 %v2219, 16
        %v2520 = vrot.slane %v2518, 1
        %v2521 = vsel %vm2393, %v2516, %v2520
        %v2522 = vshrl.u32 %v2219, 16
        %v2524 = vor.u32 %v2522, %v2520
        %v2526 = vshll.u32 %v2493, 16
        %v2528 = vrot.slane %v2526, 1
        %v2529 = vsel %vm2393, %v2524, %v2528
        %v2531 = vunpack.c.l.b16 %v2490
        %v2532 = vpack.c.b16 %v2531, %v2531
        %v2534 = vshrl.u32 %v2240, 16
        %v2536 = vshll.u32 %v2240, 16
        %v2538 = vrot.slane %v2536, 1
        %v2539 = vor.u32 %v2534, %v2538
        %v2541 = vshll.u32 %v2241, 16
        %v2543 = vrot.slane %v2541, 1
        %v2544 = vsel %vm2393, %v2539, %v2543
        %v2545 = vshrl.u32 %v2241, 16
        %v2547 = vor.u32 %v2545, %v2543
        %v2549 = vshll.u32 %v2242, 16
        %v2551 = vrot.slane %v2549, 1
        %v2552 = vsel %vm2393, %v2547, %v2551
        %v2553 = vshrl.u32 %v2242, 16
        %v2555 = vor.u32 %v2553, %v2551
        %v2557 = vshll.u32 %v2243, 16
        %v2559 = vrot.slane %v2557, 1
        %v2560 = vsel %vm2393, %v2555, %v2559
        %v2561 = vshrl.u32 %v2243, 16
        %v2563 = vor.u32 %v2561, %v2559
        %v2565 = vshll.u32 %v2532, 16
        %v2567 = vrot.slane %v2565, 1
        %v2568 = vsel %vm2393, %v2563, %v2567
        %v2569 = vld [vmem:[%s294 + $0x4] sm:$0xf]
        %v2570 = vld [vmem:[%s294 + $0x8] sm:$0xf]
        %v2571 = vld [vmem:[%s294 + $0xc] sm:$0xf]
        %v2572 = vld [vmem:[%s294 + $0x10] sm:$0xf]
        %v2573 = vld [vmem:[%s294 + $0x14] sm:$0xf]
        %v2574 = vld [vmem:[%s294 + $0x18] sm:$0xf]
        %v2575 = vld [vmem:[%s294 + $0x1c] sm:$0xf]
        %v2576 = vld [vmem:[%s294 + $0x20] sm:$0xf]
        %v2577 = vld [vmem:[%s314 + $0x4] sm:$0xf]
        %v2578 = vld [vmem:[%s314 + $0x8] sm:$0xf]
        %v2579 = vld [vmem:[%s314 + $0xc] sm:$0xf]
        %v2580 = vld [vmem:[%s314 + $0x10] sm:$0xf]
        %v2581 = vld [vmem:[%s314 + $0x14] sm:$0xf]
        %v2582 = vld [vmem:[%s314 + $0x18] sm:$0xf]
        %v2583 = vld [vmem:[%s314 + $0x1c] sm:$0xf]
        %v2584 = vld [vmem:[%s314 + $0x20] sm:$0xf]
        %v2593 = vunpack.c.l.b16 %v2569
        %v2594 = vunpack.c.l.b16 %v2570
        %v2595 = vunpack.c.l.b16 %v2571
        %v2596 = vunpack.c.l.b16 %v2572
        %v2597 = vunpack.c.l.b16 %v2573
        %v2598 = vunpack.c.l.b16 %v2574
        %v2599 = vunpack.c.l.b16 %v2575
        %v2600 = vunpack.c.l.b16 %v2576
        %v2601 = vpack.c.b16 %v2594, %v2593
        %v2602 = vpack.c.b16 %v2596, %v2595
        %v2603 = vpack.c.b16 %v2598, %v2597
        %v2604 = vpack.c.b16 %v2600, %v2599
        %v2617 = vunpack.c.l.b16 %v2577
        %v2618 = vunpack.c.l.b16 %v2578
        %v2619 = vunpack.c.l.b16 %v2579
        %v2620 = vunpack.c.l.b16 %v2580
        %v2621 = vunpack.c.l.b16 %v2581
        %v2622 = vunpack.c.l.b16 %v2582
        %v2623 = vunpack.c.l.b16 %v2583
        %v2624 = vunpack.c.l.b16 %v2584
        %v2625 = vpack.c.b16 %v2618, %v2617
        %v2626 = vpack.c.b16 %v2620, %v2619
        %v2627 = vpack.c.b16 %v2622, %v2621
        %v2628 = vpack.c.b16 %v2624, %v2623
        %v2633 = vsel %vm2336, 0, %v2601
        %v2634 = vsel %vm2337, 0, %v2602
        %v2635 = vsel %vm2338, 0, %v2603
        %v2636 = vsel %vm2339, 0, %v2604
        %v2637 = vsel %vm2340, 0, %v2625
        %v2638 = vsel %vm2341, 0, %v2626
        %v2639 = vsel %vm2342, 0, %v2627
        %v2640 = vsel %vm2343, 0, %v2628
        %v2641 = vld [vmem:[#allocation2 + $0x4] sm:$0xf]
        %v2642 = vld [vmem:[#allocation2 + $0x8] sm:$0xf]
        %v2643 = vld [vmem:[#allocation2 + $0xc] sm:$0xf]
        %v2644 = vld [vmem:[#allocation2 + $0x10] sm:$0xf]
        %v2645 = vld [vmem:[#allocation2 + $0x14] sm:$0xf]
        %v2646 = vld [vmem:[#allocation2 + $0x18] sm:$0xf]
        %v2647 = vld [vmem:[#allocation2 + $0x1c] sm:$0xf]
        %v2648 = vld [vmem:[#allocation2 + $0x20] sm:$0xf]
        %v2649 = vld [vmem:[#allocation2 + $0x24] sm:$0x1]
        %v2650 = vld [vmem:[%s309 + $0x4] sm:$0xf]
        %v2651 = vld [vmem:[%s309 + $0x8] sm:$0xf]
        %v2652 = vld [vmem:[%s309 + $0xc] sm:$0xf]
        %v2653 = vld [vmem:[%s309 + $0x10] sm:$0xf]
        %v2654 = vld [vmem:[%s309 + $0x14] sm:$0xf]
        %v2655 = vld [vmem:[%s309 + $0x18] sm:$0xf]
        %v2656 = vld [vmem:[%s309 + $0x1c] sm:$0xf]
        %v2657 = vld [vmem:[%s309 + $0x20] sm:$0xf]
        %v2658 = vld [vmem:[%s309 + $0x24] sm:$0x1]
        %v2668 = vunpack.c.l.b16 %v2641
        %v2669 = vunpack.c.l.b16 %v2642
        %v2670 = vunpack.c.l.b16 %v2643
        %v2671 = vunpack.c.l.b16 %v2644
        %v2672 = vunpack.c.l.b16 %v2645
        %v2673 = vunpack.c.l.b16 %v2646
        %v2674 = vunpack.c.l.b16 %v2647
        %v2675 = vunpack.c.l.b16 %v2648
        %v2676 = vunpack.c.l.b16 %v2649
        %v2677 = vpack.c.b16 %v2669, %v2668
        %v2678 = vpack.c.b16 %v2671, %v2670
        %v2679 = vpack.c.b16 %v2673, %v2672
        %v2680 = vpack.c.b16 %v2675, %v2674
        %v2681 = vpack.c.b16 %v2676, %v2676
        %v2683 = vshrl.u32 %v2677, 16
        %v2685 = vshll.u32 %v2677, 16
        %v2687 = vrot.slane %v2685, 1
        %v2688 = vor.u32 %v2683, %v2687
        %v2690 = vshll.u32 %v2678, 16
        %v2692 = vrot.slane %v2690, 1
        %v2693 = vsel %vm2393, %v2688, %v2692
        %v2694 = vshrl.u32 %v2678, 16
        %v2696 = vor.u32 %v2694, %v2692
        %v2698 = vshll.u32 %v2679, 16
        %v2700 = vrot.slane %v2698, 1
        %v2701 = vsel %vm2393, %v2696, %v2700
        %v2702 = vshrl.u32 %v2679, 16
        %v2704 = vor.u32 %v2702, %v2700
        %v2706 = vshll.u32 %v2680, 16
        %v2708 = vrot.slane %v2706, 1
        %v2709 = vsel %vm2393, %v2704, %v2708
        %v2710 = vshrl.u32 %v2680, 16
        %v2712 = vor.u32 %v2710, %v2708
        %v2714 = vshll.u32 %v2681, 16
        %v2716 = vrot.slane %v2714, 1
        %v2717 = vsel %vm2393, %v2712, %v2716
        %v2727 = vunpack.c.l.b16 %v2650
        %v2728 = vunpack.c.l.b16 %v2651
        %v2729 = vunpack.c.l.b16 %v2652
        %v2730 = vunpack.c.l.b16 %v2653
        %v2731 = vunpack.c.l.b16 %v2654
        %v2732 = vunpack.c.l.b16 %v2655
        %v2733 = vunpack.c.l.b16 %v2656
        %v2734 = vunpack.c.l.b16 %v2657
        %v2735 = vunpack.c.l.b16 %v2658
        %v2736 = vpack.c.b16 %v2728, %v2727
        %v2737 = vpack.c.b16 %v2730, %v2729
        %v2738 = vpack.c.b16 %v2732, %v2731
        %v2739 = vpack.c.b16 %v2734, %v2733
        %v2740 = vpack.c.b16 %v2735, %v2735
        %v2742 = vshrl.u32 %v2736, 16
        %v2744 = vshll.u32 %v2736, 16
        %v2746 = vrot.slane %v2744, 1
        %v2747 = vor.u32 %v2742, %v2746
        %v2749 = vshll.u32 %v2737, 16
        %v2751 = vrot.slane %v2749, 1
        %v2752 = vsel %vm2393, %v2747, %v2751
        %v2753 = vshrl.u32 %v2737, 16
        %v2755 = vor.u32 %v2753, %v2751
        %v2757 = vshll.u32 %v2738, 16
        %v2759 = vrot.slane %v2757, 1
        %v2760 = vsel %vm2393, %v2755, %v2759
        %v2761 = vshrl.u32 %v2738, 16
        %v2763 = vor.u32 %v2761, %v2759
        %v2765 = vshll.u32 %v2739, 16
        %v2767 = vrot.slane %v2765, 1
        %v2768 = vsel %vm2393, %v2763, %v2767
        %v2769 = vshrl.u32 %v2739, 16
        %v2771 = vor.u32 %v2769, %v2767
        %v2773 = vshll.u32 %v2740, 16
        %v2775 = vrot.slane %v2773, 1
        %v2776 = vsel %vm2393, %v2771, %v2775
        %v2777 = vld [vmem:[%s294 + $0x24] sm:$0x1]
        %v2778 = vld [vmem:[%s314 + $0x24] sm:$0x1]
        %v2780 = vunpack.c.l.b16 %v2777
        %v2781 = vpack.c.b16 %v2780, %v2780
        %v2783 = vshrl.u32 %v2601, 16
        %v2785 = vshll.u32 %v2601, 16
        %v2787 = vrot.slane %v2785, 1
        %v2788 = vor.u32 %v2783, %v2787
        %v2790 = vshll.u32 %v2602, 16
        %v2792 = vrot.slane %v2790, 1
        %v2793 = vsel %vm2393, %v2788, %v2792
        %v2794 = vshrl.u32 %v2602, 16
        %v2796 = vor.u32 %v2794, %v2792
        %v2798 = vshll.u32 %v2603, 16
        %v2800 = vrot.slane %v2798, 1
        %v2801 = vsel %vm2393, %v2796, %v2800
        %v2802 = vshrl.u32 %v2603, 16
        %v2804 = vor.u32 %v2802, %v2800
        %v2806 = vshll.u32 %v2604, 16
        %v2808 = vrot.slane %v2806, 1
        %v2809 = vsel %vm2393, %v2804, %v2808
        %v2810 = vshrl.u32 %v2604, 16
        %v2812 = vor.u32 %v2810, %v2808
        %v2814 = vshll.u32 %v2781, 16
        %v2816 = vrot.slane %v2814, 1
        %v2817 = vsel %vm2393, %v2812, %v2816
        %v2819 = vunpack.c.l.b16 %v2778
        %v2820 = vpack.c.b16 %v2819, %v2819
        %v2822 = vshrl.u32 %v2625, 16
        %v2824 = vshll.u32 %v2625, 16
        %v2826 = vrot.slane %v2824, 1
        %v2827 = vor.u32 %v2822, %v2826
        %v2829 = vshll.u32 %v2626, 16
        %v2831 = vrot.slane %v2829, 1
        %v2832 = vsel %vm2393, %v2827, %v2831
        %v2833 = vshrl.u32 %v2626, 16
        %v2835 = vor.u32 %v2833, %v2831
        %v2837 = vshll.u32 %v2627, 16
        %v2839 = vrot.slane %v2837, 1
        %v2840 = vsel %vm2393, %v2835, %v2839
        %v2841 = vshrl.u32 %v2627, 16
        %v2843 = vor.u32 %v2841, %v2839
        %v2845 = vshll.u32 %v2628, 16
        %v2847 = vrot.slane %v2845, 1
        %v2848 = vsel %vm2393, %v2843, %v2847
        %v2849 = vshrl.u32 %v2628, 16
        %v2851 = vor.u32 %v2849, %v2847
        %v2853 = vshll.u32 %v2820, 16
        %v2855 = vrot.slane %v2853, 1
        %v2856 = vsel %vm2393, %v2851, %v2855
        %v2857 = vld [vmem:[%s304 + $0x20] sm:$0xf]
        %v2858 = vld [vmem:[%s324 + $0x20] sm:$0xf]
        %v2860 = vunpack.c.l.b16 %v2857
        %v2861 = vpack.c.b16 %v2210, %v2209
        %v2862 = vpack.c.b16 %v2212, %v2211
        %v2863 = vpack.c.b16 %v2214, %v2213
        %v2864 = vpack.c.b16 %v2860, %v2215
        %v2870 = vunpack.c.l.b16 %v2858
        %v2871 = vpack.c.b16 %v2234, %v2233
        %v2872 = vpack.c.b16 %v2236, %v2235
        %v2873 = vpack.c.b16 %v2238, %v2237
        %v2874 = vpack.c.b16 %v2870, %v2239
        %v2879 = vsel %vm2336, 0, %v2861
        %v2880 = vsel %vm2337, 0, %v2862
        %v2881 = vsel %vm2338, 0, %v2863
        %v2882 = vsel %vm2339, 0, %v2864
        %v2883 = vsel %vm2340, 0, %v2871
        %v2884 = vsel %vm2341, 0, %v2872
        %v2885 = vsel %vm2342, 0, %v2873
        %v2886 = vsel %vm2343, 0, %v2874
        %v2887 = vld [vmem:[%s299 + $0x20] sm:$0xf]
        %v2888 = vld [vmem:[%s299 + $0x24] sm:$0x1]
        %v2889 = vld [vmem:[%s319 + $0x20] sm:$0xf]
        %v2890 = vld [vmem:[%s319 + $0x24] sm:$0x1]
        %v2893 = vunpack.c.l.b16 %v2887
        %v2894 = vunpack.c.l.b16 %v2888
        %v2895 = vpack.c.b16 %v2381, %v2380
        %v2896 = vpack.c.b16 %v2383, %v2382
        %v2897 = vpack.c.b16 %v2385, %v2384
        %v2898 = vpack.c.b16 %v2893, %v2386
        %v2899 = vpack.c.b16 %v2894, %v2894
        %v2901 = vshrl.u32 %v2895, 16
        %v2903 = vshll.u32 %v2895, 16
        %v2905 = vrot.slane %v2903, 1
        %v2906 = vor.u32 %v2901, %v2905
        %v2908 = vshll.u32 %v2896, 16
        %v2910 = vrot.slane %v2908, 1
        %v2911 = vsel %vm2393, %v2906, %v2910
        %v2912 = vshrl.u32 %v2896, 16
        %v2914 = vor.u32 %v2912, %v2910
        %v2916 = vshll.u32 %v2897, 16
        %v2918 = vrot.slane %v2916, 1
        %v2919 = vsel %vm2393, %v2914, %v2918
        %v2920 = vshrl.u32 %v2897, 16
        %v2922 = vor.u32 %v2920, %v2918
        %v2924 = vshll.u32 %v2898, 16
        %v2926 = vrot.slane %v2924, 1
        %v2927 = vsel %vm2393, %v2922, %v2926
        %v2928 = vshrl.u32 %v2898, 16
        %v2930 = vor.u32 %v2928, %v2926
        %v2932 = vshll.u32 %v2899, 16
        %v2934 = vrot.slane %v2932, 1
        %v2935 = vsel %vm2393, %v2930, %v2934
        %v2938 = vunpack.c.l.b16 %v2889
        %v2939 = vunpack.c.l.b16 %v2890
        %v2940 = vpack.c.b16 %v2441, %v2440
        %v2941 = vpack.c.b16 %v2443, %v2442
        %v2942 = vpack.c.b16 %v2445, %v2444
        %v2943 = vpack.c.b16 %v2938, %v2446
        %v2944 = vpack.c.b16 %v2939, %v2939
        %v2946 = vshrl.u32 %v2940, 16
        %v2948 = vshll.u32 %v2940, 16
        %v2950 = vrot.slane %v2948, 1
        %v2951 = vor.u32 %v2946, %v2950
        %v2953 = vshll.u32 %v2941, 16
        %v2955 = vrot.slane %v2953, 1
        %v2956 = vsel %vm2393, %v2951, %v2955
        %v2957 = vshrl.u32 %v2941, 16
        %v2959 = vor.u32 %v2957, %v2955
        %v2961 = vshll.u32 %v2942, 16
        %v2963 = vrot.slane %v2961, 1
        %v2964 = vsel %vm2393, %v2959, %v2963
        %v2965 = vshrl.u32 %v2942, 16
        %v2967 = vor.u32 %v2965, %v2963
        %v2969 = vshll.u32 %v2943, 16
        %v2971 = vrot.slane %v2969, 1
        %v2972 = vsel %vm2393, %v2967, %v2971
        %v2973 = vshrl.u32 %v2943, 16
        %v2975 = vor.u32 %v2973, %v2971
        %v2977 = vshll.u32 %v2944, 16
        %v2979 = vrot.slane %v2977, 1
        %v2980 = vsel %vm2393, %v2975, %v2979
        %v2981 = vld [vmem:[%s304 + $0x24] sm:$0x1]
        %v2982 = vld [vmem:[%s324 + $0x24] sm:$0x1]
        %v2984 = vunpack.c.l.b16 %v2981
        %v2985 = vpack.c.b16 %v2984, %v2984
        %v2987 = vshrl.u32 %v2861, 16
        %v2989 = vshll.u32 %v2861, 16
        %v2991 = vrot.slane %v2989, 1
        %v2992 = vor.u32 %v2987, %v2991
        %v2994 = vshll.u32 %v2862, 16
        %v2996 = vrot.slane %v2994, 1
        %v2997 = vsel %vm2393, %v2992, %v2996
        %v2998 = vshrl.u32 %v2862, 16
        %v3000 = vor.u32 %v2998, %v2996
        %v3002 = vshll.u32 %v2863, 16
        %v3004 = vrot.slane %v3002, 1
        %v3005 = vsel %vm2393, %v3000, %v3004
        %v3006 = vshrl.u32 %v2863, 16
        %v3008 = vor.u32 %v3006, %v3004
        %v3010 = vshll.u32 %v2864, 16
        %v3012 = vrot.slane %v3010, 1
        %v3013 = vsel %vm2393, %v3008, %v3012
        %v3014 = vshrl.u32 %v2864, 16
        %v3016 = vor.u32 %v3014, %v3012
        %v3018 = vshll.u32 %v2985, 16
        %v3020 = vrot.slane %v3018, 1
        %v3021 = vsel %vm2393, %v3016, %v3020
        %v3023 = vunpack.c.l.b16 %v2982
        %v3024 = vpack.c.b16 %v3023, %v3023
        %v3026 = vshrl.u32 %v2871, 16
        %v3028 = vshll.u32 %v2871, 16
        %v3030 = vrot.slane %v3028, 1
        %v3031 = vor.u32 %v3026, %v3030
        %v3033 = vshll.u32 %v2872, 16
        %v3035 = vrot.slane %v3033, 1
        %v3036 = vsel %vm2393, %v3031, %v3035
        %v3037 = vshrl.u32 %v2872, 16
        %v3039 = vor.u32 %v3037, %v3035
        %v3041 = vshll.u32 %v2873, 16
        %v3043 = vrot.slane %v3041, 1
        %v3044 = vsel %vm2393, %v3039, %v3043
        %v3045 = vshrl.u32 %v2873, 16
        %v3047 = vor.u32 %v3045, %v3043
        %v3049 = vshll.u32 %v2874, 16
        %v3051 = vrot.slane %v3049, 1
        %v3052 = vsel %vm2393, %v3047, %v3051
        %v3053 = vshrl.u32 %v2874, 16
        %v3055 = vor.u32 %v3053, %v3051
        %v3057 = vshll.u32 %v3024, 16
        %v3059 = vrot.slane %v3057, 1
        %v3060 = vsel %vm2393, %v3055, %v3059
        %3061 = vrot.lane.b32.xlu0 %v2405, 32
        %v3062 = vpop.permute.xlu0 %3061
        %3063 = vrot.lane.b32.xlu0 %v2413, 32
        %v3064 = vpop.permute.xlu0 %3063
        %3065 = vrot.lane.b32.xlu0 %v2421, 32
        %v3066 = vpop.permute.xlu0 %3065
        %3067 = vrot.lane.b32.xlu0 %v2429, 32
        %v3068 = vpop.permute.xlu0 %3067
        %3069 = vrot.lane.b32.xlu0 %v2464, 32
        %v3070 = vpop.permute.xlu0 %3069
        %3071 = vrot.lane.b32.xlu0 %v2472, 32
        %v3072 = vpop.permute.xlu0 %3071
        %3073 = vrot.lane.b32.xlu0 %v2480, 32
        %v3074 = vpop.permute.xlu0 %3073
        %3075 = vrot.lane.b32.xlu0 %v2488, 32
        %v3076 = vpop.permute.xlu0 %3075
        %3077 = vrot.lane.b32.xlu0 %v2505, 64
        %v3078 = vpop.permute.xlu0 %3077
        %3079 = vrot.lane.b32.xlu0 %v2513, 64
        %v3080 = vpop.permute.xlu0 %3079
        %3081 = vrot.lane.b32.xlu0 %v2521, 64
        %v3082 = vpop.permute.xlu0 %3081
        %3083 = vrot.lane.b32.xlu0 %v2529, 64
        %v3084 = vpop.permute.xlu0 %3083
        %3085 = vrot.lane.b32.xlu0 %v2544, 64
        %v3086 = vpop.permute.xlu0 %3085
        %3087 = vrot.lane.b32.xlu0 %v2552, 64
        %v3088 = vpop.permute.xlu0 %3087
        %3089 = vrot.lane.b32.xlu0 %v2560, 64
        %v3090 = vpop.permute.xlu0 %3089
        %3091 = vrot.lane.b32.xlu0 %v2568, 64
        %v3092 = vpop.permute.xlu0 %3091
        %3101 = vrot.lane.b32.xlu0 %v2633, 96
        %v3102 = vpop.permute.xlu0 %3101
        %3103 = vrot.lane.b32.xlu0 %v2634, 96
        %v3104 = vpop.permute.xlu0 %3103
        %3105 = vrot.lane.b32.xlu0 %v2635, 96
        %v3106 = vpop.permute.xlu0 %3105
        %3107 = vrot.lane.b32.xlu0 %v2636, 96
        %v3108 = vpop.permute.xlu0 %3107
        %3109 = vrot.lane.b32.xlu0 %v2637, 96
        %v3110 = vpop.permute.xlu0 %3109
        %3111 = vrot.lane.b32.xlu0 %v2638, 96
        %v3112 = vpop.permute.xlu0 %3111
        %3113 = vrot.lane.b32.xlu0 %v2639, 96
        %v3114 = vpop.permute.xlu0 %3113
        %3115 = vrot.lane.b32.xlu0 %v2640, 96
        %v3116 = vpop.permute.xlu0 %3115
        %3117 = vrot.lane.b32.xlu0 %v2793, 32
        %v3118 = vpop.permute.xlu0 %3117
        %3119 = vrot.lane.b32.xlu0 %v2801, 32
        %v3120 = vpop.permute.xlu0 %3119
        %3121 = vrot.lane.b32.xlu0 %v2809, 32
        %v3122 = vpop.permute.xlu0 %3121
        %3123 = vrot.lane.b32.xlu0 %v2817, 32
        %v3124 = vpop.permute.xlu0 %3123
        %3125 = vrot.lane.b32.xlu0 %v2832, 32
        %v3126 = vpop.permute.xlu0 %3125
        %3127 = vrot.lane.b32.xlu0 %v2840, 32
        %v3128 = vpop.permute.xlu0 %3127
        %3129 = vrot.lane.b32.xlu0 %v2848, 32
        %v3130 = vpop.permute.xlu0 %3129
        %3131 = vrot.lane.b32.xlu0 %v2856, 32
        %v3132 = vpop.permute.xlu0 %3131
        %3141 = vrot.lane.b32.xlu0 %v2879, 64
        %v3142 = vpop.permute.xlu0 %3141
        %3143 = vrot.lane.b32.xlu0 %v2880, 64
        %v3144 = vpop.permute.xlu0 %3143
        %3145 = vrot.lane.b32.xlu0 %v2881, 64
        %v3146 = vpop.permute.xlu0 %3145
        %3147 = vrot.lane.b32.xlu0 %v2882, 64
        %v3148 = vpop.permute.xlu0 %3147
        %3149 = vrot.lane.b32.xlu0 %v2883, 64
        %v3150 = vpop.permute.xlu0 %3149
        %3151 = vrot.lane.b32.xlu0 %v2884, 64
        %v3152 = vpop.permute.xlu0 %3151
        %3153 = vrot.lane.b32.xlu0 %v2885, 64
        %v3154 = vpop.permute.xlu0 %3153
        %3155 = vrot.lane.b32.xlu0 %v2886, 64
        %v3156 = vpop.permute.xlu0 %3155
        %3157 = vrot.lane.b32.xlu0 %v2911, 96
        %v3158 = vpop.permute.xlu0 %3157
        %3159 = vrot.lane.b32.xlu0 %v2919, 96
        %v3160 = vpop.permute.xlu0 %3159
        %3161 = vrot.lane.b32.xlu0 %v2927, 96
        %v3162 = vpop.permute.xlu0 %3161
        %3163 = vrot.lane.b32.xlu0 %v2935, 96
        %v3164 = vpop.permute.xlu0 %3163
        %3165 = vrot.lane.b32.xlu0 %v2956, 96
        %v3166 = vpop.permute.xlu0 %3165
        %3167 = vrot.lane.b32.xlu0 %v2964, 96
        %v3168 = vpop.permute.xlu0 %3167
        %3169 = vrot.lane.b32.xlu0 %v2972, 96
        %v3170 = vpop.permute.xlu0 %3169
        %3171 = vrot.lane.b32.xlu0 %v2980, 96
        %v3172 = vpop.permute.xlu0 %3171
        %vm3173 = vcmask 261120
        %v3176 = vsel %vm3173, %v2344, %v3062
        %v3179 = vsel %vm3173, %v2345, %v3064
        %v3182 = vsel %vm3173, %v2346, %v3066
        %v3185 = vsel %vm3173, %v2347, %v3068
        %v3188 = vsel %vm3173, %v2348, %v3070
        %v3191 = vsel %vm3173, %v2349, %v3072
        %v3194 = vsel %vm3173, %v2350, %v3074
        %v3197 = vsel %vm3173, %v2351, %v3076
        %vm3198 = vcmask 523264
        %v3200 = vsel %vm3198, %v3176, %v3078
        %v3202 = vsel %vm3198, %v3179, %v3080
        %v3204 = vsel %vm3198, %v3182, %v3082
        %v3206 = vsel %vm3198, %v3185, %v3084
        %v3208 = vsel %vm3198, %v3188, %v3086
        %v3210 = vsel %vm3198, %v3191, %v3088
        %v3212 = vsel %vm3198, %v3194, %v3090
        %v3214 = vsel %vm3198, %v3197, %v3092
        %vm3215 = vcmask 785408
        %v3217 = vsel %vm3215, %v3200, %v3102
        %v3220 = vsel %vm3215, %v3202, %v3104
        %v3223 = vsel %vm3215, %v3204, %v3106
        %v3226 = vsel %vm3215, %v3206, %v3108
        %v3229 = vsel %vm3215, %v3208, %v3110
        %v3232 = vsel %vm3215, %v3210, %v3112
        %v3235 = vsel %vm3215, %v3212, %v3114
        %v3238 = vsel %vm3215, %v3214, %v3116
        %v3242 = vsel %vm3173, %v2693, %v3118
        %v3245 = vsel %vm3173, %v2701, %v3120
        %v3248 = vsel %vm3173, %v2709, %v3122
        %v3251 = vsel %vm3173, %v2717, %v3124
        %v3254 = vsel %vm3173, %v2752, %v3126
        %v3257 = vsel %vm3173, %v2760, %v3128
        %v3260 = vsel %vm3173, %v2768, %v3130
        %v3263 = vsel %vm3173, %v2776, %v3132
        %v3265 = vsel %vm3198, %v3242, %v3142
        %v3267 = vsel %vm3198, %v3245, %v3144
        %v3269 = vsel %vm3198, %v3248, %v3146
        %v3271 = vsel %vm3198, %v3251, %v3148
        %v3273 = vsel %vm3198, %v3254, %v3150
        %v3275 = vsel %vm3198, %v3257, %v3152
        %v3277 = vsel %vm3198, %v3260, %v3154
        %v3279 = vsel %vm3198, %v3263, %v3156
        %v3281 = vsel %vm3215, %v3265, %v3158
        %v3284 = vsel %vm3215, %v3267, %v3160
        %v3287 = vsel %vm3215, %v3269, %v3162
        %v3290 = vsel %vm3215, %v3271, %v3164
        %v3293 = vsel %vm3215, %v3273, %v3166
        %v3296 = vsel %vm3215, %v3275, %v3168
        %v3299 = vsel %vm3215, %v3277, %v3170
        %v3302 = vsel %vm3215, %v3279, %v3172
        %v3304 = vld [vmem:[%s3] sm:$0xf]
        %v3305 = vld [vmem:[%s3 + $0x4] sm:$0xf]
        %v3306 = vld [vmem:[%s3 + $0x8] sm:$0xf]
        %v3307 = vld [vmem:[%s3 + $0xc] sm:$0xf]
        %v3308 = vld [vmem:[%s3 + $0x10] sm:$0xf]
        %v3309 = vld [vmem:[%s3 + $0x14] sm:$0xf]
        %v3310 = vld [vmem:[%s3 + $0x18] sm:$0xf]
        %v3311 = vld [vmem:[%s3 + $0x1c] sm:$0xf]
        %v3312 = vld [vmem:[%s3 + $0x20] sm:$0xf]
        %v3313 = vld [vmem:[%s3 + $0x24] sm:$0xf]
        %v3314 = vld [vmem:[%s3 + $0x28] sm:$0xf]
        %v3315 = vld [vmem:[%s3 + $0x2c] sm:$0xf]
        %v3316 = vld [vmem:[%s3 + $0x30] sm:$0xf]
        %v3317 = vld [vmem:[%s3 + $0x34] sm:$0xf]
        %v3318 = vld [vmem:[%s3 + $0x38] sm:$0xf]
        %v3319 = vld [vmem:[%s3 + $0x3c] sm:$0xf]
        %v3320 = vld [vmem:[%s3 + $0x40] sm:$0xf]
        %v3321 = vld [vmem:[%s3 + $0x44] sm:$0xf]
        %v3322 = vld [vmem:[%s3 + $0x48] sm:$0xf]
        %v3323 = vld [vmem:[%s3 + $0x4c] sm:$0xf]
        %v3324 = vld [vmem:[%s3 + $0x50] sm:$0xf]
        %v3325 = vld [vmem:[%s3 + $0x54] sm:$0xf]
        %v3326 = vld [vmem:[%s3 + $0x58] sm:$0xf]
        %v3327 = vld [vmem:[%s3 + $0x5c] sm:$0xf]
        %v3328 = vld [vmem:[%s3 + $0x60] sm:$0xf]
        %v3329 = vld [vmem:[%s3 + $0x64] sm:$0xf]
        %v3330 = vld [vmem:[%s3 + $0x68] sm:$0xf]
        %v3331 = vld [vmem:[%s3 + $0x6c] sm:$0xf]
        %v3332 = vld [vmem:[%s3 + $0x70] sm:$0xf]
        %v3333 = vld [vmem:[%s3 + $0x74] sm:$0xf]
        %v3334 = vld [vmem:[%s3 + $0x78] sm:$0xf]
        %v3335 = vld [vmem:[%s3 + $0x7c] sm:$0xf]
        %v3336 = vld [vmem:[%s3 + $0x80] sm:$0xf]
        %v3337 = vld [vmem:[%s3 + $0x84] sm:$0xf]
        %v3338 = vld [vmem:[%s3 + $0x88] sm:$0xf]
        %v3339 = vld [vmem:[%s3 + $0x8c] sm:$0xf]
        %v3340 = vld [vmem:[%s4] sm:$0x1]
        %v3342 = vlaneseq
        %v3343 = vshrl.u32 %v3342, 7
        %v3344 = vsub.s32 0, %v3343
        %v3345 = vrot.slane %v3340, %v3344
        %v3383 = vunpack.c.l.b16 %v3304
        %v3384 = vunpack.c.l.b16 %v3305
        %v3385 = vunpack.c.l.b16 %v3306
        %v3386 = vunpack.c.l.b16 %v3307
        %v3387 = vunpack.c.l.b16 %v3308
        %v3388 = vunpack.c.l.b16 %v3309
        %v3389 = vunpack.c.l.b16 %v3310
        %v3390 = vunpack.c.l.b16 %v3311
        %v3391 = vunpack.c.l.b16 %v3312
        %v3392 = vunpack.c.l.b16 %v3313
        %v3393 = vunpack.c.l.b16 %v3314
        %v3394 = vunpack.c.l.b16 %v3315
        %v3395 = vunpack.c.l.b16 %v3316
        %v3396 = vunpack.c.l.b16 %v3317
        %v3397 = vunpack.c.l.b16 %v3318
        %v3398 = vunpack.c.l.b16 %v3319
        %v3399 = vunpack.c.l.b16 %v3320
        %v3400 = vunpack.c.l.b16 %v3321
        %v3401 = vunpack.c.l.b16 %v3322
        %v3402 = vunpack.c.l.b16 %v3323
        %v3403 = vunpack.c.l.b16 %v3324
        %v3404 = vunpack.c.l.b16 %v3325
        %v3405 = vunpack.c.l.b16 %v3326
        %v3406 = vunpack.c.l.b16 %v3327
        %v3407 = vunpack.c.l.b16 %v3328
        %v3408 = vunpack.c.l.b16 %v3329
        %v3409 = vunpack.c.l.b16 %v3330
        %v3410 = vunpack.c.l.b16 %v3331
        %v3411 = vunpack.c.l.b16 %v3332
        %v3412 = vunpack.c.l.b16 %v3333
        %v3413 = vunpack.c.l.b16 %v3334
        %v3414 = vunpack.c.l.b16 %v3335
        %v3415 = vunpack.c.l.b16 %v3336
        %v3416 = vunpack.c.l.b16 %v3337
        %v3417 = vunpack.c.l.b16 %v3338
        %v3418 = vunpack.c.l.b16 %v3339
        %v3419 = vpack.c.b16 %v3384, %v3383
        %v3420 = vpack.c.b16 %v3386, %v3385
        %v3421 = vpack.c.b16 %v3388, %v3387
        %v3422 = vpack.c.b16 %v3390, %v3389
        %v3423 = vpack.c.b16 %v3392, %v3391
        %v3424 = vpack.c.b16 %v3394, %v3393
        %v3425 = vpack.c.b16 %v3396, %v3395
        %v3426 = vpack.c.b16 %v3398, %v3397
        %v3427 = vpack.c.b16 %v3400, %v3399
        %v3428 = vpack.c.b16 %v3402, %v3401
        %v3429 = vpack.c.b16 %v3404, %v3403
        %v3430 = vpack.c.b16 %v3406, %v3405
        %v3431 = vpack.c.b16 %v3408, %v3407
        %v3432 = vpack.c.b16 %v3410, %v3409
        %v3433 = vpack.c.b16 %v3412, %v3411
        %v3434 = vpack.c.b16 %v3414, %v3413
        %v3435 = vpack.c.b16 %v3416, %v3415
        %v3436 = vpack.c.b16 %v3418, %v3417
        %v3456 = vsel %vm3173, %v2997, 0
        %v3459 = vsel %vm3173, %v3005, 0
        %v3462 = vsel %vm3173, %v3013, 0
        %v3465 = vsel %vm3173, %v3021, 0
        %v3468 = vsel %vm3173, %v3036, 0
        %v3471 = vsel %vm3173, %v3044, 0
        %v3474 = vsel %vm3173, %v3052, 0
        %v3477 = vsel %vm3173, %v3060, 0
        %3479 = vmatprep.subr.bf16.mxu0 0
        %3480 = vmatpush1.bf16.msra.mxu0 %v3426
        %3481 = vmatprep.subr.bf16.mxu0 0
        %3482 = vmatpush1.bf16.msra.mxu0 %v3425
        %3483 = vmatprep.subr.bf16.mxu0 0
        %3484 = vmatpush1.bf16.msra.mxu0 %v3424
        %3485 = vmatprep.subr.bf16.mxu0 0
        %3486 = vmatpush1.bf16.msra.mxu0 %v3423
        %3487 = vmatprep.subr.bf16.mxu0 0
        %3488 = vmatpush1.bf16.msra.mxu0 %v3422
        %3489 = vmatprep.subr.bf16.mxu0 0
        %3490 = vmatpush1.bf16.msra.mxu0 %v3421
        %3491 = vmatprep.subr.bf16.mxu0 0
        %3492 = vmatpush1.bf16.msra.mxu0 %v3420
        %3493 = vmatprep.subr.bf16.mxu0 0
        %3494 = vmatpush1.bf16.msra.mxu0 %v3419
        %3495 = vmatprep.subr.bf16.mxu0 0
        %3496 = vmatpush2.bf16.msra.mxu0 %v3434
        %3497 = vmatprep.subr.bf16.mxu0 0
        %3498 = vmatpush2.bf16.msra.mxu0 %v3433
        %3499 = vmatprep.subr.bf16.mxu0 0
        %3500 = vmatpush2.bf16.msra.mxu0 %v3432
        %3501 = vmatprep.subr.bf16.mxu0 0
        %3502 = vmatpush2.bf16.msra.mxu0 %v3431
        %3503 = vmatprep.subr.bf16.mxu0 0
        %3504 = vmatpush2.bf16.msra.mxu0 %v3430
        %3505 = vmatprep.subr.bf16.mxu0 0
        %3506 = vmatpush2.bf16.msra.mxu0 %v3429
        %3507 = vmatprep.subr.bf16.mxu0 0
        %3508 = vmatpush2.bf16.msra.mxu0 %v3428
        %3509 = vmatprep.subr.bf16.mxu0 0
        %3510 = vmatpush2.bf16.msra.mxu0 %v3427
        %3511 = vmatprep.mubr.bf16.mxu0 %v3281
        %3512 = vmatmul.mubr.bf16.gmra.mxu0 %v3217
        %v3513 = vpop.f32.mrf.mxu0
        %v3514 = vadd.f32 %v3345, %v3513
        %v3515 = vpop.f32.mrf.mxu0
        %v3516 = vpop.f32.mrf.mxu0
        %v3517 = vadd.f32 %v3345, %v3516
        %v3518 = vpop.f32.mrf.mxu0
        %3519 = vmatprep.mubr.bf16.mxu0 %v3284
        %3520 = vmatmul.mubr.bf16.gmra.mxu0 %v3220
        %v3521 = vpop.f32.mrf.mxu0
        %v3522 = vadd.f32 %v3345, %v3521
        %v3523 = vpop.f32.mrf.mxu0
        %v3524 = vpop.f32.mrf.mxu0
        %v3525 = vadd.f32 %v3345, %v3524
        %v3526 = vpop.f32.mrf.mxu0
        %3527 = vmatprep.mubr.bf16.mxu0 %v3287
        %3528 = vmatmul.mubr.bf16.gmra.mxu0 %v3223
        %v3529 = vpop.f32.mrf.mxu0
        %v3530 = vadd.f32 %v3345, %v3529
        %v3531 = vpop.f32.mrf.mxu0
        %v3532 = vpop.f32.mrf.mxu0
        %v3533 = vadd.f32 %v3345, %v3532
        %v3534 = vpop.f32.mrf.mxu0
        %3535 = vmatprep.mubr.bf16.mxu0 %v3290
        %3536 = vmatmul.mubr.bf16.gmra.mxu0 %v3226
        %v3537 = vpop.f32.mrf.mxu0
        %v3538 = vadd.f32 %v3345, %v3537
        %v3539 = vpop.f32.mrf.mxu0
        %v3540 = vpop.f32.mrf.mxu0
        %v3541 = vadd.f32 %v3345, %v3540
        %v3542 = vpop.f32.mrf.mxu0
        %3543 = vmatprep.mubr.bf16.mxu0 %v3293
        %3544 = vmatmul.mubr.bf16.gmra.mxu0 %v3229
        %v3545 = vpop.f32.mrf.mxu0
        %v3546 = vadd.f32 %v3345, %v3545
        %v3547 = vpop.f32.mrf.mxu0
        %v3548 = vpop.f32.mrf.mxu0
        %v3549 = vadd.f32 %v3345, %v3548
        %v3550 = vpop.f32.mrf.mxu0
        %3551 = vmatprep.mubr.bf16.mxu0 %v3296
        %3552 = vmatmul.mubr.bf16.gmra.mxu0 %v3232
        %v3553 = vpop.f32.mrf.mxu0
        %v3554 = vadd.f32 %v3345, %v3553
        %v3555 = vpop.f32.mrf.mxu0
        %v3556 = vpop.f32.mrf.mxu0
        %v3557 = vadd.f32 %v3345, %v3556
        %v3558 = vpop.f32.mrf.mxu0
        %3559 = vmatprep.mubr.bf16.mxu0 %v3299
        %3560 = vmatmul.mubr.bf16.gmra.mxu0 %v3235
        %v3561 = vpop.f32.mrf.mxu0
        %v3562 = vadd.f32 %v3345, %v3561
        %v3563 = vpop.f32.mrf.mxu0
        %v3564 = vpop.f32.mrf.mxu0
        %v3565 = vadd.f32 %v3345, %v3564
        %v3566 = vpop.f32.mrf.mxu0
        %3567 = vmatprep.mubr.bf16.mxu0 %v3302
        %3568 = vmatmul.mubr.bf16.gmra.mxu0 %v3238
        %v3569 = vpop.f32.mrf.mxu0
        %v3570 = vadd.f32 %v3345, %v3569
        %v3571 = vpop.f32.mrf.mxu0
        %v3572 = vpop.f32.mrf.mxu0
        %v3573 = vadd.f32 %v3345, %v3572
        %v3574 = vpop.f32.mrf.mxu0
        %3575 = vdwg.mxu0
        %3576 = vmatprep.subr.bf16.mxu0 0
        %3577 = vmatpush1.bf16.msra.mxu0 0
        %3578 = vmatprep.subr.bf16.mxu0 0
        %3579 = vmatpush1.bf16.msra.mxu0 0
        %3580 = vmatprep.subr.bf16.mxu0 0
        %3581 = vmatpush1.bf16.msra.mxu0 0
        %3582 = vmatprep.subr.bf16.mxu0 0
        %3583 = vmatpush1.bf16.msra.mxu0 0
        %3584 = vmatprep.subr.bf16.mxu0 0
        %3585 = vmatpush1.bf16.msra.mxu0 0
        %3586 = vmatprep.subr.bf16.mxu0 0
        %3587 = vmatpush1.bf16.msra.mxu0 0
        %3588 = vmatprep.subr.bf16.mxu0 0
        %3589 = vmatpush1.bf16.msra.mxu0 %v3436
        %3590 = vmatprep.subr.bf16.mxu0 0
        %3591 = vmatpush1.bf16.msra.mxu0 %v3435
        %3592 = vmatprep.subr.bf16.mxu0 0
        %3593 = vmatpush2.bf16.msra.mxu0 0
        %3594 = vmatprep.subr.bf16.mxu0 0
        %3595 = vmatpush2.bf16.msra.mxu0 0
        %3596 = vmatprep.subr.bf16.mxu0 0
        %3597 = vmatpush2.bf16.msra.mxu0 0
        %3598 = vmatprep.subr.bf16.mxu0 0
        %3599 = vmatpush2.bf16.msra.mxu0 0
        %3600 = vmatprep.subr.bf16.mxu0 0
        %3601 = vmatpush2.bf16.msra.mxu0 0
        %3602 = vmatprep.subr.bf16.mxu0 0
        %3603 = vmatpush2.bf16.msra.mxu0 0
        %3604 = vmatprep.subr.bf16.mxu0 0
        %3605 = vmatpush2.bf16.msra.mxu0 0
        %3606 = vmatprep.subr.bf16.mxu0 0
        %3607 = vmatpush2.bf16.msra.mxu0 0
        %3608 = vmatprep.mubr.bf16.mxu0 0
        %3609 = vmatmul.mubr.bf16.gmra.mxu0 %v3456
        %v3610 = vpop.f32.mrf.mxu0
        %v3611 = vadd.f32 %v3514, %v3610
        %v3612 = vpop.f32.mrf.mxu0
        %v3613 = vpop.f32.mrf.mxu0
        %v3614 = vadd.f32 %v3517, %v3613
        %v3615 = vpop.f32.mrf.mxu0
        %3616 = vmatprep.mubr.bf16.mxu0 0
        %3617 = vmatmul.mubr.bf16.gmra.mxu0 %v3459
        %v3618 = vpop.f32.mrf.mxu0
        %v3619 = vadd.f32 %v3522, %v3618
        %v3620 = vpop.f32.mrf.mxu0
        %v3621 = vpop.f32.mrf.mxu0
        %v3622 = vadd.f32 %v3525, %v3621
        %v3623 = vpop.f32.mrf.mxu0
        %3624 = vmatprep.mubr.bf16.mxu0 0
        %3625 = vmatmul.mubr.bf16.gmra.mxu0 %v3462
        %v3626 = vpop.f32.mrf.mxu0
        %v3627 = vadd.f32 %v3530, %v3626
        %v3628 = vpop.f32.mrf.mxu0
        %v3629 = vpop.f32.mrf.mxu0
        %v3630 = vadd.f32 %v3533, %v3629
        %v3631 = vpop.f32.mrf.mxu0
        %3632 = vmatprep.mubr.bf16.mxu0 0
        %3633 = vmatmul.mubr.bf16.gmra.mxu0 %v3465
        %v3634 = vpop.f32.mrf.mxu0
        %v3635 = vadd.f32 %v3538, %v3634
        %v3636 = vpop.f32.mrf.mxu0
        %v3637 = vpop.f32.mrf.mxu0
        %v3638 = vadd.f32 %v3541, %v3637
        %v3639 = vpop.f32.mrf.mxu0
        %3640 = vmatprep.mubr.bf16.mxu0 0
        %3641 = vmatmul.mubr.bf16.gmra.mxu0 %v3468
        %v3642 = vpop.f32.mrf.mxu0
        %v3643 = vadd.f32 %v3546, %v3642
        %v3644 = vpop.f32.mrf.mxu0
        %v3645 = vpop.f32.mrf.mxu0
        %v3646 = vadd.f32 %v3549, %v3645
        %v3647 = vpop.f32.mrf.mxu0
        %3648 = vmatprep.mubr.bf16.mxu0 0
        %3649 = vmatmul.mubr.bf16.gmra.mxu0 %v3471
        %v3650 = vpop.f32.mrf.mxu0
        %v3651 = vadd.f32 %v3554, %v3650
        %v3652 = vpop.f32.mrf.mxu0
        %v3653 = vpop.f32.mrf.mxu0
        %v3654 = vadd.f32 %v3557, %v3653
        %v3655 = vpop.f32.mrf.mxu0
        %3656 = vmatprep.mubr.bf16.mxu0 0
        %3657 = vmatmul.mubr.bf16.gmra.mxu0 %v3474
        %v3658 = vpop.f32.mrf.mxu0
        %v3659 = vadd.f32 %v3562, %v3658
        %v3660 = vpop.f32.mrf.mxu0
        %v3661 = vpop.f32.mrf.mxu0
        %v3662 = vadd.f32 %v3565, %v3661
        %v3663 = vpop.f32.mrf.mxu0
        %3664 = vmatprep.mubr.bf16.mxu0 0
        %3665 = vmatmul.mubr.bf16.gmra.mxu0 %v3477
        %v3666 = vpop.f32.mrf.mxu0
        %v3667 = vadd.f32 %v3570, %v3666
        %v3668 = vpop.f32.mrf.mxu0
        %v3669 = vpop.f32.mrf.mxu0
        %v3670 = vadd.f32 %v3573, %v3669
        %v3671 = vpop.f32.mrf.mxu0
        %3672 = vdwg.mxu0
        %v3673 = vmax.f32 %v3611, 0.0
        %v3674 = vmax.f32 %v3614, 0.0
        %v3675 = vmax.f32 %v3619, 0.0
        %v3676 = vmax.f32 %v3622, 0.0
        %v3677 = vmax.f32 %v3627, 0.0
        %v3678 = vmax.f32 %v3630, 0.0
        %v3679 = vmax.f32 %v3635, 0.0
        %v3680 = vmax.f32 %v3638, 0.0
        %v3681 = vmax.f32 %v3643, 0.0
        %v3682 = vmax.f32 %v3646, 0.0
        %v3683 = vmax.f32 %v3651, 0.0
        %v3684 = vmax.f32 %v3654, 0.0
        %v3685 = vmax.f32 %v3659, 0.0
        %v3686 = vmax.f32 %v3662, 0.0
        %v3687 = vmax.f32 %v3667, 0.0
        %v3688 = vmax.f32 %v3670, 0.0
        %v3689 = vpack.c.bf16 %v3674, %v3673
        %v3690 = vpack.c.bf16 %v3676, %v3675
        %v3691 = vpack.c.bf16 %v3678, %v3677
        %v3692 = vpack.c.bf16 %v3680, %v3679
        %v3693 = vpack.c.bf16 %v3682, %v3681
        %v3694 = vpack.c.bf16 %v3684, %v3683
        %v3695 = vpack.c.bf16 %v3686, %v3685
        %v3696 = vpack.c.bf16 %v3688, %v3687
        %3697 = vrot.lane.b32.xlu0 %v530, 32
        %v3698 = vpop.permute.xlu0 %3697
        %3699 = vrot.lane.b32.xlu0 %v531, 32
        %v3700 = vpop.permute.xlu0 %3699
        %3701 = vrot.lane.b32.xlu0 %v532, 32
        %v3702 = vpop.permute.xlu0 %3701
        %3703 = vrot.lane.b32.xlu0 %v533, 32
        %v3704 = vpop.permute.xlu0 %3703
        %3705 = vrot.lane.b32.xlu0 %v546, 32
        %v3706 = vpop.permute.xlu0 %3705
        %3707 = vrot.lane.b32.xlu0 %v547, 32
        %v3708 = vpop.permute.xlu0 %3707
        %3709 = vrot.lane.b32.xlu0 %v548, 32
        %v3710 = vpop.permute.xlu0 %3709
        %3711 = vrot.lane.b32.xlu0 %v549, 32
        %v3712 = vpop.permute.xlu0 %3711
        %v3715 = vsel %vm3173, %v3689, %v3698
        %v3718 = vsel %vm3173, %v3690, %v3700
        %v3721 = vsel %vm3173, %v3691, %v3702
        %v3724 = vsel %vm3173, %v3692, %v3704
        %v3727 = vsel %vm3173, %v3693, %v3706
        %v3730 = vsel %vm3173, %v3694, %v3708
        %v3733 = vsel %vm3173, %v3695, %v3710
        %v3736 = vsel %vm3173, %v3696, %v3712
        %v3737 = vld [vmem:[%s5] sm:$0xf]
        %v3738 = vld [vmem:[%s5 + $0x4] sm:$0xf]
        %v3739 = vld [vmem:[%s5 + $0x8] sm:$0xf]
        %v3740 = vld [vmem:[%s5 + $0xc] sm:$0xf]
        %v3741 = vld [vmem:[%s5 + $0x10] sm:$0xf]
        %v3742 = vld [vmem:[%s5 + $0x14] sm:$0xf]
        %v3743 = vld [vmem:[%s6] sm:$0x1]
        %v3745 = vlaneseq
        %v3746 = vshrl.u32 %v3745, 7
        %v3747 = vsub.s32 0, %v3746
        %v3748 = vrot.slane %v3743, %v3747
        %v3756 = vunpack.c.l.b16 %v3737
        %v3757 = vunpack.c.l.b16 %v3738
        %v3758 = vunpack.c.l.b16 %v3739
        %v3759 = vunpack.c.l.b16 %v3740
        %v3760 = vunpack.c.l.b16 %v3741
        %v3761 = vunpack.c.l.b16 %v3742
        %v3762 = vpack.c.b16 %v3757, %v3756
        %v3763 = vpack.c.b16 %v3759, %v3758
        %v3764 = vpack.c.b16 %v3761, %v3760
        %vm3768 = vcmask 392192
        %v3769 = vsel %vm3768, %v3715, 0
        %v3771 = vsel %vm3768, %v3718, 0
        %v3773 = vsel %vm3768, %v3721, 0
        %v3775 = vsel %vm3768, %v3724, 0
        %v3777 = vsel %vm3768, %v3727, 0
        %v3779 = vsel %vm3768, %v3730, 0
        %v3781 = vsel %vm3768, %v3733, 0
        %v3783 = vsel %vm3768, %v3736, 0
        %3785 = vmatprep.subr.bf16.mxu0 0
        %3786 = vmatpush1.bf16.msra.mxu0 0
        %3787 = vmatprep.subr.bf16.mxu0 0
        %3788 = vmatpush1.bf16.msra.mxu0 0
        %3789 = vmatprep.subr.bf16.mxu0 0
        %3790 = vmatpush1.bf16.msra.mxu0 0
        %3791 = vmatprep.subr.bf16.mxu0 0
        %3792 = vmatpush1.bf16.msra.mxu0 0
        %3793 = vmatprep.subr.bf16.mxu0 0
        %3794 = vmatpush1.bf16.msra.mxu0 0
        %3795 = vmatprep.subr.bf16.mxu0 0
        %3796 = vmatpush1.bf16.msra.mxu0 %v3764
        %3797 = vmatprep.subr.bf16.mxu0 0
        %3798 = vmatpush1.bf16.msra.mxu0 %v3763
        %3799 = vmatprep.subr.bf16.mxu0 0
        %3800 = vmatpush1.bf16.msra.mxu0 %v3762
        %3801 = vmatprep.subr.bf16.mxu0 0
        %3802 = vmatpush2.bf16.msra.mxu0 0
        %3803 = vmatprep.subr.bf16.mxu0 0
        %3804 = vmatpush2.bf16.msra.mxu0 0
        %3805 = vmatprep.subr.bf16.mxu0 0
        %3806 = vmatpush2.bf16.msra.mxu0 0
        %3807 = vmatprep.subr.bf16.mxu0 0
        %3808 = vmatpush2.bf16.msra.mxu0 0
        %3809 = vmatprep.subr.bf16.mxu0 0
        %3810 = vmatpush2.bf16.msra.mxu0 0
        %3811 = vmatprep.subr.bf16.mxu0 0
        %3812 = vmatpush2.bf16.msra.mxu0 0
        %3813 = vmatprep.subr.bf16.mxu0 0
        %3814 = vmatpush2.bf16.msra.mxu0 0
        %3815 = vmatprep.subr.bf16.mxu0 0
        %3816 = vmatpush2.bf16.msra.mxu0 0
        %3817 = vmatprep.mubr.bf16.mxu0 0
        %3818 = vmatmul.mubr.bf16.gmra.mxu0 %v3769
        %v3819 = vpop.f32.mrf.mxu0
        %v3820 = vadd.f32 %v3748, %v3819
        %v3821 = vpop.f32.mrf.mxu0
        %v3822 = vpop.f32.mrf.mxu0
        %v3823 = vadd.f32 %v3748, %v3822
        %v3824 = vpop.f32.mrf.mxu0
        %3825 = vmatprep.mubr.bf16.mxu0 0
        %3826 = vmatmul.mubr.bf16.gmra.mxu0 %v3771
        %v3827 = vpop.f32.mrf.mxu0
        %v3828 = vadd.f32 %v3748, %v3827
        %v3829 = vpop.f32.mrf.mxu0
        %v3830 = vpop.f32.mrf.mxu0
        %v3831 = vadd.f32 %v3748, %v3830
        %v3832 = vpop.f32.mrf.mxu0
        %3833 = vmatprep.mubr.bf16.mxu0 0
        %3834 = vmatmul.mubr.bf16.gmra.mxu0 %v3773
        %v3835 = vpop.f32.mrf.mxu0
        %v3836 = vadd.f32 %v3748, %v3835
        %v3837 = vpop.f32.mrf.mxu0
        %v3838 = vpop.f32.mrf.mxu0
        %v3839 = vadd.f32 %v3748, %v3838
        %v3840 = vpop.f32.mrf.mxu0
        %3841 = vmatprep.mubr.bf16.mxu0 0
        %3842 = vmatmul.mubr.bf16.gmra.mxu0 %v3775
        %v3843 = vpop.f32.mrf.mxu0
        %v3844 = vadd.f32 %v3748, %v3843
        %v3845 = vpop.f32.mrf.mxu0
        %v3846 = vpop.f32.mrf.mxu0
        %v3847 = vadd.f32 %v3748, %v3846
        %v3848 = vpop.f32.mrf.mxu0
        %3849 = vmatprep.mubr.bf16.mxu0 0
        %3850 = vmatmul.mubr.bf16.gmra.mxu0 %v3777
        %v3851 = vpop.f32.mrf.mxu0
        %v3852 = vadd.f32 %v3748, %v3851
        %v3853 = vpop.f32.mrf.mxu0
        %v3854 = vpop.f32.mrf.mxu0
        %v3855 = vadd.f32 %v3748, %v3854
        %v3856 = vpop.f32.mrf.mxu0
        %3857 = vmatprep.mubr.bf16.mxu0 0
        %3858 = vmatmul.mubr.bf16.gmra.mxu0 %v3779
        %v3859 = vpop.f32.mrf.mxu0
        %v3860 = vadd.f32 %v3748, %v3859
        %v3861 = vpop.f32.mrf.mxu0
        %v3862 = vpop.f32.mrf.mxu0
        %v3863 = vadd.f32 %v3748, %v3862
        %v3864 = vpop.f32.mrf.mxu0
        %3865 = vmatprep.mubr.bf16.mxu0 0
        %3866 = vmatmul.mubr.bf16.gmra.mxu0 %v3781
        %v3867 = vpop.f32.mrf.mxu0
        %v3868 = vadd.f32 %v3748, %v3867
        %v3869 = vpop.f32.mrf.mxu0
        %v3870 = vpop.f32.mrf.mxu0
        %v3871 = vadd.f32 %v3748, %v3870
        %v3872 = vpop.f32.mrf.mxu0
        %3873 = vmatprep.mubr.bf16.mxu0 0
        %3874 = vmatmul.mubr.bf16.gmra.mxu0 %v3783
        %v3875 = vpop.f32.mrf.mxu0
        %v3876 = vadd.f32 %v3748, %v3875
        %v3877 = vpop.f32.mrf.mxu0
        %v3878 = vpop.f32.mrf.mxu0
        %v3879 = vadd.f32 %v3748, %v3878
        %v3880 = vpop.f32.mrf.mxu0
        %3881 = vdwg.mxu0
        %v3882 = vmax.f32 %v3820, 0.0
        %v3883 = vmax.f32 %v3823, 0.0
        %v3884 = vmax.f32 %v3828, 0.0
        %v3885 = vmax.f32 %v3831, 0.0
        %v3886 = vmax.f32 %v3836, 0.0
        %v3887 = vmax.f32 %v3839, 0.0
        %v3888 = vmax.f32 %v3844, 0.0
        %v3889 = vmax.f32 %v3847, 0.0
        %v3890 = vmax.f32 %v3852, 0.0
        %v3891 = vmax.f32 %v3855, 0.0
        %v3892 = vmax.f32 %v3860, 0.0
        %v3893 = vmax.f32 %v3863, 0.0
        %v3894 = vmax.f32 %v3868, 0.0
        %v3895 = vmax.f32 %v3871, 0.0
        %v3896 = vmax.f32 %v3876, 0.0
        %v3897 = vmax.f32 %v3879, 0.0
        %v3898 = vpack.c.bf16 %v3883, %v3882
        %v3899 = vpack.c.bf16 %v3885, %v3884
        %v3900 = vpack.c.bf16 %v3887, %v3886
        %v3901 = vpack.c.bf16 %v3889, %v3888
        %v3902 = vpack.c.bf16 %v3891, %v3890
        %v3903 = vpack.c.bf16 %v3893, %v3892
        %v3904 = vpack.c.bf16 %v3895, %v3894
        %v3905 = vpack.c.bf16 %v3897, %v3896
        %v3914 = vunpack.c.l.b16 %v3898
        %v3915 = vunpack.c.h.b16 %v3898
        %v3916 = vunpack.c.l.b16 %v3899
        %v3917 = vunpack.c.h.b16 %v3899
        %v3918 = vunpack.c.l.b16 %v3900
        %v3919 = vunpack.c.h.b16 %v3900
        %v3920 = vunpack.c.l.b16 %v3901
        %v3921 = vunpack.c.h.b16 %v3901
        %v3922 = vunpack.c.l.b16 %v3902
        %v3923 = vunpack.c.h.b16 %v3902
        %v3924 = vunpack.c.l.b16 %v3903
        %v3925 = vunpack.c.h.b16 %v3903
        %v3926 = vunpack.c.l.b16 %v3904
        %v3927 = vunpack.c.h.b16 %v3904
        %v3928 = vunpack.c.l.b16 %v3905
        %v3929 = vunpack.c.h.b16 %v3905
        %v3930 = vpack.c.b16 %v3914, %v3914
        %v3931 = vpack.c.b16 %v3915, %v3915
        %v3932 = vpack.c.b16 %v3916, %v3916
        %v3933 = vpack.c.b16 %v3917, %v3917
        %v3934 = vpack.c.b16 %v3918, %v3918
        %v3935 = vpack.c.b16 %v3919, %v3919
        %v3936 = vpack.c.b16 %v3920, %v3920
        %v3937 = vpack.c.b16 %v3921, %v3921
        %v3938 = vpack.c.b16 %v3922, %v3922
        %v3939 = vpack.c.b16 %v3923, %v3923
        %v3940 = vpack.c.b16 %v3924, %v3924
        %v3941 = vpack.c.b16 %v3925, %v3925
        %v3942 = vpack.c.b16 %v3926, %v3926
        %v3943 = vpack.c.b16 %v3927, %v3927
        %v3944 = vpack.c.b16 %v3928, %v3928
        %v3945 = vpack.c.b16 %v3929, %v3929
        %3962 = vst [vmem:[%s274] sm:$0xf] %v3930
        %3963 = vst [vmem:[%s274 + $0x4] sm:$0xf] %v3931
        %3964 = vst [vmem:[%s274 + $0x8] sm:$0xf] %v3932
        %3965 = vst [vmem:[%s274 + $0xc] sm:$0xf] %v3933
        %3966 = vst [vmem:[%s274 + $0x10] sm:$0xf] %v3934
        %3967 = vst [vmem:[%s274 + $0x14] sm:$0xf] %v3935
        %3968 = vst [vmem:[%s274 + $0x18] sm:$0xf] %v3936
        %3969 = vst [vmem:[%s274 + $0x1c] sm:$0xf] %v3937
        %3970 = vst [vmem:[%s274 + $0x20] sm:$0xf] %v3938
        %3971 = vst [vmem:[%s274 + $0x24] sm:$0xf] %v3939
        %3972 = vst [vmem:[%s274 + $0x28] sm:$0xf] %v3940
        %3973 = vst [vmem:[%s274 + $0x2c] sm:$0xf] %v3941
        %3974 = vst [vmem:[%s274 + $0x30] sm:$0xf] %v3942
        %3975 = vst [vmem:[%s274 + $0x34] sm:$0xf] %v3943
        %3976 = vst [vmem:[%s274 + $0x38] sm:$0xf] %v3944
        %3977 = vst [vmem:[%s274 + $0x3c] sm:$0xf] %v3945
        %s3978 = sand.u32 %s181, 1
        %s3979 = scalar_lea.sflag [#allocation4], %s3978
        %s3980 = sand.u32 %s181, 1
        %s3981 = smul.addr %s3980, 64
        %s3982 = scalar_lea.vmem [#allocation3], %s3981
        // Predicated region
        $region49: #{lowrank_bottleneck_forward.1} parent=47 // pred_check
          %p3983 = pneg %p191
        $region50: #{lowrank_bottleneck_forward.1} parent=47 // pred_check_branch
          %3985 = sbr.rel (%p3983) target = $region52
        $region51: #{lowrank_bottleneck_forward.1} parent=47 // pred_region
          %s3986 = smul.u32 2, %s21
          %s3988 = ssub.s32 1024, 1024
          %3989 = vsyncadd %s3979, %s3988
          %s3990 = smul.addr %s3986, 8
          %s3991 = smul.addr %s3990, 64
          %s3992 = scalar_lea.hbm %s7, %s3991
          %s3993 = sshll.u32 %s3982, 4
          %s3994 = int_to_ptr.vmem [resolvable:$true] %s3993
          %3999 = dma.vmem_to_hbm [thread:$0]  %s3994, 1024, %s3992, %s3979, 64, 64, 4
        $region52: #{lowrank_bottleneck_forward.1} parent=47 // pred_fallthru
          _
      $region48: #{lowrank_bottleneck_forward.1} parent=5 // pred_fallthru
        _
      %p4000 = scmp.le.s32.totalorder 2, %s16
      // Predicated region
      $region53: #{lowrank_bottleneck_forward.1} parent=5 // pred_check
        %p4001 = pneg %p4000
      $region54: #{lowrank_bottleneck_forward.1} parent=5 // pred_check_branch
        %4003 = sbr.rel (%p4001) target = $region56
      $region55: #{lowrank_bottleneck_forward.1} parent=5 // pred_region
        %s4004 = ssub.s32 %s16, 2
        // Predicated region
        $region57: #{lowrank_bottleneck_forward.1} parent=55 // pred_check
          %p4005 = pneg %p197
        $region58: #{lowrank_bottleneck_forward.1} parent=55 // pred_check_branch
          %4007 = sbr.rel (%p4005) target = $region60
        $region59: #{lowrank_bottleneck_forward.1} parent=55 // pred_region
          %s4008 = sand.u32 %s182, 1
          %s4009 = scalar_lea.sflag [#allocation4], %s4008
          %s4010 = sand.u32 %s182, 1
          %s4011 = smul.addr %s4010, 64
          %s4012 = scalar_lea.vmem [#allocation3], %s4011
          %4013 = dma.done %s4009, 1024
        $region60: #{lowrank_bottleneck_forward.1} parent=55 // pred_fallthru
          _
      $region56: #{lowrank_bottleneck_forward.1} parent=5 // pred_fallthru
        _
    $region6: #{lowrank_bottleneck_forward.1} parent=1 // loop_footer
      %s20 = sadd.s32 1, %s16
    $region7: #{lowrank_bottleneck_forward.1} parent=1 // loop_footer_branch
      %15 = sbr.rel target = $region3
    $region8: #{lowrank_bottleneck_forward.1} parent=1 // loop_exit
      _
    %4014 = vsyncpa [#allocation4], 1
    %s4015 = scalar_lea.sflag [#allocation4], 1
    %4016 = vsyncpa %s4015, 1

</llo_original>
